<compile_context>
chip_gen: v5e
topology: v5e:2x2
jax: 0.10.0
libtpu: 0.0.40
codegen_flags: <defaults>
</compile_context>

<pallas_src>
import functools
import math

import jax
import jax.numpy as jnp
from jax.experimental import pallas as pl
from jax.experimental.pallas import tpu as pltpu


def _dqn_kernel(x_ref, w1_ref, b1_ref, w2_ref, b2_ref, w3_ref, b3_ref, o_ref):
    cd = w2_ref.dtype
    # layer1 + relu (packed: one (tb, 256) @ (256, 1024) handles 64 batch rows per row)
    h1 = jnp.dot(x_ref[...], w1_ref[...], preferred_element_type=jnp.float32)
    h1 = jnp.maximum(h1 + b1_ref[...], 0.0)
    # layer2 + relu
    h2 = jnp.dot(h1.astype(cd), w2_ref[...], preferred_element_type=jnp.float32)
    h2 = jnp.maximum(h2 + b2_ref[...], 0.0)
    # layer3 (no activation), lane-dense (tb, 128) store
    o = jnp.dot(h2.astype(cd), w3_ref[...], preferred_element_type=jnp.float32)
    o_ref[...] = (o + b3_ref[...]).astype(o_ref.dtype)


def _pack_factor(*feature_dims):
    """Smallest P such that P*dim is a multiple of 128 lanes for every feature dim."""
    p = 1
    for d in feature_dims:
        p = math.lcm(p, 128 // math.gcd(128, d))
    return p


def _round_up(x, m):
    return -(-x // m) * m


@functools.partial(jax.jit, static_argnames=("block_b", "use_bf16"))
def dqn_forward(x, params, *, block_b=32768, use_bf16=False):
    """x: (B, n_observations) float32. params: dict of w1,b1,w2,b2,w3,b3.

    Weights are (in_features, out_features); biases are 1-D. Computes
    relu(relu(x@W1+b1)@W2+b2)@W3+b3 with a lane-dense packed layout: P batch rows per
    packed row and block-diagonal expanded weights so the MXU stays well utilized.
    """
    B, n_obs = x.shape
    w1, b1 = params["w1"], params["b1"]   # (n_obs, 16), (16,)
    w2, b2 = params["w2"], params["b2"]   # (16, 16), (16,)
    w3, b3 = params["w3"], params["b3"]   # (16, n_actions), (n_actions,)
    hidden = w1.shape[1]
    n_act = w3.shape[1]

    P = _pack_factor(n_obs, hidden, n_act)          # 64 for (4, 16, 2)
    in_feat, hid_feat, out_feat = P * n_obs, P * hidden, P * n_act

    compute_dtype = jnp.bfloat16 if use_bf16 else jnp.float32

    # Block-diagonal expanded weights: kron(I_P, W). Lets one matmul process P batch
    # rows per packed row while keeping zero-copy row-major packing of x and the output.
    eye = jnp.eye(P, dtype=jnp.float32)
    w1e = jnp.kron(eye, w1.astype(jnp.float32)).astype(compute_dtype)   # (in_feat,  hid_feat)
    w2e = jnp.kron(eye, w2.astype(jnp.float32)).astype(compute_dtype)   # (hid_feat, hid_feat)
    w3e = jnp.kron(eye, w3.astype(jnp.float32)).astype(compute_dtype)   # (hid_feat, out_feat)
    b1e = jnp.tile(b1.astype(jnp.float32), P).reshape(1, hid_feat)
    b2e = jnp.tile(b2.astype(jnp.float32), P).reshape(1, hid_feat)
    b3e = jnp.tile(b3.astype(jnp.float32), P).reshape(1, out_feat)

    # Tiling in packed rows. tb is a multiple of 8 (sublane rule) unless it is the full
    # extent; batches >= 16 packed rows (1024 batch rows) get >=2 grid steps so the
    # parallel axis can shard across both TensorCores on v7x.
    R = -(-B // P)                                  # packed rows needed
    max_tb = max(1, block_b // P)                   # packed rows per tile (upper bound)
    if R <= max_tb and R < 16:
        n_steps = 1
        tb = R
    else:
        n_steps = max(2, -(-R // max_tb))
        tb = _round_up(-(-R // n_steps), 8)
    Rp = n_steps * tb
    Bp = Rp * P

    xp = x.astype(compute_dtype)
    if Bp != B:
        xp = jnp.pad(xp, ((0, Bp - B), (0, 0)))     # padded tail rows are sliced off below
    xp = xp.reshape(Rp, in_feat)                    # zero-copy, lane-dense packed rows

    wbytes = (
        (w1e.size + w2e.size + w3e.size) * jnp.dtype(compute_dtype).itemsize
        + (b1e.size + b2e.size + b3e.size) * 4
    )
    flops = 2 * Rp * (in_feat * hid_feat + hid_feat * hid_feat + hid_feat * out_feat)
    bytes_accessed = (
        Rp * in_feat * jnp.dtype(compute_dtype).itemsize + Rp * out_feat * 4 + wbytes
    )

    out_packed = pl.pallas_call(
        _dqn_kernel,
        out_shape=jax.ShapeDtypeStruct((Rp, out_feat), jnp.float32),
        grid=(n_steps,),
        in_specs=[
            pl.BlockSpec((tb, in_feat), lambda i: (i, 0)),        # x: tiled over packed rows
            pl.BlockSpec((in_feat, hid_feat), lambda i: (0, 0)),  # expanded weights: resident
            pl.BlockSpec((1, hid_feat), lambda i: (0, 0)),
            pl.BlockSpec((hid_feat, hid_feat), lambda i: (0, 0)),
            pl.BlockSpec((1, hid_feat), lambda i: (0, 0)),
            pl.BlockSpec((hid_feat, out_feat), lambda i: (0, 0)),
            pl.BlockSpec((1, out_feat), lambda i: (0, 0)),
        ],
        out_specs=pl.BlockSpec((tb, out_feat), lambda i: (i, 0)),
        compiler_params=pltpu.CompilerParams(
            dimension_semantics=("parallel",),
            vmem_limit_bytes=64 * 1024 * 1024,
        ),
        cost_estimate=pl.CostEstimate(
            flops=flops, transcendentals=0, bytes_accessed=bytes_accessed
        ),
    )(xp, w1e, b1e, w2e, b2e, w3e, b3e)

    out = out_packed.reshape(Bp, n_act)             # zero-copy unpack back to batch-major
    if Bp != B:
        out = out[:B]
    return out


def init_dqn_params(key, n_observations, n_actions):
    """Deterministic init mimicking PyTorch nn.Linear default (U[-1/sqrt(fan_in), +])."""
    ks = jax.random.split(key, 6)

    def linear(kw, kb, fan_in, fan_out):
        bound = 1.0 / jnp.sqrt(jnp.float32(fan_in))
        w = jax.random.uniform(kw, (fan_in, fan_out), jnp.float32, -bound, bound)
        b = jax.random.uniform(kb, (fan_out,), jnp.float32, -bound, bound)
        return w, b

    w1, b1 = linear(ks[0], ks[1], n_observations, 16)
    w2, b2 = linear(ks[2], ks[3], 16, 16)
    w3, b3 = linear(ks[4], ks[5], 16, n_actions)
    return {"w1": w1, "b1": b1, "w2": w2, "b2": b2, "w3": w3, "b3": b3}


def _reference(x, p):
    h1 = jnp.maximum(x @ p["w1"] + p["b1"], 0.0)
    h2 = jnp.maximum(h1 @ p["w2"] + p["b2"], 0.0)
    return h2 @ p["w3"] + p["b3"]


if __name__ == "__main__":
    key = jax.random.PRNGKey(0)
    k_x, k_p = jax.random.split(key)

    n_observations, n_actions, batch = 4, 2, 2
    x = jax.random.normal(k_x, (batch, n_observations), jnp.float32)
    params = init_dqn_params(k_p, n_observations, n_actions)

    # Small-batch path (single grid step, one packed row).
    out = dqn_forward(x, params)
    jax.block_until_ready(out)
    ref = _reference(x, params)
    assert out.shape == (batch, n_actions)
    assert jnp.allclose(out, ref, atol=1e-4, rtol=1e-4), (out, ref)

    # Multi-step grid path (ragged batch -> padded packed rows, several tiles).
    x_big = jax.random.normal(k_x, (3000, n_observations), jnp.float32)
    out_big = dqn_forward(x_big, params, block_b=1024)
    jax.block_until_ready(out_big)
    ref_big = _reference(x_big, params)
    assert out_big.shape == (3000, n_actions)
    assert jnp.allclose(out_big, ref_big, atol=1e-4, rtol=1e-4)

    # bf16 MXU fast path (v6e/v7x); accumulation stays f32, tolerance loosened.
    out_bf16 = dqn_forward(x_big, params, block_b=1024, use_bf16=True)
    jax.block_until_ready(out_bf16)
    assert jnp.allclose(out_bf16, ref_big, atol=1e-1, rtol=1e-1)

    print("KERNEL_OK")
</pallas_src>

<mosaic_0001>
module attributes {stable_mosaic.version = 11 : i64} {
  func.func @_dqn_kernel(%arg0: i32, %arg1: memref<1x256xf32, #tpu.memory_space<vmem>>, %arg2: memref<256x1024xf32, #tpu.memory_space<vmem>>, %arg3: memref<1x1024xf32, #tpu.memory_space<vmem>>, %arg4: memref<1024x1024xf32, #tpu.memory_space<vmem>>, %arg5: memref<1x1024xf32, #tpu.memory_space<vmem>>, %arg6: memref<1024x128xf32, #tpu.memory_space<vmem>>, %arg7: memref<1x128xf32, #tpu.memory_space<vmem>>, %arg8: memref<1x128xf32, #tpu.memory_space<vmem>>) attributes {dimension_semantics = [#tpu.dimension_semantics<parallel>], iteration_bounds = array<i64: 1>, scalar_prefetch = 0 : i64, scratch_operands = 0 : i64, tpu.core_type = #tpu.core_type<tc>, window_params = [{transform_indices = @transform_0, window_bounds = array<i64: 1, 256>}, {pipeline_mode = #tpu.pipeline_mode<synchronous>, transform_indices = @transform_1, window_bounds = array<i64: 256, 1024>}, {pipeline_mode = #tpu.pipeline_mode<synchronous>, transform_indices = @transform_2, window_bounds = array<i64: 1, 1024>}, {pipeline_mode = #tpu.pipeline_mode<synchronous>, transform_indices = @transform_3, window_bounds = array<i64: 1024, 1024>}, {pipeline_mode = #tpu.pipeline_mode<synchronous>, transform_indices = @transform_4, window_bounds = array<i64: 1, 1024>}, {pipeline_mode = #tpu.pipeline_mode<synchronous>, transform_indices = @transform_5, window_bounds = array<i64: 1024, 128>}, {pipeline_mode = #tpu.pipeline_mode<synchronous>, transform_indices = @transform_6, window_bounds = array<i64: 1, 128>}, {transform_indices = @transform_7, window_bounds = array<i64: 1, 128>}]} {
    %c0 = arith.constant 0 : index
    %c0_0 = arith.constant 0 : index
    %0 = vector.load %arg1[%c0, %c0_0] : memref<1x256xf32, #tpu.memory_space<vmem>>, vector<1x256xf32>
    %c0_1 = arith.constant 0 : index
    %c0_2 = arith.constant 0 : index
    %1 = vector.load %arg2[%c0_1, %c0_2] : memref<256x1024xf32, #tpu.memory_space<vmem>>, vector<256x1024xf32>
    %cst = arith.constant dense<0.000000e+00> : vector<1x1024xf32>
    %2 = tpu.matmul %0, %1, %cst {dimension_numbers = #tpu.dot_dimension_numbers<[1], [0], [0], [1], [0, 0, 1, 1], [], []>} : vector<1x256xf32>, vector<256x1024xf32>, vector<1x1024xf32> -> vector<1x1024xf32>
    %c0_3 = arith.constant 0 : index
    %c0_4 = arith.constant 0 : index
    %3 = vector.load %arg3[%c0_3, %c0_4] : memref<1x1024xf32, #tpu.memory_space<vmem>>, vector<1x1024xf32>
    %4 = arith.addf %2, %3 : vector<1x1024xf32>
    %cst_5 = arith.constant 0.000000e+00 : f32
    %5 = vector.broadcast %cst_5 : f32 to vector<1x1024xf32>
    %6 = arith.maximumf %4, %5 : vector<1x1024xf32>
    %c0_6 = arith.constant 0 : index
    %c0_7 = arith.constant 0 : index
    %7 = vector.load %arg4[%c0_6, %c0_7] : memref<1024x1024xf32, #tpu.memory_space<vmem>>, vector<1024x1024xf32>
    %cst_8 = arith.constant dense<0.000000e+00> : vector<1x1024xf32>
    %8 = tpu.matmul %6, %7, %cst_8 {dimension_numbers = #tpu.dot_dimension_numbers<[1], [0], [0], [1], [0, 0, 1, 1], [], []>} : vector<1x1024xf32>, vector<1024x1024xf32>, vector<1x1024xf32> -> vector<1x1024xf32>
    %c0_9 = arith.constant 0 : index
    %c0_10 = arith.constant 0 : index
    %9 = vector.load %arg5[%c0_9, %c0_10] : memref<1x1024xf32, #tpu.memory_space<vmem>>, vector<1x1024xf32>
    %10 = arith.addf %8, %9 : vector<1x1024xf32>
    %cst_11 = arith.constant 0.000000e+00 : f32
    %11 = vector.broadcast %cst_11 : f32 to vector<1x1024xf32>
    %12 = arith.maximumf %10, %11 : vector<1x1024xf32>
    %c0_12 = arith.constant 0 : index
    %c0_13 = arith.constant 0 : index
    %13 = vector.load %arg6[%c0_12, %c0_13] : memref<1024x128xf32, #tpu.memory_space<vmem>>, vector<1024x128xf32>
    %cst_14 = arith.constant dense<0.000000e+00> : vector<1x128xf32>
    %14 = tpu.matmul %12, %13, %cst_14 {dimension_numbers = #tpu.dot_dimension_numbers<[1], [0], [0], [1], [0, 0, 1, 1], [], []>} : vector<1x1024xf32>, vector<1024x128xf32>, vector<1x128xf32> -> vector<1x128xf32>
    %c0_15 = arith.constant 0 : index
    %c0_16 = arith.constant 0 : index
    %15 = vector.load %arg7[%c0_15, %c0_16] : memref<1x128xf32, #tpu.memory_space<vmem>>, vector<1x128xf32>
    %16 = arith.addf %14, %15 : vector<1x128xf32>
    %c0_17 = arith.constant 0 : index
    %c0_18 = arith.constant 0 : index
    %17 = vector.load %arg8[%c0_17, %c0_18] : memref<1x128xf32, #tpu.memory_space<vmem>>, vector<1x128xf32>
    tpu.vector_store %arg8[%c0_17, %c0_18], %16 {strides = array<i32>} : memref<1x128xf32, #tpu.memory_space<vmem>>, vector<1x128xf32>,
    return
  }
  func.func @transform_0(%arg0: i32) -> (i32, i32) {
    %c0_i32 = arith.constant 0 : i32
    %c0_i32_0 = arith.constant 0 : i32
    return %arg0, %c0_i32 : i32, i32
  }
  func.func @transform_1(%arg0: i32) -> (i32, i32) {
    %c0_i32 = arith.constant 0 : i32
    %c0_i32_0 = arith.constant 0 : i32
    %c0_i32_1 = arith.constant 0 : i32
    return %c0_i32, %c0_i32_0 : i32, i32
  }
  func.func @transform_2(%arg0: i32) -> (i32, i32) {
    %c0_i32 = arith.constant 0 : i32
    %c0_i32_0 = arith.constant 0 : i32
    %c0_i32_1 = arith.constant 0 : i32
    return %c0_i32, %c0_i32_0 : i32, i32
  }
  func.func @transform_3(%arg0: i32) -> (i32, i32) {
    %c0_i32 = arith.constant 0 : i32
    %c0_i32_0 = arith.constant 0 : i32
    %c0_i32_1 = arith.constant 0 : i32
    return %c0_i32, %c0_i32_0 : i32, i32
  }
  func.func @transform_4(%arg0: i32) -> (i32, i32) {
    %c0_i32 = arith.constant 0 : i32
    %c0_i32_0 = arith.constant 0 : i32
    %c0_i32_1 = arith.constant 0 : i32
    return %c0_i32, %c0_i32_0 : i32, i32
  }
  func.func @transform_5(%arg0: i32) -> (i32, i32) {
    %c0_i32 = arith.constant 0 : i32
    %c0_i32_0 = arith.constant 0 : i32
    %c0_i32_1 = arith.constant 0 : i32
    return %c0_i32, %c0_i32_0 : i32, i32
  }
  func.func @transform_6(%arg0: i32) -> (i32, i32) {
    %c0_i32 = arith.constant 0 : i32
    %c0_i32_0 = arith.constant 0 : i32
    %c0_i32_1 = arith.constant 0 : i32
    return %c0_i32, %c0_i32_0 : i32, i32
  }
  func.func @transform_7(%arg0: i32) -> (i32, i32) {
    %c0_i32 = arith.constant 0 : i32
    %c0_i32_0 = arith.constant 0 : i32
    return %arg0, %c0_i32 : i32, i32
  }
}

</mosaic_0001>

<llo_original>
// kernel: tile.18
$region0: #{tile.18}
  #allocation0 [shape = 's32[1]{0}', space=sflag, size = 0x4, scoped, tag = 'scoped memory for tile.18']
  %s0 = inlined_call_operand.vmem [shape: f32[16], index: 0, kind: input, shape index: {}]
  %s1 = inlined_call_operand.vmem [shape: f32[64,16], index: 1, kind: output, shape index: {}]
  // Predicated region
  $region2: #{tile.18} parent=0 // pred_check
    _
  $region3: #{tile.18} parent=0 // pred_check_branch
    %3 = sbr.rel (0) target = $region5
  $region4: #{tile.18} parent=0 // pred_region
    _
  $region5: #{tile.18} parent=0 // pred_fallthru
    _
  %v4 = vld [vmem:[%s0] ss:$0 sm:$0xff]
  %5 = vst [vmem:[%s1] sm:$0xff] %v4
  %s6 = scalar_lea.vmem %s1, 8
  %7 = vst [vmem:[%s6] sm:$0xff] %v4
  %s8 = scalar_lea.vmem %s1, 16
  %9 = vst [vmem:[%s8] sm:$0xff] %v4
  %s10 = scalar_lea.vmem %s1, 24
  %11 = vst [vmem:[%s10] sm:$0xff] %v4
  %s12 = scalar_lea.vmem %s1, 32
  %13 = vst [vmem:[%s12] sm:$0xff] %v4
  %s14 = scalar_lea.vmem %s1, 40
  %15 = vst [vmem:[%s14] sm:$0xff] %v4
  %s16 = scalar_lea.vmem %s1, 48
  %17 = vst [vmem:[%s16] sm:$0xff] %v4
  %s18 = scalar_lea.vmem %s1, 56
  %19 = vst [vmem:[%s18] sm:$0xff] %v4

// kernel: tile.19
$region0: #{tile.19}
  %s0 = inlined_call_operand.vmem [shape: f32[64,16], index: 0, kind: input, shape index: {}]
  %s1 = inlined_call_operand.vmem [shape: f32[1,1024], index: 1, kind: output, shape index: {}]
  $region1: #{tile.19} parent=0
    #allocation0 [shape = 'u8[32768]{0}', space=vmem, size = 0x8000, scoped, tag = 'scoped mem for output reshape']
    %v2 = vld [vmem:[%s0] ss:$8 sm:$0xf]
    %v3 = vld [vmem:[%s0] ss:$8 sm:$0xf0]
    %vm4 = vcmask 1047556
    %v5 = vsel %vm4, %v3, %v2
    %vm6 = vcmask 130048
    %7 = vst.msk [vmem:[#allocation0] ss:$8 sm:$0xf] %vm6, %v5
    %8 = vst.msk [vmem:[#allocation0] ss:$8 sm:$0xf0] %vm6, %v5
    %s9 = scalar_lea.vmem %s0, 7
    %v10 = vld [vmem:[%s9] ss:$8 sm:$0xf]
    %s11 = scalar_lea.vmem %s0, 7
    %v12 = vld [vmem:[%s11] ss:$8 sm:$0xf0]
    %vm13 = vcmask 1047556
    %v14 = vsel %vm13, %v12, %v10
    %15 = vrot.lane.b32.xlu0 %v14, 112
    %v16 = vpop.permute.xlu0 %15
    %vm17 = vcmask 1048448
    %18 = vst.msk [vmem:[#allocation0] ss:$8 sm:$0xf] %vm17, %v16
    %19 = vst.msk [vmem:[#allocation0] ss:$8 sm:$0xf0] %vm17, %v16
    %s20 = scalar_lea.vmem %s0, 6
    %v21 = vld [vmem:[%s20] ss:$8 sm:$0xf]
    %s22 = scalar_lea.vmem %s0, 6
    %v23 = vld [vmem:[%s22] ss:$8 sm:$0xf0]
    %vm24 = vcmask 1047556
    %v25 = vsel %vm24, %v23, %v21
    %26 = vrot.lane.b32.xlu0 %v25, 96
    %v27 = vpop.permute.xlu0 %26
    %vm28 = vcmask 917248
    %29 = vst.msk [vmem:[#allocation0] ss:$8 sm:$0xf] %vm28, %v27
    %30 = vst.msk [vmem:[#allocation0] ss:$8 sm:$0xf0] %vm28, %v27
    %s31 = scalar_lea.vmem %s0, 5
    %v32 = vld [vmem:[%s31] ss:$8 sm:$0xf]
    %s33 = scalar_lea.vmem %s0, 5
    %v34 = vld [vmem:[%s33] ss:$8 sm:$0xf0]
    %vm35 = vcmask 1047556
    %v36 = vsel %vm35, %v34, %v32
    %37 = vrot.lane.b32.xlu0 %v36, 80
    %v38 = vpop.permute.xlu0 %37
    %vm39 = vcmask 786048
    %40 = vst.msk [vmem:[#allocation0] ss:$8 sm:$0xf] %vm39, %v38
    %41 = vst.msk [vmem:[#allocation0] ss:$8 sm:$0xf0] %vm39, %v38
    %s42 = scalar_lea.vmem %s0, 4
    %v43 = vld [vmem:[%s42] ss:$8 sm:$0xf]
    %s44 = scalar_lea.vmem %s0, 4
    %v45 = vld [vmem:[%s44] ss:$8 sm:$0xf0]
    %vm46 = vcmask 1047556
    %v47 = vsel %vm46, %v45, %v43
    %48 = vrot.lane.b32.xlu0 %v47, 64
    %v49 = vpop.permute.xlu0 %48
    %vm50 = vcmask 654848
    %51 = vst.msk [vmem:[#allocation0] ss:$8 sm:$0xf] %vm50, %v49
    %52 = vst.msk [vmem:[#allocation0] ss:$8 sm:$0xf0] %vm50, %v49
    %s53 = scalar_lea.vmem %s0, 3
    %v54 = vld [vmem:[%s53] ss:$8 sm:$0xf]
    %s55 = scalar_lea.vmem %s0, 3
    %v56 = vld [vmem:[%s55] ss:$8 sm:$0xf0]
    %vm57 = vcmask 1047556
    %v58 = vsel %vm57, %v56, %v54
    %59 = vrot.lane.b32.xlu0 %v58, 48
    %v60 = vpop.permute.xlu0 %59
    %vm61 = vcmask 523648
    %62 = vst.msk [vmem:[#allocation0] ss:$8 sm:$0xf] %vm61, %v60
    %63 = vst.msk [vmem:[#allocation0] ss:$8 sm:$0xf0] %vm61, %v60
    %s64 = scalar_lea.vmem %s0, 2
    %v65 = vld [vmem:[%s64] ss:$8 sm:$0xf]
    %s66 = scalar_lea.vmem %s0, 2
    %v67 = vld [vmem:[%s66] ss:$8 sm:$0xf0]
    %vm68 = vcmask 1047556
    %v69 = vsel %vm68, %v67, %v65
    %70 = vrot.lane.b32.xlu0 %v69, 32
    %v71 = vpop.permute.xlu0 %70
    %vm72 = vcmask 392448
    %73 = vst.msk [vmem:[#allocation0] ss:$8 sm:$0xf] %vm72, %v71
    %74 = vst.msk [vmem:[#allocation0] ss:$8 sm:$0xf0] %vm72, %v71
    %s75 = scalar_lea.vmem %s0, 1
    %v76 = vld [vmem:[%s75] ss:$8 sm:$0xf]
    %s77 = scalar_lea.vmem %s0, 1
    %v78 = vld [vmem:[%s77] ss:$8 sm:$0xf0]
    %vm79 = vcmask 1047556
    %v80 = vsel %vm79, %v78, %v76
    %81 = vrot.lane.b32.xlu0 %v80, 16
    %v82 = vpop.permute.xlu0 %81
    %vm83 = vcmask 261248
    %84 = vst.msk [vmem:[#allocation0] ss:$8 sm:$0xf] %vm83, %v82
    %85 = vst.msk [vmem:[#allocation0] ss:$8 sm:$0xf0] %vm83, %v82
    %s87 = ssub.s32 2, 1
    %v88 = vld [vmem:[#allocation0] sm:%s87]
    %s90 = ssub.s32 2, 1
    %91 = vst [vmem:[%s1] sm:%s90] %v88
    %s92 = scalar_lea.vmem [#allocation0], 8
    %v93 = vld [vmem:[%s92] sm:%s87]
    %s95 = ssub.s32 2, 1
    %s96 = scalar_lea.vmem %s1, 1
    %97 = vst [vmem:[%s96] sm:%s95] %v93
    %s98 = scalar_lea.vmem [#allocation0], 16
    %v99 = vld [vmem:[%s98] sm:%s87]
    %s101 = ssub.s32 2, 1
    %s102 = scalar_lea.vmem %s1, 2
    %103 = vst [vmem:[%s102] sm:%s101] %v99
    %s104 = scalar_lea.vmem [#allocation0], 24
    %v105 = vld [vmem:[%s104] sm:%s87]
    %s107 = ssub.s32 2, 1
    %s108 = scalar_lea.vmem %s1, 3
    %109 = vst [vmem:[%s108] sm:%s107] %v105
    %s110 = scalar_lea.vmem [#allocation0], 32
    %v111 = vld [vmem:[%s110] sm:%s87]
    %s113 = ssub.s32 2, 1
    %s114 = scalar_lea.vmem %s1, 4
    %115 = vst [vmem:[%s114] sm:%s113] %v111
    %s116 = scalar_lea.vmem [#allocation0], 40
    %v117 = vld [vmem:[%s116] sm:%s87]
    %s119 = ssub.s32 2, 1
    %s120 = scalar_lea.vmem %s1, 5
    %121 = vst [vmem:[%s120] sm:%s119] %v117
    %s122 = scalar_lea.vmem [#allocation0], 48
    %v123 = vld [vmem:[%s122] sm:%s87]
    %s125 = ssub.s32 2, 1
    %s126 = scalar_lea.vmem %s1, 6
    %127 = vst [vmem:[%s126] sm:%s125] %v123
    %s128 = scalar_lea.vmem [#allocation0], 56
    %v129 = vld [vmem:[%s128] sm:%s87]
    %s131 = ssub.s32 2, 1
    %s132 = scalar_lea.vmem %s1, 7
    %133 = vst [vmem:[%s132] sm:%s131] %v129

// kernel: tile.28
$region0: #{tile.28}
  #allocation0 [shape = 's32[1]{0}', space=sflag, size = 0x4, scoped, tag = 'scoped memory for tile.28']
  %s0 = inlined_call_operand.vmem [shape: f32[2], index: 0, kind: input, shape index: {}]
  %s1 = inlined_call_operand.vmem [shape: f32[64,2], index: 1, kind: output, shape index: {}]
  // Predicated region
  $region2: #{tile.28} parent=0 // pred_check
    _
  $region3: #{tile.28} parent=0 // pred_check_branch
    %3 = sbr.rel (0) target = $region5
  $region4: #{tile.28} parent=0 // pred_region
    _
  $region5: #{tile.28} parent=0 // pred_fallthru
    _
  %v4 = vld [vmem:[%s0] ss:$0 sm:$0xff]
  %5 = vst [vmem:[%s1] sm:$0xff] %v4
  %s6 = scalar_lea.vmem %s1, 8
  %7 = vst [vmem:[%s6] sm:$0xff] %v4
  %s8 = scalar_lea.vmem %s1, 16
  %9 = vst [vmem:[%s8] sm:$0xff] %v4
  %s10 = scalar_lea.vmem %s1, 24
  %11 = vst [vmem:[%s10] sm:$0xff] %v4
  %s12 = scalar_lea.vmem %s1, 32
  %13 = vst [vmem:[%s12] sm:$0xff] %v4
  %s14 = scalar_lea.vmem %s1, 40
  %15 = vst [vmem:[%s14] sm:$0xff] %v4
  %s16 = scalar_lea.vmem %s1, 48
  %17 = vst [vmem:[%s16] sm:$0xff] %v4
  %s18 = scalar_lea.vmem %s1, 56
  %19 = vst [vmem:[%s18] sm:$0xff] %v4

// kernel: tile.29
$region0: #{tile.29}
  %s0 = inlined_call_operand.vmem [shape: f32[64,2], index: 0, kind: input, shape index: {}]
  %s1 = inlined_call_operand.vmem [shape: f32[1,128], index: 1, kind: output, shape index: {}]
  $region1: #{tile.29} parent=0
    #allocation0 [shape = 'u8[4096]{0}', space=vmem, size = 0x1000, scoped, tag = 'scoped mem for output reshape']
    %v2 = vld [vmem:[%s0] sm:$0x1]
    %vm3 = vcmask 15360
    %4 = vst.msk [vmem:[#allocation0] sm:$0x1] %vm3, %v2
    %s5 = scalar_lea.vmem %s0, 63
    %v6 = vld [vmem:[%s5] sm:$0x1]
    %7 = vrot.lane.b32.xlu0 %v6, 126
    %v8 = vpop.permute.xlu0 %7
    %vm9 = vcmask 1048560
    %10 = vst.msk [vmem:[#allocation0] sm:$0x1] %vm9, %v8
    %s11 = scalar_lea.vmem %s0, 62
    %v12 = vld [vmem:[%s11] sm:$0x1]
    %13 = vrot.lane.b32.xlu0 %v12, 124
    %v14 = vpop.permute.xlu0 %13
    %vm15 = vcmask 1032160
    %16 = vst.msk [vmem:[#allocation0] sm:$0x1] %vm15, %v14
    %s17 = scalar_lea.vmem %s0, 61
    %v18 = vld [vmem:[%s17] sm:$0x1]
    %19 = vrot.lane.b32.xlu0 %v18, 122
    %v20 = vpop.permute.xlu0 %19
    %vm21 = vcmask 1015760
    %22 = vst.msk [vmem:[#allocation0] sm:$0x1] %vm21, %v20
    %s23 = scalar_lea.vmem %s0, 60
    %v24 = vld [vmem:[%s23] sm:$0x1]
    %25 = vrot.lane.b32.xlu0 %v24, 120
    %v26 = vpop.permute.xlu0 %25
    %vm27 = vcmask 999360
    %28 = vst.msk [vmem:[#allocation0] sm:$0x1] %vm27, %v26
    %s29 = scalar_lea.vmem %s0, 59
    %v30 = vld [vmem:[%s29] sm:$0x1]
    %31 = vrot.lane.b32.xlu0 %v30, 118
    %v32 = vpop.permute.xlu0 %31
    %vm33 = vcmask 982960
    %34 = vst.msk [vmem:[#allocation0] sm:$0x1] %vm33, %v32
    %s35 = scalar_lea.vmem %s0, 58
    %v36 = vld [vmem:[%s35] sm:$0x1]
    %37 = vrot.lane.b32.xlu0 %v36, 116
    %v38 = vpop.permute.xlu0 %37
    %vm39 = vcmask 966560
    %40 = vst.msk [vmem:[#allocation0] sm:$0x1] %vm39, %v38
    %s41 = scalar_lea.vmem %s0, 57
    %v42 = vld [vmem:[%s41] sm:$0x1]
    %43 = vrot.lane.b32.xlu0 %v42, 114
    %v44 = vpop.permute.xlu0 %43
    %vm45 = vcmask 950160
    %46 = vst.msk [vmem:[#allocation0] sm:$0x1] %vm45, %v44
    %s47 = scalar_lea.vmem %s0, 56
    %v48 = vld [vmem:[%s47] sm:$0x1]
    %49 = vrot.lane.b32.xlu0 %v48, 112
    %v50 = vpop.permute.xlu0 %49
    %vm51 = vcmask 933760
    %52 = vst.msk [vmem:[#allocation0] sm:$0x1] %vm51, %v50
    %s53 = scalar_lea.vmem %s0, 55
    %v54 = vld [vmem:[%s53] sm:$0x1]
    %55 = vrot.lane.b32.xlu0 %v54, 110
    %v56 = vpop.permute.xlu0 %55
    %vm57 = vcmask 917360
    %58 = vst.msk [vmem:[#allocation0] sm:$0x1] %vm57, %v56
    %s59 = scalar_lea.vmem %s0, 54
    %v60 = vld [vmem:[%s59] sm:$0x1]
    %61 = vrot.lane.b32.xlu0 %v60, 108
    %v62 = vpop.permute.xlu0 %61
    %vm63 = vcmask 900960
    %64 = vst.msk [vmem:[#allocation0] sm:$0x1] %vm63, %v62
    %s65 = scalar_lea.vmem %s0, 53
    %v66 = vld [vmem:[%s65] sm:$0x1]
    %67 = vrot.lane.b32.xlu0 %v66, 106
    %v68 = vpop.permute.xlu0 %67
    %vm69 = vcmask 884560
    %70 = vst.msk [vmem:[#allocation0] sm:$0x1] %vm69, %v68
    %s71 = scalar_lea.vmem %s0, 52
    %v72 = vld [vmem:[%s71] sm:$0x1]
    %73 = vrot.lane.b32.xlu0 %v72, 104
    %v74 = vpop.permute.xlu0 %73
    %vm75 = vcmask 868160
    %76 = vst.msk [vmem:[#allocation0] sm:$0x1] %vm75, %v74
    %s77 = scalar_lea.vmem %s0, 51
    %v78 = vld [vmem:[%s77] sm:$0x1]
    %79 = vrot.lane.b32.xlu0 %v78, 102
    %v80 = vpop.permute.xlu0 %79
    %vm81 = vcmask 851760
    %82 = vst.msk [vmem:[#allocation0] sm:$0x1] %vm81, %v80
    %s83 = scalar_lea.vmem %s0, 50
    %v84 = vld [vmem:[%s83] sm:$0x1]
    %85 = vrot.lane.b32.xlu0 %v84, 100
    %v86 = vpop.permute.xlu0 %85
    %vm87 = vcmask 835360
    %88 = vst.msk [vmem:[#allocation0] sm:$0x1] %vm87, %v86
    %s89 = scalar_lea.vmem %s0, 49
    %v90 = vld [vmem:[%s89] sm:$0x1]
    %91 = vrot.lane.b32.xlu0 %v90, 98
    %v92 = vpop.permute.xlu0 %91
    %vm93 = vcmask 818960
    %94 = vst.msk [vmem:[#allocation0] sm:$0x1] %vm93, %v92
    %s95 = scalar_lea.vmem %s0, 48
    %v96 = vld [vmem:[%s95] sm:$0x1]
    %97 = vrot.lane.b32.xlu0 %v96, 96
    %v98 = vpop.permute.xlu0 %97
    %vm99 = vcmask 802560
    %100 = vst.msk [vmem:[#allocation0] sm:$0x1] %vm99, %v98
    %s101 = scalar_lea.vmem %s0, 47
    %v102 = vld [vmem:[%s101] sm:$0x1]
    %103 = vrot.lane.b32.xlu0 %v102, 94
    %v104 = vpop.permute.xlu0 %103
    %vm105 = vcmask 786160
    %106 = vst.msk [vmem:[#allocation0] sm:$0x1] %vm105, %v104
    %s107 = scalar_lea.vmem %s0, 46
    %v108 = vld [vmem:[%s107] sm:$0x1]
    %109 = vrot.lane.b32.xlu0 %v108, 92
    %v110 = vpop.permute.xlu0 %109
    %vm111 = vcmask 769760
    %112 = vst.msk [vmem:[#allocation0] sm:$0x1] %vm111, %v110
    %s113 = scalar_lea.vmem %s0, 45
    %v114 = vld [vmem:[%s113] sm:$0x1]
    %115 = vrot.lane.b32.xlu0 %v114, 90
    %v116 = vpop.permute.xlu0 %115
    %vm117 = vcmask 753360
    %118 = vst.msk [vmem:[#allocation0] sm:$0x1] %vm117, %v116
    %s119 = scalar_lea.vmem %s0, 44
    %v120 = vld [vmem:[%s119] sm:$0x1]
    %121 = vrot.lane.b32.xlu0 %v120, 88
    %v122 = vpop.permute.xlu0 %121
    %vm123 = vcmask 736960
    %124 = vst.msk [vmem:[#allocation0] sm:$0x1] %vm123, %v122
    %s125 = scalar_lea.vmem %s0, 43
    %v126 = vld [vmem:[%s125] sm:$0x1]
    %127 = vrot.lane.b32.xlu0 %v126, 86
    %v128 = vpop.permute.xlu0 %127
    %vm129 = vcmask 720560
    %130 = vst.msk [vmem:[#allocation0] sm:$0x1] %vm129, %v128
    %s131 = scalar_lea.vmem %s0, 42
    %v132 = vld [vmem:[%s131] sm:$0x1]
    %133 = vrot.lane.b32.xlu0 %v132, 84
    %v134 = vpop.permute.xlu0 %133
    %vm135 = vcmask 704160
    %136 = vst.msk [vmem:[#allocation0] sm:$0x1] %vm135, %v134
    %s137 = scalar_lea.vmem %s0, 41
    %v138 = vld [vmem:[%s137] sm:$0x1]
    %139 = vrot.lane.b32.xlu0 %v138, 82
    %v140 = vpop.permute.xlu0 %139
    %vm141 = vcmask 687760
    %142 = vst.msk [vmem:[#allocation0] sm:$0x1] %vm141, %v140
    %s143 = scalar_lea.vmem %s0, 40
    %v144 = vld [vmem:[%s143] sm:$0x1]
    %145 = vrot.lane.b32.xlu0 %v144, 80
    %v146 = vpop.permute.xlu0 %145
    %vm147 = vcmask 671360
    %148 = vst.msk [vmem:[#allocation0] sm:$0x1] %vm147, %v146
    %s149 = scalar_lea.vmem %s0, 39
    %v150 = vld [vmem:[%s149] sm:$0x1]
    %151 = vrot.lane.b32.xlu0 %v150, 78
    %v152 = vpop.permute.xlu0 %151
    %vm153 = vcmask 654960
    %154 = vst.msk [vmem:[#allocation0] sm:$0x1] %vm153, %v152
    %s155 = scalar_lea.vmem %s0, 38
    %v156 = vld [vmem:[%s155] sm:$0x1]
    %157 = vrot.lane.b32.xlu0 %v156, 76
    %v158 = vpop.permute.xlu0 %157
    %vm159 = vcmask 638560
    %160 = vst.msk [vmem:[#allocation0] sm:$0x1] %vm159, %v158
    %s161 = scalar_lea.vmem %s0, 37
    %v162 = vld [vmem:[%s161] sm:$0x1]
    %163 = vrot.lane.b32.xlu0 %v162, 74
    %v164 = vpop.permute.xlu0 %163
    %vm165 = vcmask 622160
    %166 = vst.msk [vmem:[#allocation0] sm:$0x1] %vm165, %v164
    %s167 = scalar_lea.vmem %s0, 36
    %v168 = vld [vmem:[%s167] sm:$0x1]
    %169 = vrot.lane.b32.xlu0 %v168, 72
    %v170 = vpop.permute.xlu0 %169
    %vm171 = vcmask 605760
    %172 = vst.msk [vmem:[#allocation0] sm:$0x1] %vm171, %v170
    %s173 = scalar_lea.vmem %s0, 35
    %v174 = vld [vmem:[%s173] sm:$0x1]
    %175 = vrot.lane.b32.xlu0 %v174, 70
    %v176 = vpop.permute.xlu0 %175
    %vm177 = vcmask 589360
    %178 = vst.msk [vmem:[#allocation0] sm:$0x1] %vm177, %v176
    %s179 = scalar_lea.vmem %s0, 34
    %v180 = vld [vmem:[%s179] sm:$0x1]
    %181 = vrot.lane.b32.xlu0 %v180, 68
    %v182 = vpop.permute.xlu0 %181
    %vm183 = vcmask 572960
    %184 = vst.msk [vmem:[#allocation0] sm:$0x1] %vm183, %v182
    %s185 = scalar_lea.vmem %s0, 33
    %v186 = vld [vmem:[%s185] sm:$0x1]
    %187 = vrot.lane.b32.xlu0 %v186, 66
    %v188 = vpop.permute.xlu0 %187
    %vm189 = vcmask 556560
    %190 = vst.msk [vmem:[#allocation0] sm:$0x1] %vm189, %v188
    %s191 = scalar_lea.vmem %s0, 32
    %v192 = vld [vmem:[%s191] sm:$0x1]
    %193 = vrot.lane.b32.xlu0 %v192, 64
    %v194 = vpop.permute.xlu0 %193
    %vm195 = vcmask 540160
    %196 = vst.msk [vmem:[#allocation0] sm:$0x1] %vm195, %v194
    %s197 = scalar_lea.vmem %s0, 31
    %v198 = vld [vmem:[%s197] sm:$0x1]
    %199 = vrot.lane.b32.xlu0 %v198, 62
    %v200 = vpop.permute.xlu0 %199
    %vm201 = vcmask 523760
    %202 = vst.msk [vmem:[#allocation0] sm:$0x1] %vm201, %v200
    %s203 = scalar_lea.vmem %s0, 30
    %v204 = vld [vmem:[%s203] sm:$0x1]
    %205 = vrot.lane.b32.xlu0 %v204, 60
    %v206 = vpop.permute.xlu0 %205
    %vm207 = vcmask 507360
    %208 = vst.msk [vmem:[#allocation0] sm:$0x1] %vm207, %v206
    %s209 = scalar_lea.vmem %s0, 29
    %v210 = vld [vmem:[%s209] sm:$0x1]
    %211 = vrot.lane.b32.xlu0 %v210, 58
    %v212 = vpop.permute.xlu0 %211
    %vm213 = vcmask 490960
    %214 = vst.msk [vmem:[#allocation0] sm:$0x1] %vm213, %v212
    %s215 = scalar_lea.vmem %s0, 28
    %v216 = vld [vmem:[%s215] sm:$0x1]
    %217 = vrot.lane.b32.xlu0 %v216, 56
    %v218 = vpop.permute.xlu0 %217
    %vm219 = vcmask 474560
    %220 = vst.msk [vmem:[#allocation0] sm:$0x1] %vm219, %v218
    %s221 = scalar_lea.vmem %s0, 27
    %v222 = vld [vmem:[%s221] sm:$0x1]
    %223 = vrot.lane.b32.xlu0 %v222, 54
    %v224 = vpop.permute.xlu0 %223
    %vm225 = vcmask 458160
    %226 = vst.msk [vmem:[#allocation0] sm:$0x1] %vm225, %v224
    %s227 = scalar_lea.vmem %s0, 26
    %v228 = vld [vmem:[%s227] sm:$0x1]
    %229 = vrot.lane.b32.xlu0 %v228, 52
    %v230 = vpop.permute.xlu0 %229
    %vm231 = vcmask 441760
    %232 = vst.msk [vmem:[#allocation0] sm:$0x1] %vm231, %v230
    %s233 = scalar_lea.vmem %s0, 25
    %v234 = vld [vmem:[%s233] sm:$0x1]
    %235 = vrot.lane.b32.xlu0 %v234, 50
    %v236 = vpop.permute.xlu0 %235
    %vm237 = vcmask 425360
    %238 = vst.msk [vmem:[#allocation0] sm:$0x1] %vm237, %v236
    %s239 = scalar_lea.vmem %s0, 24
    %v240 = vld [vmem:[%s239] sm:$0x1]
    %241 = vrot.lane.b32.xlu0 %v240, 48
    %v242 = vpop.permute.xlu0 %241
    %vm243 = vcmask 408960
    %244 = vst.msk [vmem:[#allocation0] sm:$0x1] %vm243, %v242
    %s245 = scalar_lea.vmem %s0, 23
    %v246 = vld [vmem:[%s245] sm:$0x1]
    %247 = vrot.lane.b32.xlu0 %v246, 46
    %v248 = vpop.permute.xlu0 %247
    %vm249 = vcmask 392560
    %250 = vst.msk [vmem:[#allocation0] sm:$0x1] %vm249, %v248
    %s251 = scalar_lea.vmem %s0, 22
    %v252 = vld [vmem:[%s251] sm:$0x1]
    %253 = vrot.lane.b32.xlu0 %v252, 44
    %v254 = vpop.permute.xlu0 %253
    %vm255 = vcmask 376160
    %256 = vst.msk [vmem:[#allocation0] sm:$0x1] %vm255, %v254
    %s257 = scalar_lea.vmem %s0, 21
    %v258 = vld [vmem:[%s257] sm:$0x1]
    %259 = vrot.lane.b32.xlu0 %v258, 42
    %v260 = vpop.permute.xlu0 %259
    %vm261 = vcmask 359760
    %262 = vst.msk [vmem:[#allocation0] sm:$0x1] %vm261, %v260
    %s263 = scalar_lea.vmem %s0, 20
    %v264 = vld [vmem:[%s263] sm:$0x1]
    %265 = vrot.lane.b32.xlu0 %v264, 40
    %v266 = vpop.permute.xlu0 %265
    %vm267 = vcmask 343360
    %268 = vst.msk [vmem:[#allocation0] sm:$0x1] %vm267, %v266
    %s269 = scalar_lea.vmem %s0, 19
    %v270 = vld [vmem:[%s269] sm:$0x1]
    %271 = vrot.lane.b32.xlu0 %v270, 38
    %v272 = vpop.permute.xlu0 %271
    %vm273 = vcmask 326960
    %274 = vst.msk [vmem:[#allocation0] sm:$0x1] %vm273, %v272
    %s275 = scalar_lea.vmem %s0, 18
    %v276 = vld [vmem:[%s275] sm:$0x1]
    %277 = vrot.lane.b32.xlu0 %v276, 36
    %v278 = vpop.permute.xlu0 %277
    %vm279 = vcmask 310560
    %280 = vst.msk [vmem:[#allocation0] sm:$0x1] %vm279, %v278
    %s281 = scalar_lea.vmem %s0, 17
    %v282 = vld [vmem:[%s281] sm:$0x1]
    %283 = vrot.lane.b32.xlu0 %v282, 34
    %v284 = vpop.permute.xlu0 %283
    %vm285 = vcmask 294160
    %286 = vst.msk [vmem:[#allocation0] sm:$0x1] %vm285, %v284
    %s287 = scalar_lea.vmem %s0, 16
    %v288 = vld [vmem:[%s287] sm:$0x1]
    %289 = vrot.lane.b32.xlu0 %v288, 32
    %v290 = vpop.permute.xlu0 %289
    %vm291 = vcmask 277760
    %292 = vst.msk [vmem:[#allocation0] sm:$0x1] %vm291, %v290
    %s293 = scalar_lea.vmem %s0, 15
    %v294 = vld [vmem:[%s293] sm:$0x1]
    %295 = vrot.lane.b32.xlu0 %v294, 30
    %v296 = vpop.permute.xlu0 %295
    %vm297 = vcmask 261360
    %298 = vst.msk [vmem:[#allocation0] sm:$0x1] %vm297, %v296
    %s299 = scalar_lea.vmem %s0, 14
    %v300 = vld [vmem:[%s299] sm:$0x1]
    %301 = vrot.lane.b32.xlu0 %v300, 28
    %v302 = vpop.permute.xlu0 %301
    %vm303 = vcmask 244960
    %304 = vst.msk [vmem:[#allocation0] sm:$0x1] %vm303, %v302
    %s305 = scalar_lea.vmem %s0, 13
    %v306 = vld [vmem:[%s305] sm:$0x1]
    %307 = vrot.lane.b32.xlu0 %v306, 26
    %v308 = vpop.permute.xlu0 %307
    %vm309 = vcmask 228560
    %310 = vst.msk [vmem:[#allocation0] sm:$0x1] %vm309, %v308
    %s311 = scalar_lea.vmem %s0, 12
    %v312 = vld [vmem:[%s311] sm:$0x1]
    %313 = vrot.lane.b32.xlu0 %v312, 24
    %v314 = vpop.permute.xlu0 %313
    %vm315 = vcmask 212160
    %316 = vst.msk [vmem:[#allocation0] sm:$0x1] %vm315, %v314
    %s317 = scalar_lea.vmem %s0, 11
    %v318 = vld [vmem:[%s317] sm:$0x1]
    %319 = vrot.lane.b32.xlu0 %v318, 22
    %v320 = vpop.permute.xlu0 %319
    %vm321 = vcmask 195760
    %322 = vst.msk [vmem:[#allocation0] sm:$0x1] %vm321, %v320
    %s323 = scalar_lea.vmem %s0, 10
    %v324 = vld [vmem:[%s323] sm:$0x1]
    %325 = vrot.lane.b32.xlu0 %v324, 20
    %v326 = vpop.permute.xlu0 %325
    %vm327 = vcmask 179360
    %328 = vst.msk [vmem:[#allocation0] sm:$0x1] %vm327, %v326
    %s329 = scalar_lea.vmem %s0, 9
    %v330 = vld [vmem:[%s329] sm:$0x1]
    %331 = vrot.lane.b32.xlu0 %v330, 18
    %v332 = vpop.permute.xlu0 %331
    %vm333 = vcmask 162960
    %334 = vst.msk [vmem:[#allocation0] sm:$0x1] %vm333, %v332
    %s335 = scalar_lea.vmem %s0, 8
    %v336 = vld [vmem:[%s335] sm:$0x1]
    %337 = vrot.lane.b32.xlu0 %v336, 16
    %v338 = vpop.permute.xlu0 %337
    %vm339 = vcmask 146560
    %340 = vst.msk [vmem:[#allocation0] sm:$0x1] %vm339, %v338
    %s341 = scalar_lea.vmem %s0, 7
    %v342 = vld [vmem:[%s341] sm:$0x1]
    %343 = vrot.lane.b32.xlu0 %v342, 14
    %v344 = vpop.permute.xlu0 %343
    %vm345 = vcmask 130160
    %346 = vst.msk [vmem:[#allocation0] sm:$0x1] %vm345, %v344
    %s347 = scalar_lea.vmem %s0, 6
    %v348 = vld [vmem:[%s347] sm:$0x1]
    %349 = vrot.lane.b32.xlu0 %v348, 12
    %v350 = vpop.permute.xlu0 %349
    %vm351 = vcmask 113760
    %352 = vst.msk [vmem:[#allocation0] sm:$0x1] %vm351, %v350
    %s353 = scalar_lea.vmem %s0, 5
    %v354 = vld [vmem:[%s353] sm:$0x1]
    %355 = vrot.lane.b32.xlu0 %v354, 10
    %v356 = vpop.permute.xlu0 %355
    %vm357 = vcmask 97360
    %358 = vst.msk [vmem:[#allocation0] sm:$0x1] %vm357, %v356
    %s359 = scalar_lea.vmem %s0, 4
    %v360 = vld [vmem:[%s359] sm:$0x1]
    %361 = vrot.lane.b32.xlu0 %v360, 8
    %v362 = vpop.permute.xlu0 %361
    %vm363 = vcmask 80960
    %364 = vst.msk [vmem:[#allocation0] sm:$0x1] %vm363, %v362
    %s365 = scalar_lea.vmem %s0, 3
    %v366 = vld [vmem:[%s365] sm:$0x1]
    %367 = vrot.lane.b32.xlu0 %v366, 6
    %v368 = vpop.permute.xlu0 %367
    %vm369 = vcmask 64560
    %370 = vst.msk [vmem:[#allocation0] sm:$0x1] %vm369, %v368
    %s371 = scalar_lea.vmem %s0, 2
    %v372 = vld [vmem:[%s371] sm:$0x1]
    %373 = vrot.lane.b32.xlu0 %v372, 4
    %v374 = vpop.permute.xlu0 %373
    %vm375 = vcmask 48160
    %376 = vst.msk [vmem:[#allocation0] sm:$0x1] %vm375, %v374
    %s377 = scalar_lea.vmem %s0, 1
    %v378 = vld [vmem:[%s377] sm:$0x1]
    %379 = vrot.lane.b32.xlu0 %v378, 2
    %v380 = vpop.permute.xlu0 %379
    %vm381 = vcmask 31760
    %382 = vst.msk [vmem:[#allocation0] sm:$0x1] %vm381, %v380
    %s384 = ssub.s32 2, 1
    %v385 = vld [vmem:[#allocation0] sm:%s384]
    %s387 = ssub.s32 2, 1
    %388 = vst [vmem:[%s1] sm:%s387] %v385

// kernel: dqn_forward.1
$region0: #{dqn_forward.1}
  #allocation0 [shape = 'u32[]', space=smem, size = 0x4, offset = 0x4, fixed_abs, tag = 'smem constant byte address 0x4 - core index']
  #allocation1 [shape = 'u32[72,128]{1,0:T(1,128)}', space=vmem, size = 0x9000, scoped, tag = 'internal scratch']
  %s0 = inlined_call_operand.vmem [shape: f32[1,256], index: 0, kind: input, shape index: {}]
  %s1 = inlined_call_operand.vmem [shape: f32[256,1024], index: 1, kind: input, shape index: {}]
  %s2 = inlined_call_operand.vmem [shape: f32[1,1024], index: 2, kind: input, shape index: {}]
  %s3 = inlined_call_operand.vmem [shape: f32[1024,1024], index: 3, kind: input, shape index: {}]
  %s4 = inlined_call_operand.vmem [shape: f32[1,1024], index: 4, kind: input, shape index: {}]
  %s5 = inlined_call_operand.vmem [shape: f32[1024,128], index: 5, kind: input, shape index: {}]
  %s6 = inlined_call_operand.vmem [shape: f32[1,128], index: 6, kind: input, shape index: {}]
  %s7 = inlined_call_operand.vmem [shape: f32[1,128], index: 7, kind: output, shape index: {}]
  %s8 = sld [smem:[#allocation0]]
  $region38: #{dqn_forward.1} parent=0
    _
  %s10 = ssub.s32 1, %s8
  %s11 = scalar_select 0, %s10, %s8
  // Predicated region
  $region2: #{dqn_forward.1} parent=0 // pred_check
    _
  $region3: #{dqn_forward.1} parent=0 // pred_check_branch
    %13 = sbr.rel (0) target = $region5
  $region4: #{dqn_forward.1} parent=0 // pred_region
    _
  $region5: #{dqn_forward.1} parent=0 // pred_fallthru
    _
  // Predicated region
  $region6: #{dqn_forward.1} parent=0 // pred_check
    _
  $region7: #{dqn_forward.1} parent=0 // pred_check_branch
    %15 = sbr.rel (0) target = $region9
  $region8: #{dqn_forward.1} parent=0 // pred_region
    _
  $region9: #{dqn_forward.1} parent=0 // pred_fallthru
    _
  // Predicated region
  $region10: #{dqn_forward.1} parent=0 // pred_check
    _
  $region11: #{dqn_forward.1} parent=0 // pred_check_branch
    %17 = sbr.rel (0) target = $region13
  $region12: #{dqn_forward.1} parent=0 // pred_region
    _
  $region13: #{dqn_forward.1} parent=0 // pred_fallthru
    _
  // Predicated region
  $region14: #{dqn_forward.1} parent=0 // pred_check
    _
  $region15: #{dqn_forward.1} parent=0 // pred_check_branch
    %19 = sbr.rel (0) target = $region17
  $region16: #{dqn_forward.1} parent=0 // pred_region
    _
  $region17: #{dqn_forward.1} parent=0 // pred_fallthru
    _
  // Predicated region
  $region18: #{dqn_forward.1} parent=0 // pred_check
    _
  $region19: #{dqn_forward.1} parent=0 // pred_check_branch
    %21 = sbr.rel (0) target = $region21
  $region20: #{dqn_forward.1} parent=0 // pred_region
    _
  $region21: #{dqn_forward.1} parent=0 // pred_fallthru
    _
  // Predicated region
  $region22: #{dqn_forward.1} parent=0 // pred_check
    _
  $region23: #{dqn_forward.1} parent=0 // pred_check_branch
    %23 = sbr.rel (0) target = $region25
  $region24: #{dqn_forward.1} parent=0 // pred_region
    _
  $region25: #{dqn_forward.1} parent=0 // pred_fallthru
    _
  // Predicated region
  $region26: #{dqn_forward.1} parent=0 // pred_check
    _
  $region27: #{dqn_forward.1} parent=0 // pred_check_branch
    %25 = sbr.rel (0) target = $region29
  $region28: #{dqn_forward.1} parent=0 // pred_region
    _
  $region29: #{dqn_forward.1} parent=0 // pred_fallthru
    _
  %v26 = vld [vmem:[%s0] sm:$0x3]
  %v27 = vld [vmem:[%s1] sm:$0xff]
  %v28 = vld [vmem:[%s1 + $0x8] sm:$0xff]
  %v29 = vld [vmem:[%s1 + $0x10] sm:$0xff]
  %v30 = vld [vmem:[%s1 + $0x18] sm:$0xff]
  %v31 = vld [vmem:[%s1 + $0x20] sm:$0xff]
  %v32 = vld [vmem:[%s1 + $0x28] sm:$0xff]
  %v33 = vld [vmem:[%s1 + $0x30] sm:$0xff]
  %v34 = vld [vmem:[%s1 + $0x38] sm:$0xff]
  %v35 = vld [vmem:[%s1 + $0x40] sm:$0xff]
  %v36 = vld [vmem:[%s1 + $0x48] sm:$0xff]
  %v37 = vld [vmem:[%s1 + $0x50] sm:$0xff]
  %v38 = vld [vmem:[%s1 + $0x58] sm:$0xff]
  %v39 = vld [vmem:[%s1 + $0x60] sm:$0xff]
  %v40 = vld [vmem:[%s1 + $0x68] sm:$0xff]
  %v41 = vld [vmem:[%s1 + $0x70] sm:$0xff]
  %v42 = vld [vmem:[%s1 + $0x78] sm:$0xff]
  %v43 = vld [vmem:[%s1 + $0x80] sm:$0xff]
  %v44 = vld [vmem:[%s1 + $0x88] sm:$0xff]
  %v45 = vld [vmem:[%s1 + $0x90] sm:$0xff]
  %v46 = vld [vmem:[%s1 + $0x98] sm:$0xff]
  %v47 = vld [vmem:[%s1 + $0xa0] sm:$0xff]
  %v48 = vld [vmem:[%s1 + $0xa8] sm:$0xff]
  %v49 = vld [vmem:[%s1 + $0xb0] sm:$0xff]
  %v50 = vld [vmem:[%s1 + $0xb8] sm:$0xff]
  %v51 = vld [vmem:[%s1 + $0xc0] sm:$0xff]
  %v52 = vld [vmem:[%s1 + $0xc8] sm:$0xff]
  %v53 = vld [vmem:[%s1 + $0xd0] sm:$0xff]
  %v54 = vld [vmem:[%s1 + $0xd8] sm:$0xff]
  %v55 = vld [vmem:[%s1 + $0xe0] sm:$0xff]
  %v56 = vld [vmem:[%s1 + $0xe8] sm:$0xff]
  %v57 = vld [vmem:[%s1 + $0xf0] sm:$0xff]
  %v58 = vld [vmem:[%s1 + $0xf8] sm:$0xff]
  %v59 = vld [vmem:[%s1 + $0x100] sm:$0xff]
  %v60 = vld [vmem:[%s1 + $0x108] sm:$0xff]
  %v61 = vld [vmem:[%s1 + $0x110] sm:$0xff]
  %v62 = vld [vmem:[%s1 + $0x118] sm:$0xff]
  %v63 = vld [vmem:[%s1 + $0x120] sm:$0xff]
  %v64 = vld [vmem:[%s1 + $0x128] sm:$0xff]
  %v65 = vld [vmem:[%s1 + $0x130] sm:$0xff]
  %v66 = vld [vmem:[%s1 + $0x138] sm:$0xff]
  %v67 = vld [vmem:[%s1 + $0x140] sm:$0xff]
  %v68 = vld [vmem:[%s1 + $0x148] sm:$0xff]
  %v69 = vld [vmem:[%s1 + $0x150] sm:$0xff]
  %v70 = vld [vmem:[%s1 + $0x158] sm:$0xff]
  %v71 = vld [vmem:[%s1 + $0x160] sm:$0xff]
  %v72 = vld [vmem:[%s1 + $0x168] sm:$0xff]
  %v73 = vld [vmem:[%s1 + $0x170] sm:$0xff]
  %v74 = vld [vmem:[%s1 + $0x178] sm:$0xff]
  %v75 = vld [vmem:[%s1 + $0x180] sm:$0xff]
  %v76 = vld [vmem:[%s1 + $0x188] sm:$0xff]
  %v77 = vld [vmem:[%s1 + $0x190] sm:$0xff]
  %v78 = vld [vmem:[%s1 + $0x198] sm:$0xff]
  %v79 = vld [vmem:[%s1 + $0x1a0] sm:$0xff]
  %v80 = vld [vmem:[%s1 + $0x1a8] sm:$0xff]
  %v81 = vld [vmem:[%s1 + $0x1b0] sm:$0xff]
  %v82 = vld [vmem:[%s1 + $0x1b8] sm:$0xff]
  %v83 = vld [vmem:[%s1 + $0x1c0] sm:$0xff]
  %v84 = vld [vmem:[%s1 + $0x1c8] sm:$0xff]
  %v85 = vld [vmem:[%s1 + $0x1d0] sm:$0xff]
  %v86 = vld [vmem:[%s1 + $0x1d8] sm:$0xff]
  %v87 = vld [vmem:[%s1 + $0x1e0] sm:$0xff]
  %v88 = vld [vmem:[%s1 + $0x1e8] sm:$0xff]
  %v89 = vld [vmem:[%s1 + $0x1f0] sm:$0xff]
  %v90 = vld [vmem:[%s1 + $0x1f8] sm:$0xff]
  %v91 = vld [vmem:[%s1 + $0x200] sm:$0xff]
  %v92 = vld [vmem:[%s1 + $0x208] sm:$0xff]
  %v93 = vld [vmem:[%s1 + $0x210] sm:$0xff]
  %v94 = vld [vmem:[%s1 + $0x218] sm:$0xff]
  %v95 = vld [vmem:[%s1 + $0x220] sm:$0xff]
  %v96 = vld [vmem:[%s1 + $0x228] sm:$0xff]
  %v97 = vld [vmem:[%s1 + $0x230] sm:$0xff]
  %v98 = vld [vmem:[%s1 + $0x238] sm:$0xff]
  %v99 = vld [vmem:[%s1 + $0x240] sm:$0xff]
  %v100 = vld [vmem:[%s1 + $0x248] sm:$0xff]
  %v101 = vld [vmem:[%s1 + $0x250] sm:$0xff]
  %v102 = vld [vmem:[%s1 + $0x258] sm:$0xff]
  %v103 = vld [vmem:[%s1 + $0x260] sm:$0xff]
  %v104 = vld [vmem:[%s1 + $0x268] sm:$0xff]
  %v105 = vld [vmem:[%s1 + $0x270] sm:$0xff]
  %v106 = vld [vmem:[%s1 + $0x278] sm:$0xff]
  %v107 = vld [vmem:[%s1 + $0x280] sm:$0xff]
  %v108 = vld [vmem:[%s1 + $0x288] sm:$0xff]
  %v109 = vld [vmem:[%s1 + $0x290] sm:$0xff]
  %v110 = vld [vmem:[%s1 + $0x298] sm:$0xff]
  %v111 = vld [vmem:[%s1 + $0x2a0] sm:$0xff]
  %v112 = vld [vmem:[%s1 + $0x2a8] sm:$0xff]
  %v113 = vld [vmem:[%s1 + $0x2b0] sm:$0xff]
  %v114 = vld [vmem:[%s1 + $0x2b8] sm:$0xff]
  %v115 = vld [vmem:[%s1 + $0x2c0] sm:$0xff]
  %v116 = vld [vmem:[%s1 + $0x2c8] sm:$0xff]
  %v117 = vld [vmem:[%s1 + $0x2d0] sm:$0xff]
  %v118 = vld [vmem:[%s1 + $0x2d8] sm:$0xff]
  %v119 = vld [vmem:[%s1 + $0x2e0] sm:$0xff]
  %v120 = vld [vmem:[%s1 + $0x2e8] sm:$0xff]
  %v121 = vld [vmem:[%s1 + $0x2f0] sm:$0xff]
  %v122 = vld [vmem:[%s1 + $0x2f8] sm:$0xff]
  %v123 = vld [vmem:[%s1 + $0x300] sm:$0xff]
  %v124 = vld [vmem:[%s1 + $0x308] sm:$0xff]
  %v125 = vld [vmem:[%s1 + $0x310] sm:$0xff]
  %v126 = vld [vmem:[%s1 + $0x318] sm:$0xff]
  %v127 = vld [vmem:[%s1 + $0x320] sm:$0xff]
  %v128 = vld [vmem:[%s1 + $0x328] sm:$0xff]
  %v129 = vld [vmem:[%s1 + $0x330] sm:$0xff]
  %v130 = vld [vmem:[%s1 + $0x338] sm:$0xff]
  %v131 = vld [vmem:[%s1 + $0x340] sm:$0xff]
  %v132 = vld [vmem:[%s1 + $0x348] sm:$0xff]
  %v133 = vld [vmem:[%s1 + $0x350] sm:$0xff]
  %v134 = vld [vmem:[%s1 + $0x358] sm:$0xff]
  %v135 = vld [vmem:[%s1 + $0x360] sm:$0xff]
  %v136 = vld [vmem:[%s1 + $0x368] sm:$0xff]
  %v137 = vld [vmem:[%s1 + $0x370] sm:$0xff]
  %v138 = vld [vmem:[%s1 + $0x378] sm:$0xff]
  %v139 = vld [vmem:[%s1 + $0x380] sm:$0xff]
  %v140 = vld [vmem:[%s1 + $0x388] sm:$0xff]
  %v141 = vld [vmem:[%s1 + $0x390] sm:$0xff]
  %v142 = vld [vmem:[%s1 + $0x398] sm:$0xff]
  %v143 = vld [vmem:[%s1 + $0x3a0] sm:$0xff]
  %v144 = vld [vmem:[%s1 + $0x3a8] sm:$0xff]
  %v145 = vld [vmem:[%s1 + $0x3b0] sm:$0xff]
  %v146 = vld [vmem:[%s1 + $0x3b8] sm:$0xff]
  %v147 = vld [vmem:[%s1 + $0x3c0] sm:$0xff]
  %v148 = vld [vmem:[%s1 + $0x3c8] sm:$0xff]
  %v149 = vld [vmem:[%s1 + $0x3d0] sm:$0xff]
  %v150 = vld [vmem:[%s1 + $0x3d8] sm:$0xff]
  %v151 = vld [vmem:[%s1 + $0x3e0] sm:$0xff]
  %v152 = vld [vmem:[%s1 + $0x3e8] sm:$0xff]
  %v153 = vld [vmem:[%s1 + $0x3f0] sm:$0xff]
  %v154 = vld [vmem:[%s1 + $0x3f8] sm:$0xff]
  %v155 = vld [vmem:[%s1 + $0x400] sm:$0xff]
  %v156 = vld [vmem:[%s1 + $0x408] sm:$0xff]
  %v157 = vld [vmem:[%s1 + $0x410] sm:$0xff]
  %v158 = vld [vmem:[%s1 + $0x418] sm:$0xff]
  %v159 = vld [vmem:[%s1 + $0x420] sm:$0xff]
  %v160 = vld [vmem:[%s1 + $0x428] sm:$0xff]
  %v161 = vld [vmem:[%s1 + $0x430] sm:$0xff]
  %v162 = vld [vmem:[%s1 + $0x438] sm:$0xff]
  %v163 = vld [vmem:[%s1 + $0x440] sm:$0xff]
  %v164 = vld [vmem:[%s1 + $0x448] sm:$0xff]
  %v165 = vld [vmem:[%s1 + $0x450] sm:$0xff]
  %v166 = vld [vmem:[%s1 + $0x458] sm:$0xff]
  %v167 = vld [vmem:[%s1 + $0x460] sm:$0xff]
  %v168 = vld [vmem:[%s1 + $0x468] sm:$0xff]
  %v169 = vld [vmem:[%s1 + $0x470] sm:$0xff]
  %v170 = vld [vmem:[%s1 + $0x478] sm:$0xff]
  %v171 = vld [vmem:[%s1 + $0x480] sm:$0xff]
  %v172 = vld [vmem:[%s1 + $0x488] sm:$0xff]
  %v173 = vld [vmem:[%s1 + $0x490] sm:$0xff]
  %v174 = vld [vmem:[%s1 + $0x498] sm:$0xff]
  %v175 = vld [vmem:[%s1 + $0x4a0] sm:$0xff]
  %v176 = vld [vmem:[%s1 + $0x4a8] sm:$0xff]
  %v177 = vld [vmem:[%s1 + $0x4b0] sm:$0xff]
  %v178 = vld [vmem:[%s1 + $0x4b8] sm:$0xff]
  %v179 = vld [vmem:[%s1 + $0x4c0] sm:$0xff]
  %v180 = vld [vmem:[%s1 + $0x4c8] sm:$0xff]
  %v181 = vld [vmem:[%s1 + $0x4d0] sm:$0xff]
  %v182 = vld [vmem:[%s1 + $0x4d8] sm:$0xff]
  %v183 = vld [vmem:[%s1 + $0x4e0] sm:$0xff]
  %v184 = vld [vmem:[%s1 + $0x4e8] sm:$0xff]
  %v185 = vld [vmem:[%s1 + $0x4f0] sm:$0xff]
  %v186 = vld [vmem:[%s1 + $0x4f8] sm:$0xff]
  %v187 = vld [vmem:[%s1 + $0x500] sm:$0xff]
  %v188 = vld [vmem:[%s1 + $0x508] sm:$0xff]
  %v189 = vld [vmem:[%s1 + $0x510] sm:$0xff]
  %v190 = vld [vmem:[%s1 + $0x518] sm:$0xff]
  %v191 = vld [vmem:[%s1 + $0x520] sm:$0xff]
  %v192 = vld [vmem:[%s1 + $0x528] sm:$0xff]
  %v193 = vld [vmem:[%s1 + $0x530] sm:$0xff]
  %v194 = vld [vmem:[%s1 + $0x538] sm:$0xff]
  %v195 = vld [vmem:[%s1 + $0x540] sm:$0xff]
  %v196 = vld [vmem:[%s1 + $0x548] sm:$0xff]
  %v197 = vld [vmem:[%s1 + $0x550] sm:$0xff]
  %v198 = vld [vmem:[%s1 + $0x558] sm:$0xff]
  %v199 = vld [vmem:[%s1 + $0x560] sm:$0xff]
  %v200 = vld [vmem:[%s1 + $0x568] sm:$0xff]
  %v201 = vld [vmem:[%s1 + $0x570] sm:$0xff]
  %v202 = vld [vmem:[%s1 + $0x578] sm:$0xff]
  %v203 = vld [vmem:[%s1 + $0x580] sm:$0xff]
  %v204 = vld [vmem:[%s1 + $0x588] sm:$0xff]
  %v205 = vld [vmem:[%s1 + $0x590] sm:$0xff]
  %v206 = vld [vmem:[%s1 + $0x598] sm:$0xff]
  %v207 = vld [vmem:[%s1 + $0x5a0] sm:$0xff]
  %v208 = vld [vmem:[%s1 + $0x5a8] sm:$0xff]
  %v209 = vld [vmem:[%s1 + $0x5b0] sm:$0xff]
  %v210 = vld [vmem:[%s1 + $0x5b8] sm:$0xff]
  %v211 = vld [vmem:[%s1 + $0x5c0] sm:$0xff]
  %v212 = vld [vmem:[%s1 + $0x5c8] sm:$0xff]
  %v213 = vld [vmem:[%s1 + $0x5d0] sm:$0xff]
  %v214 = vld [vmem:[%s1 + $0x5d8] sm:$0xff]
  %v215 = vld [vmem:[%s1 + $0x5e0] sm:$0xff]
  %v216 = vld [vmem:[%s1 + $0x5e8] sm:$0xff]
  %v217 = vld [vmem:[%s1 + $0x5f0] sm:$0xff]
  %v218 = vld [vmem:[%s1 + $0x5f8] sm:$0xff]
  %v219 = vld [vmem:[%s1 + $0x600] sm:$0xff]
  %v220 = vld [vmem:[%s1 + $0x608] sm:$0xff]
  %v221 = vld [vmem:[%s1 + $0x610] sm:$0xff]
  %v222 = vld [vmem:[%s1 + $0x618] sm:$0xff]
  %v223 = vld [vmem:[%s1 + $0x620] sm:$0xff]
  %v224 = vld [vmem:[%s1 + $0x628] sm:$0xff]
  %v225 = vld [vmem:[%s1 + $0x630] sm:$0xff]
  %v226 = vld [vmem:[%s1 + $0x638] sm:$0xff]
  %v227 = vld [vmem:[%s1 + $0x640] sm:$0xff]
  %v228 = vld [vmem:[%s1 + $0x648] sm:$0xff]
  %v229 = vld [vmem:[%s1 + $0x650] sm:$0xff]
  %v230 = vld [vmem:[%s1 + $0x658] sm:$0xff]
  %v231 = vld [vmem:[%s1 + $0x660] sm:$0xff]
  %v232 = vld [vmem:[%s1 + $0x668] sm:$0xff]
  %v233 = vld [vmem:[%s1 + $0x670] sm:$0xff]
  %v234 = vld [vmem:[%s1 + $0x678] sm:$0xff]
  %v235 = vld [vmem:[%s1 + $0x680] sm:$0xff]
  %v236 = vld [vmem:[%s1 + $0x688] sm:$0xff]
  %v237 = vld [vmem:[%s1 + $0x690] sm:$0xff]
  %v238 = vld [vmem:[%s1 + $0x698] sm:$0xff]
  %v239 = vld [vmem:[%s1 + $0x6a0] sm:$0xff]
  %v240 = vld [vmem:[%s1 + $0x6a8] sm:$0xff]
  %v241 = vld [vmem:[%s1 + $0x6b0] sm:$0xff]
  %v242 = vld [vmem:[%s1 + $0x6b8] sm:$0xff]
  %v243 = vld [vmem:[%s1 + $0x6c0] sm:$0xff]
  %v244 = vld [vmem:[%s1 + $0x6c8] sm:$0xff]
  %v245 = vld [vmem:[%s1 + $0x6d0] sm:$0xff]
  %v246 = vld [vmem:[%s1 + $0x6d8] sm:$0xff]
  %v247 = vld [vmem:[%s1 + $0x6e0] sm:$0xff]
  %v248 = vld [vmem:[%s1 + $0x6e8] sm:$0xff]
  %v249 = vld [vmem:[%s1 + $0x6f0] sm:$0xff]
  %v250 = vld [vmem:[%s1 + $0x6f8] sm:$0xff]
  %v251 = vld [vmem:[%s1 + $0x700] sm:$0xff]
  %v252 = vld [vmem:[%s1 + $0x708] sm:$0xff]
  %v253 = vld [vmem:[%s1 + $0x710] sm:$0xff]
  %v254 = vld [vmem:[%s1 + $0x718] sm:$0xff]
  %v255 = vld [vmem:[%s1 + $0x720] sm:$0xff]
  %v256 = vld [vmem:[%s1 + $0x728] sm:$0xff]
  %v257 = vld [vmem:[%s1 + $0x730] sm:$0xff]
  %v258 = vld [vmem:[%s1 + $0x738] sm:$0xff]
  %v259 = vld [vmem:[%s1 + $0x740] sm:$0xff]
  %v260 = vld [vmem:[%s1 + $0x748] sm:$0xff]
  %v261 = vld [vmem:[%s1 + $0x750] sm:$0xff]
  %v262 = vld [vmem:[%s1 + $0x758] sm:$0xff]
  %v263 = vld [vmem:[%s1 + $0x760] sm:$0xff]
  %v264 = vld [vmem:[%s1 + $0x768] sm:$0xff]
  %v265 = vld [vmem:[%s1 + $0x770] sm:$0xff]
  %v266 = vld [vmem:[%s1 + $0x778] sm:$0xff]
  %v267 = vld [vmem:[%s1 + $0x780] sm:$0xff]
  %v268 = vld [vmem:[%s1 + $0x788] sm:$0xff]
  %v269 = vld [vmem:[%s1 + $0x790] sm:$0xff]
  %v270 = vld [vmem:[%s1 + $0x798] sm:$0xff]
  %v271 = vld [vmem:[%s1 + $0x7a0] sm:$0xff]
  %v272 = vld [vmem:[%s1 + $0x7a8] sm:$0xff]
  %v273 = vld [vmem:[%s1 + $0x7b0] sm:$0xff]
  %v274 = vld [vmem:[%s1 + $0x7b8] sm:$0xff]
  %v275 = vld [vmem:[%s1 + $0x7c0] sm:$0xff]
  %v276 = vld [vmem:[%s1 + $0x7c8] sm:$0xff]
  %v277 = vld [vmem:[%s1 + $0x7d0] sm:$0xff]
  %v278 = vld [vmem:[%s1 + $0x7d8] sm:$0xff]
  %v279 = vld [vmem:[%s1 + $0x7e0] sm:$0xff]
  %v280 = vld [vmem:[%s1 + $0x7e8] sm:$0xff]
  %v281 = vld [vmem:[%s1 + $0x7f0] sm:$0xff]
  %v282 = vld [vmem:[%s1 + $0x7f8] sm:$0xff]
  %v283 = vld [vmem:[%s2] sm:$0xff]
  %v285 = vperm.slane %v26, 0
  %v286 = vperm.slane %v26, 1
  %v290 = vperm.slane %v283, 0
  %v291 = vperm.slane %v283, 1
  %v292 = vperm.slane %v283, 2
  %v293 = vperm.slane %v283, 3
  %v294 = vperm.slane %v283, 4
  %v295 = vperm.slane %v283, 5
  %v296 = vperm.slane %v283, 6
  %v297 = vperm.slane %v283, 7
  %306 = vmatpush.msra.mxu0 %v147
  %307 = vmatpush.msra.mxu0 %v139
  %308 = vmatpush.msra.mxu0 %v131
  %309 = vmatpush.msra.mxu0 %v123
  %310 = vmatpush.msra.mxu0 %v115
  %311 = vmatpush.msra.mxu0 %v107
  %312 = vmatpush.msra.mxu0 %v99
  %313 = vmatpush.msra.mxu0 %v91
  %314 = vmatpush.msra.mxu0 %v83
  %315 = vmatpush.msra.mxu0 %v75
  %316 = vmatpush.msra.mxu0 %v67
  %317 = vmatpush.msra.mxu0 %v59
  %318 = vmatpush.msra.mxu0 %v51
  %319 = vmatpush.msra.mxu0 %v43
  %320 = vmatpush.msra.mxu0 %v35
  %321 = vmatpush.msra.mxu0 %v27
  %322 = vmatmul.f32.gmra.mxu0 %v285
  %v323 = vpop.f32.mrf.mxu0
  %v324 = vadd.f32 %v290, %v323
  %325 = vdwg.mxu0
  %326 = vmatpush.msra.mxu0 %v275
  %327 = vmatpush.msra.mxu0 %v267
  %328 = vmatpush.msra.mxu0 %v259
  %329 = vmatpush.msra.mxu0 %v251
  %330 = vmatpush.msra.mxu0 %v243
  %331 = vmatpush.msra.mxu0 %v235
  %332 = vmatpush.msra.mxu0 %v227
  %333 = vmatpush.msra.mxu0 %v219
  %334 = vmatpush.msra.mxu0 %v211
  %335 = vmatpush.msra.mxu0 %v203
  %336 = vmatpush.msra.mxu0 %v195
  %337 = vmatpush.msra.mxu0 %v187
  %338 = vmatpush.msra.mxu0 %v179
  %339 = vmatpush.msra.mxu0 %v171
  %340 = vmatpush.msra.mxu0 %v163
  %341 = vmatpush.msra.mxu0 %v155
  %342 = vmatmul.f32.gmra.mxu0 %v286
  %v343 = vpop.f32.mrf.mxu0
  %v344 = vadd.f32 %v324, %v343
  %345 = vdwg.mxu0
  %346 = vmatpush.msra.mxu0 %v148
  %347 = vmatpush.msra.mxu0 %v140
  %348 = vmatpush.msra.mxu0 %v132
  %349 = vmatpush.msra.mxu0 %v124
  %350 = vmatpush.msra.mxu0 %v116
  %351 = vmatpush.msra.mxu0 %v108
  %352 = vmatpush.msra.mxu0 %v100
  %353 = vmatpush.msra.mxu0 %v92
  %354 = vmatpush.msra.mxu0 %v84
  %355 = vmatpush.msra.mxu0 %v76
  %356 = vmatpush.msra.mxu0 %v68
  %357 = vmatpush.msra.mxu0 %v60
  %358 = vmatpush.msra.mxu0 %v52
  %359 = vmatpush.msra.mxu0 %v44
  %360 = vmatpush.msra.mxu0 %v36
  %361 = vmatpush.msra.mxu0 %v28
  %362 = vmatmul.f32.gmra.mxu0 %v285
  %v363 = vpop.f32.mrf.mxu0
  %v364 = vadd.f32 %v291, %v363
  %365 = vdwg.mxu0
  %366 = vmatpush.msra.mxu0 %v276
  %367 = vmatpush.msra.mxu0 %v268
  %368 = vmatpush.msra.mxu0 %v260
  %369 = vmatpush.msra.mxu0 %v252
  %370 = vmatpush.msra.mxu0 %v244
  %371 = vmatpush.msra.mxu0 %v236
  %372 = vmatpush.msra.mxu0 %v228
  %373 = vmatpush.msra.mxu0 %v220
  %374 = vmatpush.msra.mxu0 %v212
  %375 = vmatpush.msra.mxu0 %v204
  %376 = vmatpush.msra.mxu0 %v196
  %377 = vmatpush.msra.mxu0 %v188
  %378 = vmatpush.msra.mxu0 %v180
  %379 = vmatpush.msra.mxu0 %v172
  %380 = vmatpush.msra.mxu0 %v164
  %381 = vmatpush.msra.mxu0 %v156
  %382 = vmatmul.f32.gmra.mxu0 %v286
  %v383 = vpop.f32.mrf.mxu0
  %v384 = vadd.f32 %v364, %v383
  %385 = vdwg.mxu0
  %386 = vmatpush.msra.mxu0 %v149
  %387 = vmatpush.msra.mxu0 %v141
  %388 = vmatpush.msra.mxu0 %v133
  %389 = vmatpush.msra.mxu0 %v125
  %390 = vmatpush.msra.mxu0 %v117
  %391 = vmatpush.msra.mxu0 %v109
  %392 = vmatpush.msra.mxu0 %v101
  %393 = vmatpush.msra.mxu0 %v93
  %394 = vmatpush.msra.mxu0 %v85
  %395 = vmatpush.msra.mxu0 %v77
  %396 = vmatpush.msra.mxu0 %v69
  %397 = vmatpush.msra.mxu0 %v61
  %398 = vmatpush.msra.mxu0 %v53
  %399 = vmatpush.msra.mxu0 %v45
  %400 = vmatpush.msra.mxu0 %v37
  %401 = vmatpush.msra.mxu0 %v29
  %402 = vmatmul.f32.gmra.mxu0 %v285
  %v403 = vpop.f32.mrf.mxu0
  %v404 = vadd.f32 %v292, %v403
  %405 = vdwg.mxu0
  %406 = vmatpush.msra.mxu0 %v277
  %407 = vmatpush.msra.mxu0 %v269
  %408 = vmatpush.msra.mxu0 %v261
  %409 = vmatpush.msra.mxu0 %v253
  %410 = vmatpush.msra.mxu0 %v245
  %411 = vmatpush.msra.mxu0 %v237
  %412 = vmatpush.msra.mxu0 %v229
  %413 = vmatpush.msra.mxu0 %v221
  %414 = vmatpush.msra.mxu0 %v213
  %415 = vmatpush.msra.mxu0 %v205
  %416 = vmatpush.msra.mxu0 %v197
  %417 = vmatpush.msra.mxu0 %v189
  %418 = vmatpush.msra.mxu0 %v181
  %419 = vmatpush.msra.mxu0 %v173
  %420 = vmatpush.msra.mxu0 %v165
  %421 = vmatpush.msra.mxu0 %v157
  %422 = vmatmul.f32.gmra.mxu0 %v286
  %v423 = vpop.f32.mrf.mxu0
  %v424 = vadd.f32 %v404, %v423
  %425 = vdwg.mxu0
  %426 = vmatpush.msra.mxu0 %v150
  %427 = vmatpush.msra.mxu0 %v142
  %428 = vmatpush.msra.mxu0 %v134
  %429 = vmatpush.msra.mxu0 %v126
  %430 = vmatpush.msra.mxu0 %v118
  %431 = vmatpush.msra.mxu0 %v110
  %432 = vmatpush.msra.mxu0 %v102
  %433 = vmatpush.msra.mxu0 %v94
  %434 = vmatpush.msra.mxu0 %v86
  %435 = vmatpush.msra.mxu0 %v78
  %436 = vmatpush.msra.mxu0 %v70
  %437 = vmatpush.msra.mxu0 %v62
  %438 = vmatpush.msra.mxu0 %v54
  %439 = vmatpush.msra.mxu0 %v46
  %440 = vmatpush.msra.mxu0 %v38
  %441 = vmatpush.msra.mxu0 %v30
  %442 = vmatmul.f32.gmra.mxu0 %v285
  %v443 = vpop.f32.mrf.mxu0
  %v444 = vadd.f32 %v293, %v443
  %445 = vdwg.mxu0
  %446 = vmatpush.msra.mxu0 %v278
  %447 = vmatpush.msra.mxu0 %v270
  %448 = vmatpush.msra.mxu0 %v262
  %449 = vmatpush.msra.mxu0 %v254
  %450 = vmatpush.msra.mxu0 %v246
  %451 = vmatpush.msra.mxu0 %v238
  %452 = vmatpush.msra.mxu0 %v230
  %453 = vmatpush.msra.mxu0 %v222
  %454 = vmatpush.msra.mxu0 %v214
  %455 = vmatpush.msra.mxu0 %v206
  %456 = vmatpush.msra.mxu0 %v198
  %457 = vmatpush.msra.mxu0 %v190
  %458 = vmatpush.msra.mxu0 %v182
  %459 = vmatpush.msra.mxu0 %v174
  %460 = vmatpush.msra.mxu0 %v166
  %461 = vmatpush.msra.mxu0 %v158
  %462 = vmatmul.f32.gmra.mxu0 %v286
  %v463 = vpop.f32.mrf.mxu0
  %v464 = vadd.f32 %v444, %v463
  %465 = vdwg.mxu0
  %466 = vmatpush.msra.mxu0 %v151
  %467 = vmatpush.msra.mxu0 %v143
  %468 = vmatpush.msra.mxu0 %v135
  %469 = vmatpush.msra.mxu0 %v127
  %470 = vmatpush.msra.mxu0 %v119
  %471 = vmatpush.msra.mxu0 %v111
  %472 = vmatpush.msra.mxu0 %v103
  %473 = vmatpush.msra.mxu0 %v95
  %474 = vmatpush.msra.mxu0 %v87
  %475 = vmatpush.msra.mxu0 %v79
  %476 = vmatpush.msra.mxu0 %v71
  %477 = vmatpush.msra.mxu0 %v63
  %478 = vmatpush.msra.mxu0 %v55
  %479 = vmatpush.msra.mxu0 %v47
  %480 = vmatpush.msra.mxu0 %v39
  %481 = vmatpush.msra.mxu0 %v31
  %482 = vmatmul.f32.gmra.mxu0 %v285
  %v483 = vpop.f32.mrf.mxu0
  %v484 = vadd.f32 %v294, %v483
  %485 = vdwg.mxu0
  %486 = vmatpush.msra.mxu0 %v279
  %487 = vmatpush.msra.mxu0 %v271
  %488 = vmatpush.msra.mxu0 %v263
  %489 = vmatpush.msra.mxu0 %v255
  %490 = vmatpush.msra.mxu0 %v247
  %491 = vmatpush.msra.mxu0 %v239
  %492 = vmatpush.msra.mxu0 %v231
  %493 = vmatpush.msra.mxu0 %v223
  %494 = vmatpush.msra.mxu0 %v215
  %495 = vmatpush.msra.mxu0 %v207
  %496 = vmatpush.msra.mxu0 %v199
  %497 = vmatpush.msra.mxu0 %v191
  %498 = vmatpush.msra.mxu0 %v183
  %499 = vmatpush.msra.mxu0 %v175
  %500 = vmatpush.msra.mxu0 %v167
  %501 = vmatpush.msra.mxu0 %v159
  %502 = vmatmul.f32.gmra.mxu0 %v286
  %v503 = vpop.f32.mrf.mxu0
  %v504 = vadd.f32 %v484, %v503
  %505 = vdwg.mxu0
  %506 = vmatpush.msra.mxu0 %v152
  %507 = vmatpush.msra.mxu0 %v144
  %508 = vmatpush.msra.mxu0 %v136
  %509 = vmatpush.msra.mxu0 %v128
  %510 = vmatpush.msra.mxu0 %v120
  %511 = vmatpush.msra.mxu0 %v112
  %512 = vmatpush.msra.mxu0 %v104
  %513 = vmatpush.msra.mxu0 %v96
  %514 = vmatpush.msra.mxu0 %v88
  %515 = vmatpush.msra.mxu0 %v80
  %516 = vmatpush.msra.mxu0 %v72
  %517 = vmatpush.msra.mxu0 %v64
  %518 = vmatpush.msra.mxu0 %v56
  %519 = vmatpush.msra.mxu0 %v48
  %520 = vmatpush.msra.mxu0 %v40
  %521 = vmatpush.msra.mxu0 %v32
  %522 = vmatmul.f32.gmra.mxu0 %v285
  %v523 = vpop.f32.mrf.mxu0
  %v524 = vadd.f32 %v295, %v523
  %525 = vdwg.mxu0
  %526 = vmatpush.msra.mxu0 %v280
  %527 = vmatpush.msra.mxu0 %v272
  %528 = vmatpush.msra.mxu0 %v264
  %529 = vmatpush.msra.mxu0 %v256
  %530 = vmatpush.msra.mxu0 %v248
  %531 = vmatpush.msra.mxu0 %v240
  %532 = vmatpush.msra.mxu0 %v232
  %533 = vmatpush.msra.mxu0 %v224
  %534 = vmatpush.msra.mxu0 %v216
  %535 = vmatpush.msra.mxu0 %v208
  %536 = vmatpush.msra.mxu0 %v200
  %537 = vmatpush.msra.mxu0 %v192
  %538 = vmatpush.msra.mxu0 %v184
  %539 = vmatpush.msra.mxu0 %v176
  %540 = vmatpush.msra.mxu0 %v168
  %541 = vmatpush.msra.mxu0 %v160
  %542 = vmatmul.f32.gmra.mxu0 %v286
  %v543 = vpop.f32.mrf.mxu0
  %v544 = vadd.f32 %v524, %v543
  %545 = vdwg.mxu0
  %546 = vmatpush.msra.mxu0 %v153
  %547 = vmatpush.msra.mxu0 %v145
  %548 = vmatpush.msra.mxu0 %v137
  %549 = vmatpush.msra.mxu0 %v129
  %550 = vmatpush.msra.mxu0 %v121
  %551 = vmatpush.msra.mxu0 %v113
  %552 = vmatpush.msra.mxu0 %v105
  %553 = vmatpush.msra.mxu0 %v97
  %554 = vmatpush.msra.mxu0 %v89
  %555 = vmatpush.msra.mxu0 %v81
  %556 = vmatpush.msra.mxu0 %v73
  %557 = vmatpush.msra.mxu0 %v65
  %558 = vmatpush.msra.mxu0 %v57
  %559 = vmatpush.msra.mxu0 %v49
  %560 = vmatpush.msra.mxu0 %v41
  %561 = vmatpush.msra.mxu0 %v33
  %562 = vmatmul.f32.gmra.mxu0 %v285
  %v563 = vpop.f32.mrf.mxu0
  %v564 = vadd.f32 %v296, %v563
  %565 = vdwg.mxu0
  %566 = vmatpush.msra.mxu0 %v281
  %567 = vmatpush.msra.mxu0 %v273
  %568 = vmatpush.msra.mxu0 %v265
  %569 = vmatpush.msra.mxu0 %v257
  %570 = vmatpush.msra.mxu0 %v249
  %571 = vmatpush.msra.mxu0 %v241
  %572 = vmatpush.msra.mxu0 %v233
  %573 = vmatpush.msra.mxu0 %v225
  %574 = vmatpush.msra.mxu0 %v217
  %575 = vmatpush.msra.mxu0 %v209
  %576 = vmatpush.msra.mxu0 %v201
  %577 = vmatpush.msra.mxu0 %v193
  %578 = vmatpush.msra.mxu0 %v185
  %579 = vmatpush.msra.mxu0 %v177
  %580 = vmatpush.msra.mxu0 %v169
  %581 = vmatpush.msra.mxu0 %v161
  %582 = vmatmul.f32.gmra.mxu0 %v286
  %v583 = vpop.f32.mrf.mxu0
  %v584 = vadd.f32 %v564, %v583
  %585 = vdwg.mxu0
  %586 = vmatpush.msra.mxu0 %v154
  %587 = vmatpush.msra.mxu0 %v146
  %588 = vmatpush.msra.mxu0 %v138
  %589 = vmatpush.msra.mxu0 %v130
  %590 = vmatpush.msra.mxu0 %v122
  %591 = vmatpush.msra.mxu0 %v114
  %592 = vmatpush.msra.mxu0 %v106
  %593 = vmatpush.msra.mxu0 %v98
  %594 = vmatpush.msra.mxu0 %v90
  %595 = vmatpush.msra.mxu0 %v82
  %596 = vmatpush.msra.mxu0 %v74
  %597 = vmatpush.msra.mxu0 %v66
  %598 = vmatpush.msra.mxu0 %v58
  %599 = vmatpush.msra.mxu0 %v50
  %600 = vmatpush.msra.mxu0 %v42
  %601 = vmatpush.msra.mxu0 %v34
  %602 = vmatmul.f32.gmra.mxu0 %v285
  %v603 = vpop.f32.mrf.mxu0
  %v604 = vadd.f32 %v297, %v603
  %605 = vdwg.mxu0
  %606 = vmatpush.msra.mxu0 %v282
  %607 = vmatpush.msra.mxu0 %v274
  %608 = vmatpush.msra.mxu0 %v266
  %609 = vmatpush.msra.mxu0 %v258
  %610 = vmatpush.msra.mxu0 %v250
  %611 = vmatpush.msra.mxu0 %v242
  %612 = vmatpush.msra.mxu0 %v234
  %613 = vmatpush.msra.mxu0 %v226
  %614 = vmatpush.msra.mxu0 %v218
  %615 = vmatpush.msra.mxu0 %v210
  %616 = vmatpush.msra.mxu0 %v202
  %617 = vmatpush.msra.mxu0 %v194
  %618 = vmatpush.msra.mxu0 %v186
  %619 = vmatpush.msra.mxu0 %v178
  %620 = vmatpush.msra.mxu0 %v170
  %621 = vmatpush.msra.mxu0 %v162
  %622 = vmatmul.f32.gmra.mxu0 %v286
  %v623 = vpop.f32.mrf.mxu0
  %v624 = vadd.f32 %v604, %v623
  %625 = vdwg.mxu0
  %v626 = vmax.f32 %v344, 0.0
  %v627 = vmax.f32 %v384, 0.0
  %v628 = vmax.f32 %v424, 0.0
  %v629 = vmax.f32 %v464, 0.0
  %v630 = vmax.f32 %v504, 0.0
  %v631 = vmax.f32 %v544, 0.0
  %v632 = vmax.f32 %v584, 0.0
  %v633 = vmax.f32 %v624, 0.0
  %v634 = vld [vmem:[%s3] sm:$0xff]
  %v635 = vld [vmem:[%s3 + $0x8] sm:$0xff]
  %v636 = vld [vmem:[%s3 + $0x10] sm:$0xff]
  %v637 = vld [vmem:[%s3 + $0x18] sm:$0xff]
  %v638 = vld [vmem:[%s3 + $0x20] sm:$0xff]
  %v639 = vld [vmem:[%s3 + $0x28] sm:$0xff]
  %v640 = vld [vmem:[%s3 + $0x30] sm:$0xff]
  %v641 = vld [vmem:[%s3 + $0x38] sm:$0xff]
  %v642 = vld [vmem:[%s3 + $0x40] sm:$0xff]
  %v643 = vld [vmem:[%s3 + $0x48] sm:$0xff]
  %v644 = vld [vmem:[%s3 + $0x50] sm:$0xff]
  %v645 = vld [vmem:[%s3 + $0x58] sm:$0xff]
  %v646 = vld [vmem:[%s3 + $0x60] sm:$0xff]
  %v647 = vld [vmem:[%s3 + $0x68] sm:$0xff]
  %v648 = vld [vmem:[%s3 + $0x70] sm:$0xff]
  %v649 = vld [vmem:[%s3 + $0x78] sm:$0xff]
  %v650 = vld [vmem:[%s3 + $0x80] sm:$0xff]
  %v651 = vld [vmem:[%s3 + $0x88] sm:$0xff]
  %v652 = vld [vmem:[%s3 + $0x90] sm:$0xff]
  %v653 = vld [vmem:[%s3 + $0x98] sm:$0xff]
  %v654 = vld [vmem:[%s3 + $0xa0] sm:$0xff]
  %v655 = vld [vmem:[%s3 + $0xa8] sm:$0xff]
  %v656 = vld [vmem:[%s3 + $0xb0] sm:$0xff]
  %v657 = vld [vmem:[%s3 + $0xb8] sm:$0xff]
  %v658 = vld [vmem:[%s3 + $0xc0] sm:$0xff]
  %v659 = vld [vmem:[%s3 + $0xc8] sm:$0xff]
  %v660 = vld [vmem:[%s3 + $0xd0] sm:$0xff]
  %v661 = vld [vmem:[%s3 + $0xd8] sm:$0xff]
  %v662 = vld [vmem:[%s3 + $0xe0] sm:$0xff]
  %v663 = vld [vmem:[%s3 + $0xe8] sm:$0xff]
  %v664 = vld [vmem:[%s3 + $0xf0] sm:$0xff]
  %v665 = vld [vmem:[%s3 + $0xf8] sm:$0xff]
  %v666 = vld [vmem:[%s3 + $0x100] sm:$0xff]
  %v667 = vld [vmem:[%s3 + $0x108] sm:$0xff]
  %v668 = vld [vmem:[%s3 + $0x110] sm:$0xff]
  %v669 = vld [vmem:[%s3 + $0x118] sm:$0xff]
  %v670 = vld [vmem:[%s3 + $0x120] sm:$0xff]
  %v671 = vld [vmem:[%s3 + $0x128] sm:$0xff]
  %v672 = vld [vmem:[%s3 + $0x130] sm:$0xff]
  %v673 = vld [vmem:[%s3 + $0x138] sm:$0xff]
  %v674 = vld [vmem:[%s3 + $0x140] sm:$0xff]
  %v675 = vld [vmem:[%s3 + $0x148] sm:$0xff]
  %v676 = vld [vmem:[%s3 + $0x150] sm:$0xff]
  %v677 = vld [vmem:[%s3 + $0x158] sm:$0xff]
  %v678 = vld [vmem:[%s3 + $0x160] sm:$0xff]
  %v679 = vld [vmem:[%s3 + $0x168] sm:$0xff]
  %v680 = vld [vmem:[%s3 + $0x170] sm:$0xff]
  %v681 = vld [vmem:[%s3 + $0x178] sm:$0xff]
  %v682 = vld [vmem:[%s3 + $0x180] sm:$0xff]
  %v683 = vld [vmem:[%s3 + $0x188] sm:$0xff]
  %v684 = vld [vmem:[%s3 + $0x190] sm:$0xff]
  %v685 = vld [vmem:[%s3 + $0x198] sm:$0xff]
  %v686 = vld [vmem:[%s3 + $0x1a0] sm:$0xff]
  %v687 = vld [vmem:[%s3 + $0x1a8] sm:$0xff]
  %v688 = vld [vmem:[%s3 + $0x1b0] sm:$0xff]
  %v689 = vld [vmem:[%s3 + $0x1b8] sm:$0xff]
  %v690 = vld [vmem:[%s3 + $0x1c0] sm:$0xff]
  %v691 = vld [vmem:[%s3 + $0x1c8] sm:$0xff]
  %v692 = vld [vmem:[%s3 + $0x1d0] sm:$0xff]
  %v693 = vld [vmem:[%s3 + $0x1d8] sm:$0xff]
  %v694 = vld [vmem:[%s3 + $0x1e0] sm:$0xff]
  %v695 = vld [vmem:[%s3 + $0x1e8] sm:$0xff]
  %v696 = vld [vmem:[%s3 + $0x1f0] sm:$0xff]
  %v697 = vld [vmem:[%s3 + $0x1f8] sm:$0xff]
  %v698 = vld [vmem:[%s3 + $0x200] sm:$0xff]
  %v699 = vld [vmem:[%s3 + $0x208] sm:$0xff]
  %v700 = vld [vmem:[%s3 + $0x210] sm:$0xff]
  %v701 = vld [vmem:[%s3 + $0x218] sm:$0xff]
  %v702 = vld [vmem:[%s3 + $0x220] sm:$0xff]
  %v703 = vld [vmem:[%s3 + $0x228] sm:$0xff]
  %v704 = vld [vmem:[%s3 + $0x230] sm:$0xff]
  %v705 = vld [vmem:[%s3 + $0x238] sm:$0xff]
  %v706 = vld [vmem:[%s3 + $0x240] sm:$0xff]
  %v707 = vld [vmem:[%s3 + $0x248] sm:$0xff]
  %v708 = vld [vmem:[%s3 + $0x250] sm:$0xff]
  %v709 = vld [vmem:[%s3 + $0x258] sm:$0xff]
  %v710 = vld [vmem:[%s3 + $0x260] sm:$0xff]
  %v711 = vld [vmem:[%s3 + $0x268] sm:$0xff]
  %v712 = vld [vmem:[%s3 + $0x270] sm:$0xff]
  %v713 = vld [vmem:[%s3 + $0x278] sm:$0xff]
  %v714 = vld [vmem:[%s3 + $0x280] sm:$0xff]
  %v715 = vld [vmem:[%s3 + $0x288] sm:$0xff]
  %v716 = vld [vmem:[%s3 + $0x290] sm:$0xff]
  %v717 = vld [vmem:[%s3 + $0x298] sm:$0xff]
  %v718 = vld [vmem:[%s3 + $0x2a0] sm:$0xff]
  %v719 = vld [vmem:[%s3 + $0x2a8] sm:$0xff]
  %v720 = vld [vmem:[%s3 + $0x2b0] sm:$0xff]
  %v721 = vld [vmem:[%s3 + $0x2b8] sm:$0xff]
  %v722 = vld [vmem:[%s3 + $0x2c0] sm:$0xff]
  %v723 = vld [vmem:[%s3 + $0x2c8] sm:$0xff]
  %v724 = vld [vmem:[%s3 + $0x2d0] sm:$0xff]
  %v725 = vld [vmem:[%s3 + $0x2d8] sm:$0xff]
  %v726 = vld [vmem:[%s3 + $0x2e0] sm:$0xff]
  %v727 = vld [vmem:[%s3 + $0x2e8] sm:$0xff]
  %v728 = vld [vmem:[%s3 + $0x2f0] sm:$0xff]
  %v729 = vld [vmem:[%s3 + $0x2f8] sm:$0xff]
  %v730 = vld [vmem:[%s3 + $0x300] sm:$0xff]
  %v731 = vld [vmem:[%s3 + $0x308] sm:$0xff]
  %v732 = vld [vmem:[%s3 + $0x310] sm:$0xff]
  %v733 = vld [vmem:[%s3 + $0x318] sm:$0xff]
  %v734 = vld [vmem:[%s3 + $0x320] sm:$0xff]
  %v735 = vld [vmem:[%s3 + $0x328] sm:$0xff]
  %v736 = vld [vmem:[%s3 + $0x330] sm:$0xff]
  %v737 = vld [vmem:[%s3 + $0x338] sm:$0xff]
  %v738 = vld [vmem:[%s3 + $0x340] sm:$0xff]
  %v739 = vld [vmem:[%s3 + $0x348] sm:$0xff]
  %v740 = vld [vmem:[%s3 + $0x350] sm:$0xff]
  %v741 = vld [vmem:[%s3 + $0x358] sm:$0xff]
  %v742 = vld [vmem:[%s3 + $0x360] sm:$0xff]
  %v743 = vld [vmem:[%s3 + $0x368] sm:$0xff]
  %v744 = vld [vmem:[%s3 + $0x370] sm:$0xff]
  %v745 = vld [vmem:[%s3 + $0x378] sm:$0xff]
  %v746 = vld [vmem:[%s3 + $0x380] sm:$0xff]
  %v747 = vld [vmem:[%s3 + $0x388] sm:$0xff]
  %v748 = vld [vmem:[%s3 + $0x390] sm:$0xff]
  %v749 = vld [vmem:[%s3 + $0x398] sm:$0xff]
  %v750 = vld [vmem:[%s3 + $0x3a0] sm:$0xff]
  %v751 = vld [vmem:[%s3 + $0x3a8] sm:$0xff]
  %v752 = vld [vmem:[%s3 + $0x3b0] sm:$0xff]
  %v753 = vld [vmem:[%s3 + $0x3b8] sm:$0xff]
  %v754 = vld [vmem:[%s3 + $0x3c0] sm:$0xff]
  %v755 = vld [vmem:[%s3 + $0x3c8] sm:$0xff]
  %v756 = vld [vmem:[%s3 + $0x3d0] sm:$0xff]
  %v757 = vld [vmem:[%s3 + $0x3d8] sm:$0xff]
  %v758 = vld [vmem:[%s3 + $0x3e0] sm:$0xff]
  %v759 = vld [vmem:[%s3 + $0x3e8] sm:$0xff]
  %v760 = vld [vmem:[%s3 + $0x3f0] sm:$0xff]
  %v761 = vld [vmem:[%s3 + $0x3f8] sm:$0xff]
  %v762 = vld [vmem:[%s3 + $0x400] sm:$0xff]
  %v763 = vld [vmem:[%s3 + $0x408] sm:$0xff]
  %v764 = vld [vmem:[%s3 + $0x410] sm:$0xff]
  %v765 = vld [vmem:[%s3 + $0x418] sm:$0xff]
  %v766 = vld [vmem:[%s3 + $0x420] sm:$0xff]
  %v767 = vld [vmem:[%s3 + $0x428] sm:$0xff]
  %v768 = vld [vmem:[%s3 + $0x430] sm:$0xff]
  %v769 = vld [vmem:[%s3 + $0x438] sm:$0xff]
  %v770 = vld [vmem:[%s3 + $0x440] sm:$0xff]
  %v771 = vld [vmem:[%s3 + $0x448] sm:$0xff]
  %v772 = vld [vmem:[%s3 + $0x450] sm:$0xff]
  %v773 = vld [vmem:[%s3 + $0x458] sm:$0xff]
  %v774 = vld [vmem:[%s3 + $0x460] sm:$0xff]
  %v775 = vld [vmem:[%s3 + $0x468] sm:$0xff]
  %v776 = vld [vmem:[%s3 + $0x470] sm:$0xff]
  %v777 = vld [vmem:[%s3 + $0x478] sm:$0xff]
  %v778 = vld [vmem:[%s3 + $0x480] sm:$0xff]
  %v779 = vld [vmem:[%s3 + $0x488] sm:$0xff]
  %v780 = vld [vmem:[%s3 + $0x490] sm:$0xff]
  %v781 = vld [vmem:[%s3 + $0x498] sm:$0xff]
  %v782 = vld [vmem:[%s3 + $0x4a0] sm:$0xff]
  %v783 = vld [vmem:[%s3 + $0x4a8] sm:$0xff]
  %v784 = vld [vmem:[%s3 + $0x4b0] sm:$0xff]
  %v785 = vld [vmem:[%s3 + $0x4b8] sm:$0xff]
  %v786 = vld [vmem:[%s3 + $0x4c0] sm:$0xff]
  %v787 = vld [vmem:[%s3 + $0x4c8] sm:$0xff]
  %v788 = vld [vmem:[%s3 + $0x4d0] sm:$0xff]
  %v789 = vld [vmem:[%s3 + $0x4d8] sm:$0xff]
  %v790 = vld [vmem:[%s3 + $0x4e0] sm:$0xff]
  %v791 = vld [vmem:[%s3 + $0x4e8] sm:$0xff]
  %v792 = vld [vmem:[%s3 + $0x4f0] sm:$0xff]
  %v793 = vld [vmem:[%s3 + $0x4f8] sm:$0xff]
  %v794 = vld [vmem:[%s3 + $0x500] sm:$0xff]
  %v795 = vld [vmem:[%s3 + $0x508] sm:$0xff]
  %v796 = vld [vmem:[%s3 + $0x510] sm:$0xff]
  %v797 = vld [vmem:[%s3 + $0x518] sm:$0xff]
  %v798 = vld [vmem:[%s3 + $0x520] sm:$0xff]
  %v799 = vld [vmem:[%s3 + $0x528] sm:$0xff]
  %v800 = vld [vmem:[%s3 + $0x530] sm:$0xff]
  %v801 = vld [vmem:[%s3 + $0x538] sm:$0xff]
  %v802 = vld [vmem:[%s3 + $0x540] sm:$0xff]
  %v803 = vld [vmem:[%s3 + $0x548] sm:$0xff]
  %v804 = vld [vmem:[%s3 + $0x550] sm:$0xff]
  %v805 = vld [vmem:[%s3 + $0x558] sm:$0xff]
  %v806 = vld [vmem:[%s3 + $0x560] sm:$0xff]
  %v807 = vld [vmem:[%s3 + $0x568] sm:$0xff]
  %v808 = vld [vmem:[%s3 + $0x570] sm:$0xff]
  %v809 = vld [vmem:[%s3 + $0x578] sm:$0xff]
  %v810 = vld [vmem:[%s3 + $0x580] sm:$0xff]
  %v811 = vld [vmem:[%s3 + $0x588] sm:$0xff]
  %v812 = vld [vmem:[%s3 + $0x590] sm:$0xff]
  %v813 = vld [vmem:[%s3 + $0x598] sm:$0xff]
  %v814 = vld [vmem:[%s3 + $0x5a0] sm:$0xff]
  %v815 = vld [vmem:[%s3 + $0x5a8] sm:$0xff]
  %v816 = vld [vmem:[%s3 + $0x5b0] sm:$0xff]
  %v817 = vld [vmem:[%s3 + $0x5b8] sm:$0xff]
  %v818 = vld [vmem:[%s3 + $0x5c0] sm:$0xff]
  %v819 = vld [vmem:[%s3 + $0x5c8] sm:$0xff]
  %v820 = vld [vmem:[%s3 + $0x5d0] sm:$0xff]
  %v821 = vld [vmem:[%s3 + $0x5d8] sm:$0xff]
  %v822 = vld [vmem:[%s3 + $0x5e0] sm:$0xff]
  %v823 = vld [vmem:[%s3 + $0x5e8] sm:$0xff]
  %v824 = vld [vmem:[%s3 + $0x5f0] sm:$0xff]
  %v825 = vld [vmem:[%s3 + $0x5f8] sm:$0xff]
  %v826 = vld [vmem:[%s3 + $0x600] sm:$0xff]
  %v827 = vld [vmem:[%s3 + $0x608] sm:$0xff]
  %v828 = vld [vmem:[%s3 + $0x610] sm:$0xff]
  %v829 = vld [vmem:[%s3 + $0x618] sm:$0xff]
  %v830 = vld [vmem:[%s3 + $0x620] sm:$0xff]
  %v831 = vld [vmem:[%s3 + $0x628] sm:$0xff]
  %v832 = vld [vmem:[%s3 + $0x630] sm:$0xff]
  %v833 = vld [vmem:[%s3 + $0x638] sm:$0xff]
  %v834 = vld [vmem:[%s3 + $0x640] sm:$0xff]
  %v835 = vld [vmem:[%s3 + $0x648] sm:$0xff]
  %v836 = vld [vmem:[%s3 + $0x650] sm:$0xff]
  %v837 = vld [vmem:[%s3 + $0x658] sm:$0xff]
  %v838 = vld [vmem:[%s3 + $0x660] sm:$0xff]
  %v839 = vld [vmem:[%s3 + $0x668] sm:$0xff]
  %v840 = vld [vmem:[%s3 + $0x670] sm:$0xff]
  %v841 = vld [vmem:[%s3 + $0x678] sm:$0xff]
  %v842 = vld [vmem:[%s3 + $0x680] sm:$0xff]
  %v843 = vld [vmem:[%s3 + $0x688] sm:$0xff]
  %v844 = vld [vmem:[%s3 + $0x690] sm:$0xff]
  %v845 = vld [vmem:[%s3 + $0x698] sm:$0xff]
  %v846 = vld [vmem:[%s3 + $0x6a0] sm:$0xff]
  %v847 = vld [vmem:[%s3 + $0x6a8] sm:$0xff]
  %v848 = vld [vmem:[%s3 + $0x6b0] sm:$0xff]
  %v849 = vld [vmem:[%s3 + $0x6b8] sm:$0xff]
  %v850 = vld [vmem:[%s3 + $0x6c0] sm:$0xff]
  %v851 = vld [vmem:[%s3 + $0x6c8] sm:$0xff]
  %v852 = vld [vmem:[%s3 + $0x6d0] sm:$0xff]
  %v853 = vld [vmem:[%s3 + $0x6d8] sm:$0xff]
  %v854 = vld [vmem:[%s3 + $0x6e0] sm:$0xff]
  %v855 = vld [vmem:[%s3 + $0x6e8] sm:$0xff]
  %v856 = vld [vmem:[%s3 + $0x6f0] sm:$0xff]
  %v857 = vld [vmem:[%s3 + $0x6f8] sm:$0xff]
  %v858 = vld [vmem:[%s3 + $0x700] sm:$0xff]
  %v859 = vld [vmem:[%s3 + $0x708] sm:$0xff]
  %v860 = vld [vmem:[%s3 + $0x710] sm:$0xff]
  %v861 = vld [vmem:[%s3 + $0x718] sm:$0xff]
  %v862 = vld [vmem:[%s3 + $0x720] sm:$0xff]
  %v863 = vld [vmem:[%s3 + $0x728] sm:$0xff]
  %v864 = vld [vmem:[%s3 + $0x730] sm:$0xff]
  %v865 = vld [vmem:[%s3 + $0x738] sm:$0xff]
  %v866 = vld [vmem:[%s3 + $0x740] sm:$0xff]
  %v867 = vld [vmem:[%s3 + $0x748] sm:$0xff]
  %v868 = vld [vmem:[%s3 + $0x750] sm:$0xff]
  %v869 = vld [vmem:[%s3 + $0x758] sm:$0xff]
  %v870 = vld [vmem:[%s3 + $0x760] sm:$0xff]
  %v871 = vld [vmem:[%s3 + $0x768] sm:$0xff]
  %v872 = vld [vmem:[%s3 + $0x770] sm:$0xff]
  %v873 = vld [vmem:[%s3 + $0x778] sm:$0xff]
  %v874 = vld [vmem:[%s3 + $0x780] sm:$0xff]
  %v875 = vld [vmem:[%s3 + $0x788] sm:$0xff]
  %v876 = vld [vmem:[%s3 + $0x790] sm:$0xff]
  %v877 = vld [vmem:[%s3 + $0x798] sm:$0xff]
  %v878 = vld [vmem:[%s3 + $0x7a0] sm:$0xff]
  %v879 = vld [vmem:[%s3 + $0x7a8] sm:$0xff]
  %v880 = vld [vmem:[%s3 + $0x7b0] sm:$0xff]
  %v881 = vld [vmem:[%s3 + $0x7b8] sm:$0xff]
  %v882 = vld [vmem:[%s3 + $0x7c0] sm:$0xff]
  %v883 = vld [vmem:[%s3 + $0x7c8] sm:$0xff]
  %v884 = vld [vmem:[%s3 + $0x7d0] sm:$0xff]
  %v885 = vld [vmem:[%s3 + $0x7d8] sm:$0xff]
  %v886 = vld [vmem:[%s3 + $0x7e0] sm:$0xff]
  %v887 = vld [vmem:[%s3 + $0x7e8] sm:$0xff]
  %v888 = vld [vmem:[%s3 + $0x7f0] sm:$0xff]
  %v889 = vld [vmem:[%s3 + $0x7f8] sm:$0xff]
  %v890 = vld [vmem:[%s3 + $0x800] sm:$0xff]
  %v891 = vld [vmem:[%s3 + $0x808] sm:$0xff]
  %v892 = vld [vmem:[%s3 + $0x810] sm:$0xff]
  %v893 = vld [vmem:[%s3 + $0x818] sm:$0xff]
  %v894 = vld [vmem:[%s3 + $0x820] sm:$0xff]
  %v895 = vld [vmem:[%s3 + $0x828] sm:$0xff]
  %v896 = vld [vmem:[%s3 + $0x830] sm:$0xff]
  %v897 = vld [vmem:[%s3 + $0x838] sm:$0xff]
  %v898 = vld [vmem:[%s3 + $0x840] sm:$0xff]
  %v899 = vld [vmem:[%s3 + $0x848] sm:$0xff]
  %v900 = vld [vmem:[%s3 + $0x850] sm:$0xff]
  %v901 = vld [vmem:[%s3 + $0x858] sm:$0xff]
  %v902 = vld [vmem:[%s3 + $0x860] sm:$0xff]
  %v903 = vld [vmem:[%s3 + $0x868] sm:$0xff]
  %v904 = vld [vmem:[%s3 + $0x870] sm:$0xff]
  %v905 = vld [vmem:[%s3 + $0x878] sm:$0xff]
  %v906 = vld [vmem:[%s3 + $0x880] sm:$0xff]
  %v907 = vld [vmem:[%s3 + $0x888] sm:$0xff]
  %v908 = vld [vmem:[%s3 + $0x890] sm:$0xff]
  %v909 = vld [vmem:[%s3 + $0x898] sm:$0xff]
  %v910 = vld [vmem:[%s3 + $0x8a0] sm:$0xff]
  %v911 = vld [vmem:[%s3 + $0x8a8] sm:$0xff]
  %v912 = vld [vmem:[%s3 + $0x8b0] sm:$0xff]
  %v913 = vld [vmem:[%s3 + $0x8b8] sm:$0xff]
  %v914 = vld [vmem:[%s3 + $0x8c0] sm:$0xff]
  %v915 = vld [vmem:[%s3 + $0x8c8] sm:$0xff]
  %v916 = vld [vmem:[%s3 + $0x8d0] sm:$0xff]
  %v917 = vld [vmem:[%s3 + $0x8d8] sm:$0xff]
  %v918 = vld [vmem:[%s3 + $0x8e0] sm:$0xff]
  %v919 = vld [vmem:[%s3 + $0x8e8] sm:$0xff]
  %v920 = vld [vmem:[%s3 + $0x8f0] sm:$0xff]
  %v921 = vld [vmem:[%s3 + $0x8f8] sm:$0xff]
  %v922 = vld [vmem:[%s3 + $0x900] sm:$0xff]
  %v923 = vld [vmem:[%s3 + $0x908] sm:$0xff]
  %v924 = vld [vmem:[%s3 + $0x910] sm:$0xff]
  %v925 = vld [vmem:[%s3 + $0x918] sm:$0xff]
  %v926 = vld [vmem:[%s3 + $0x920] sm:$0xff]
  %v927 = vld [vmem:[%s3 + $0x928] sm:$0xff]
  %v928 = vld [vmem:[%s3 + $0x930] sm:$0xff]
  %v929 = vld [vmem:[%s3 + $0x938] sm:$0xff]
  %v930 = vld [vmem:[%s3 + $0x940] sm:$0xff]
  %v931 = vld [vmem:[%s3 + $0x948] sm:$0xff]
  %v932 = vld [vmem:[%s3 + $0x950] sm:$0xff]
  %v933 = vld [vmem:[%s3 + $0x958] sm:$0xff]
  %v934 = vld [vmem:[%s3 + $0x960] sm:$0xff]
  %v935 = vld [vmem:[%s3 + $0x968] sm:$0xff]
  %v936 = vld [vmem:[%s3 + $0x970] sm:$0xff]
  %v937 = vld [vmem:[%s3 + $0x978] sm:$0xff]
  %v938 = vld [vmem:[%s3 + $0x980] sm:$0xff]
  %v939 = vld [vmem:[%s3 + $0x988] sm:$0xff]
  %v940 = vld [vmem:[%s3 + $0x990] sm:$0xff]
  %v941 = vld [vmem:[%s3 + $0x998] sm:$0xff]
  %v942 = vld [vmem:[%s3 + $0x9a0] sm:$0xff]
  %v943 = vld [vmem:[%s3 + $0x9a8] sm:$0xff]
  %v944 = vld [vmem:[%s3 + $0x9b0] sm:$0xff]
  %v945 = vld [vmem:[%s3 + $0x9b8] sm:$0xff]
  %v946 = vld [vmem:[%s3 + $0x9c0] sm:$0xff]
  %v947 = vld [vmem:[%s3 + $0x9c8] sm:$0xff]
  %v948 = vld [vmem:[%s3 + $0x9d0] sm:$0xff]
  %v949 = vld [vmem:[%s3 + $0x9d8] sm:$0xff]
  %v950 = vld [vmem:[%s3 + $0x9e0] sm:$0xff]
  %v951 = vld [vmem:[%s3 + $0x9e8] sm:$0xff]
  %v952 = vld [vmem:[%s3 + $0x9f0] sm:$0xff]
  %v953 = vld [vmem:[%s3 + $0x9f8] sm:$0xff]
  %v954 = vld [vmem:[%s3 + $0xa00] sm:$0xff]
  %v955 = vld [vmem:[%s3 + $0xa08] sm:$0xff]
  %v956 = vld [vmem:[%s3 + $0xa10] sm:$0xff]
  %v957 = vld [vmem:[%s3 + $0xa18] sm:$0xff]
  %v958 = vld [vmem:[%s3 + $0xa20] sm:$0xff]
  %v959 = vld [vmem:[%s3 + $0xa28] sm:$0xff]
  %v960 = vld [vmem:[%s3 + $0xa30] sm:$0xff]
  %v961 = vld [vmem:[%s3 + $0xa38] sm:$0xff]
  %v962 = vld [vmem:[%s3 + $0xa40] sm:$0xff]
  %v963 = vld [vmem:[%s3 + $0xa48] sm:$0xff]
  %v964 = vld [vmem:[%s3 + $0xa50] sm:$0xff]
  %v965 = vld [vmem:[%s3 + $0xa58] sm:$0xff]
  %v966 = vld [vmem:[%s3 + $0xa60] sm:$0xff]
  %v967 = vld [vmem:[%s3 + $0xa68] sm:$0xff]
  %v968 = vld [vmem:[%s3 + $0xa70] sm:$0xff]
  %v969 = vld [vmem:[%s3 + $0xa78] sm:$0xff]
  %v970 = vld [vmem:[%s3 + $0xa80] sm:$0xff]
  %v971 = vld [vmem:[%s3 + $0xa88] sm:$0xff]
  %v972 = vld [vmem:[%s3 + $0xa90] sm:$0xff]
  %v973 = vld [vmem:[%s3 + $0xa98] sm:$0xff]
  %v974 = vld [vmem:[%s3 + $0xaa0] sm:$0xff]
  %v975 = vld [vmem:[%s3 + $0xaa8] sm:$0xff]
  %v976 = vld [vmem:[%s3 + $0xab0] sm:$0xff]
  %v977 = vld [vmem:[%s3 + $0xab8] sm:$0xff]
  %v978 = vld [vmem:[%s3 + $0xac0] sm:$0xff]
  %v979 = vld [vmem:[%s3 + $0xac8] sm:$0xff]
  %v980 = vld [vmem:[%s3 + $0xad0] sm:$0xff]
  %v981 = vld [vmem:[%s3 + $0xad8] sm:$0xff]
  %v982 = vld [vmem:[%s3 + $0xae0] sm:$0xff]
  %v983 = vld [vmem:[%s3 + $0xae8] sm:$0xff]
  %v984 = vld [vmem:[%s3 + $0xaf0] sm:$0xff]
  %v985 = vld [vmem:[%s3 + $0xaf8] sm:$0xff]
  %v986 = vld [vmem:[%s3 + $0xb00] sm:$0xff]
  %v987 = vld [vmem:[%s3 + $0xb08] sm:$0xff]
  %v988 = vld [vmem:[%s3 + $0xb10] sm:$0xff]
  %v989 = vld [vmem:[%s3 + $0xb18] sm:$0xff]
  %v990 = vld [vmem:[%s3 + $0xb20] sm:$0xff]
  %v991 = vld [vmem:[%s3 + $0xb28] sm:$0xff]
  %v992 = vld [vmem:[%s3 + $0xb30] sm:$0xff]
  %v993 = vld [vmem:[%s3 + $0xb38] sm:$0xff]
  %v994 = vld [vmem:[%s3 + $0xb40] sm:$0xff]
  %v995 = vld [vmem:[%s3 + $0xb48] sm:$0xff]
  %v996 = vld [vmem:[%s3 + $0xb50] sm:$0xff]
  %v997 = vld [vmem:[%s3 + $0xb58] sm:$0xff]
  %v998 = vld [vmem:[%s3 + $0xb60] sm:$0xff]
  %v999 = vld [vmem:[%s3 + $0xb68] sm:$0xff]
  %v1000 = vld [vmem:[%s3 + $0xb70] sm:$0xff]
  %v1001 = vld [vmem:[%s3 + $0xb78] sm:$0xff]
  %v1002 = vld [vmem:[%s3 + $0xb80] sm:$0xff]
  %v1003 = vld [vmem:[%s3 + $0xb88] sm:$0xff]
  %v1004 = vld [vmem:[%s3 + $0xb90] sm:$0xff]
  %v1005 = vld [vmem:[%s3 + $0xb98] sm:$0xff]
  %v1006 = vld [vmem:[%s3 + $0xba0] sm:$0xff]
  %v1007 = vld [vmem:[%s3 + $0xba8] sm:$0xff]
  %v1008 = vld [vmem:[%s3 + $0xbb0] sm:$0xff]
  %v1009 = vld [vmem:[%s3 + $0xbb8] sm:$0xff]
  %v1010 = vld [vmem:[%s3 + $0xbc0] sm:$0xff]
  %v1011 = vld [vmem:[%s3 + $0xbc8] sm:$0xff]
  %v1012 = vld [vmem:[%s3 + $0xbd0] sm:$0xff]
  %v1013 = vld [vmem:[%s3 + $0xbd8] sm:$0xff]
  %v1014 = vld [vmem:[%s3 + $0xbe0] sm:$0xff]
  %v1015 = vld [vmem:[%s3 + $0xbe8] sm:$0xff]
  %v1016 = vld [vmem:[%s3 + $0xbf0] sm:$0xff]
  %v1017 = vld [vmem:[%s3 + $0xbf8] sm:$0xff]
  %v1018 = vld [vmem:[%s3 + $0xc00] sm:$0xff]
  %v1019 = vld [vmem:[%s3 + $0xc08] sm:$0xff]
  %v1020 = vld [vmem:[%s3 + $0xc10] sm:$0xff]
  %v1021 = vld [vmem:[%s3 + $0xc18] sm:$0xff]
  %v1022 = vld [vmem:[%s3 + $0xc20] sm:$0xff]
  %v1023 = vld [vmem:[%s3 + $0xc28] sm:$0xff]
  %v1024 = vld [vmem:[%s3 + $0xc30] sm:$0xff]
  %v1025 = vld [vmem:[%s3 + $0xc38] sm:$0xff]
  %v1026 = vld [vmem:[%s3 + $0xc40] sm:$0xff]
  %v1027 = vld [vmem:[%s3 + $0xc48] sm:$0xff]
  %v1028 = vld [vmem:[%s3 + $0xc50] sm:$0xff]
  %v1029 = vld [vmem:[%s3 + $0xc58] sm:$0xff]
  %v1030 = vld [vmem:[%s3 + $0xc60] sm:$0xff]
  %v1031 = vld [vmem:[%s3 + $0xc68] sm:$0xff]
  %v1032 = vld [vmem:[%s3 + $0xc70] sm:$0xff]
  %v1033 = vld [vmem:[%s3 + $0xc78] sm:$0xff]
  %v1034 = vld [vmem:[%s3 + $0xc80] sm:$0xff]
  %v1035 = vld [vmem:[%s3 + $0xc88] sm:$0xff]
  %v1036 = vld [vmem:[%s3 + $0xc90] sm:$0xff]
  %v1037 = vld [vmem:[%s3 + $0xc98] sm:$0xff]
  %v1038 = vld [vmem:[%s3 + $0xca0] sm:$0xff]
  %v1039 = vld [vmem:[%s3 + $0xca8] sm:$0xff]
  %v1040 = vld [vmem:[%s3 + $0xcb0] sm:$0xff]
  %v1041 = vld [vmem:[%s3 + $0xcb8] sm:$0xff]
  %v1042 = vld [vmem:[%s3 + $0xcc0] sm:$0xff]
  %v1043 = vld [vmem:[%s3 + $0xcc8] sm:$0xff]
  %v1044 = vld [vmem:[%s3 + $0xcd0] sm:$0xff]
  %v1045 = vld [vmem:[%s3 + $0xcd8] sm:$0xff]
  %v1046 = vld [vmem:[%s3 + $0xce0] sm:$0xff]
  %v1047 = vld [vmem:[%s3 + $0xce8] sm:$0xff]
  %v1048 = vld [vmem:[%s3 + $0xcf0] sm:$0xff]
  %v1049 = vld [vmem:[%s3 + $0xcf8] sm:$0xff]
  %v1050 = vld [vmem:[%s3 + $0xd00] sm:$0xff]
  %v1051 = vld [vmem:[%s3 + $0xd08] sm:$0xff]
  %v1052 = vld [vmem:[%s3 + $0xd10] sm:$0xff]
  %v1053 = vld [vmem:[%s3 + $0xd18] sm:$0xff]
  %v1054 = vld [vmem:[%s3 + $0xd20] sm:$0xff]
  %v1055 = vld [vmem:[%s3 + $0xd28] sm:$0xff]
  %v1056 = vld [vmem:[%s3 + $0xd30] sm:$0xff]
  %v1057 = vld [vmem:[%s3 + $0xd38] sm:$0xff]
  %v1058 = vld [vmem:[%s3 + $0xd40] sm:$0xff]
  %v1059 = vld [vmem:[%s3 + $0xd48] sm:$0xff]
  %v1060 = vld [vmem:[%s3 + $0xd50] sm:$0xff]
  %v1061 = vld [vmem:[%s3 + $0xd58] sm:$0xff]
  %v1062 = vld [vmem:[%s3 + $0xd60] sm:$0xff]
  %v1063 = vld [vmem:[%s3 + $0xd68] sm:$0xff]
  %v1064 = vld [vmem:[%s3 + $0xd70] sm:$0xff]
  %v1065 = vld [vmem:[%s3 + $0xd78] sm:$0xff]
  %v1066 = vld [vmem:[%s3 + $0xd80] sm:$0xff]
  %v1067 = vld [vmem:[%s3 + $0xd88] sm:$0xff]
  %v1068 = vld [vmem:[%s3 + $0xd90] sm:$0xff]
  %v1069 = vld [vmem:[%s3 + $0xd98] sm:$0xff]
  %v1070 = vld [vmem:[%s3 + $0xda0] sm:$0xff]
  %v1071 = vld [vmem:[%s3 + $0xda8] sm:$0xff]
  %v1072 = vld [vmem:[%s3 + $0xdb0] sm:$0xff]
  %v1073 = vld [vmem:[%s3 + $0xdb8] sm:$0xff]
  %v1074 = vld [vmem:[%s3 + $0xdc0] sm:$0xff]
  %v1075 = vld [vmem:[%s3 + $0xdc8] sm:$0xff]
  %v1076 = vld [vmem:[%s3 + $0xdd0] sm:$0xff]
  %v1077 = vld [vmem:[%s3 + $0xdd8] sm:$0xff]
  %v1078 = vld [vmem:[%s3 + $0xde0] sm:$0xff]
  %v1079 = vld [vmem:[%s3 + $0xde8] sm:$0xff]
  %v1080 = vld [vmem:[%s3 + $0xdf0] sm:$0xff]
  %v1081 = vld [vmem:[%s3 + $0xdf8] sm:$0xff]
  %v1082 = vld [vmem:[%s3 + $0xe00] sm:$0xff]
  %v1083 = vld [vmem:[%s3 + $0xe08] sm:$0xff]
  %v1084 = vld [vmem:[%s3 + $0xe10] sm:$0xff]
  %v1085 = vld [vmem:[%s3 + $0xe18] sm:$0xff]
  %v1086 = vld [vmem:[%s3 + $0xe20] sm:$0xff]
  %v1087 = vld [vmem:[%s3 + $0xe28] sm:$0xff]
  %v1088 = vld [vmem:[%s3 + $0xe30] sm:$0xff]
  %v1089 = vld [vmem:[%s3 + $0xe38] sm:$0xff]
  %v1090 = vld [vmem:[%s3 + $0xe40] sm:$0xff]
  %v1091 = vld [vmem:[%s3 + $0xe48] sm:$0xff]
  %v1092 = vld [vmem:[%s3 + $0xe50] sm:$0xff]
  %v1093 = vld [vmem:[%s3 + $0xe58] sm:$0xff]
  %v1094 = vld [vmem:[%s3 + $0xe60] sm:$0xff]
  %v1095 = vld [vmem:[%s3 + $0xe68] sm:$0xff]
  %v1096 = vld [vmem:[%s3 + $0xe70] sm:$0xff]
  %v1097 = vld [vmem:[%s3 + $0xe78] sm:$0xff]
  %v1098 = vld [vmem:[%s3 + $0xe80] sm:$0xff]
  %v1099 = vld [vmem:[%s3 + $0xe88] sm:$0xff]
  %v1100 = vld [vmem:[%s3 + $0xe90] sm:$0xff]
  %v1101 = vld [vmem:[%s3 + $0xe98] sm:$0xff]
  %v1102 = vld [vmem:[%s3 + $0xea0] sm:$0xff]
  %v1103 = vld [vmem:[%s3 + $0xea8] sm:$0xff]
  %v1104 = vld [vmem:[%s3 + $0xeb0] sm:$0xff]
  %v1105 = vld [vmem:[%s3 + $0xeb8] sm:$0xff]
  %v1106 = vld [vmem:[%s3 + $0xec0] sm:$0xff]
  %v1107 = vld [vmem:[%s3 + $0xec8] sm:$0xff]
  %v1108 = vld [vmem:[%s3 + $0xed0] sm:$0xff]
  %v1109 = vld [vmem:[%s3 + $0xed8] sm:$0xff]
  %v1110 = vld [vmem:[%s3 + $0xee0] sm:$0xff]
  %v1111 = vld [vmem:[%s3 + $0xee8] sm:$0xff]
  %v1112 = vld [vmem:[%s3 + $0xef0] sm:$0xff]
  %v1113 = vld [vmem:[%s3 + $0xef8] sm:$0xff]
  %v1114 = vld [vmem:[%s3 + $0xf00] sm:$0xff]
  %v1115 = vld [vmem:[%s3 + $0xf08] sm:$0xff]
  %v1116 = vld [vmem:[%s3 + $0xf10] sm:$0xff]
  %v1117 = vld [vmem:[%s3 + $0xf18] sm:$0xff]
  %v1118 = vld [vmem:[%s3 + $0xf20] sm:$0xff]
  %v1119 = vld [vmem:[%s3 + $0xf28] sm:$0xff]
  %v1120 = vld [vmem:[%s3 + $0xf30] sm:$0xff]
  %v1121 = vld [vmem:[%s3 + $0xf38] sm:$0xff]
  %v1122 = vld [vmem:[%s3 + $0xf40] sm:$0xff]
  %v1123 = vld [vmem:[%s3 + $0xf48] sm:$0xff]
  %v1124 = vld [vmem:[%s3 + $0xf50] sm:$0xff]
  %v1125 = vld [vmem:[%s3 + $0xf58] sm:$0xff]
  %v1126 = vld [vmem:[%s3 + $0xf60] sm:$0xff]
  %v1127 = vld [vmem:[%s3 + $0xf68] sm:$0xff]
  %v1128 = vld [vmem:[%s3 + $0xf70] sm:$0xff]
  %v1129 = vld [vmem:[%s3 + $0xf78] sm:$0xff]
  %v1130 = vld [vmem:[%s3 + $0xf80] sm:$0xff]
  %v1131 = vld [vmem:[%s3 + $0xf88] sm:$0xff]
  %v1132 = vld [vmem:[%s3 + $0xf90] sm:$0xff]
  %v1133 = vld [vmem:[%s3 + $0xf98] sm:$0xff]
  %v1134 = vld [vmem:[%s3 + $0xfa0] sm:$0xff]
  %v1135 = vld [vmem:[%s3 + $0xfa8] sm:$0xff]
  %v1136 = vld [vmem:[%s3 + $0xfb0] sm:$0xff]
  %v1137 = vld [vmem:[%s3 + $0xfb8] sm:$0xff]
  %v1138 = vld [vmem:[%s3 + $0xfc0] sm:$0xff]
  %v1139 = vld [vmem:[%s3 + $0xfc8] sm:$0xff]
  %v1140 = vld [vmem:[%s3 + $0xfd0] sm:$0xff]
  %v1141 = vld [vmem:[%s3 + $0xfd8] sm:$0xff]
  %v1142 = vld [vmem:[%s3 + $0xfe0] sm:$0xff]
  %v1143 = vld [vmem:[%s3 + $0xfe8] sm:$0xff]
  %v1144 = vld [vmem:[%s3 + $0xff0] sm:$0xff]
  %v1145 = vld [vmem:[%s3 + $0xff8] sm:$0xff]
  %v1146 = vld [vmem:[%s3 + $0x1000] sm:$0xff]
  %v1147 = vld [vmem:[%s3 + $0x1008] sm:$0xff]
  %v1148 = vld [vmem:[%s3 + $0x1010] sm:$0xff]
  %v1149 = vld [vmem:[%s3 + $0x1018] sm:$0xff]
  %v1150 = vld [vmem:[%s3 + $0x1020] sm:$0xff]
  %v1151 = vld [vmem:[%s3 + $0x1028] sm:$0xff]
  %v1152 = vld [vmem:[%s3 + $0x1030] sm:$0xff]
  %v1153 = vld [vmem:[%s3 + $0x1038] sm:$0xff]
  %v1154 = vld [vmem:[%s3 + $0x1040] sm:$0xff]
  %v1155 = vld [vmem:[%s3 + $0x1048] sm:$0xff]
  %v1156 = vld [vmem:[%s3 + $0x1050] sm:$0xff]
  %v1157 = vld [vmem:[%s3 + $0x1058] sm:$0xff]
  %v1158 = vld [vmem:[%s3 + $0x1060] sm:$0xff]
  %v1159 = vld [vmem:[%s3 + $0x1068] sm:$0xff]
  %v1160 = vld [vmem:[%s3 + $0x1070] sm:$0xff]
  %v1161 = vld [vmem:[%s3 + $0x1078] sm:$0xff]
  %v1162 = vld [vmem:[%s3 + $0x1080] sm:$0xff]
  %v1163 = vld [vmem:[%s3 + $0x1088] sm:$0xff]
  %v1164 = vld [vmem:[%s3 + $0x1090] sm:$0xff]
  %v1165 = vld [vmem:[%s3 + $0x1098] sm:$0xff]
  %v1166 = vld [vmem:[%s3 + $0x10a0] sm:$0xff]
  %v1167 = vld [vmem:[%s3 + $0x10a8] sm:$0xff]
  %v1168 = vld [vmem:[%s3 + $0x10b0] sm:$0xff]
  %v1169 = vld [vmem:[%s3 + $0x10b8] sm:$0xff]
  %v1170 = vld [vmem:[%s3 + $0x10c0] sm:$0xff]
  %v1171 = vld [vmem:[%s3 + $0x10c8] sm:$0xff]
  %v1172 = vld [vmem:[%s3 + $0x10d0] sm:$0xff]
  %v1173 = vld [vmem:[%s3 + $0x10d8] sm:$0xff]
  %v1174 = vld [vmem:[%s3 + $0x10e0] sm:$0xff]
  %v1175 = vld [vmem:[%s3 + $0x10e8] sm:$0xff]
  %v1176 = vld [vmem:[%s3 + $0x10f0] sm:$0xff]
  %v1177 = vld [vmem:[%s3 + $0x10f8] sm:$0xff]
  %v1178 = vld [vmem:[%s3 + $0x1100] sm:$0xff]
  %v1179 = vld [vmem:[%s3 + $0x1108] sm:$0xff]
  %v1180 = vld [vmem:[%s3 + $0x1110] sm:$0xff]
  %v1181 = vld [vmem:[%s3 + $0x1118] sm:$0xff]
  %v1182 = vld [vmem:[%s3 + $0x1120] sm:$0xff]
  %v1183 = vld [vmem:[%s3 + $0x1128] sm:$0xff]
  %v1184 = vld [vmem:[%s3 + $0x1130] sm:$0xff]
  %v1185 = vld [vmem:[%s3 + $0x1138] sm:$0xff]
  %v1186 = vld [vmem:[%s3 + $0x1140] sm:$0xff]
  %v1187 = vld [vmem:[%s3 + $0x1148] sm:$0xff]
  %v1188 = vld [vmem:[%s3 + $0x1150] sm:$0xff]
  %v1189 = vld [vmem:[%s3 + $0x1158] sm:$0xff]
  %v1190 = vld [vmem:[%s3 + $0x1160] sm:$0xff]
  %v1191 = vld [vmem:[%s3 + $0x1168] sm:$0xff]
  %v1192 = vld [vmem:[%s3 + $0x1170] sm:$0xff]
  %v1193 = vld [vmem:[%s3 + $0x1178] sm:$0xff]
  %v1194 = vld [vmem:[%s3 + $0x1180] sm:$0xff]
  %v1195 = vld [vmem:[%s3 + $0x1188] sm:$0xff]
  %v1196 = vld [vmem:[%s3 + $0x1190] sm:$0xff]
  %v1197 = vld [vmem:[%s3 + $0x1198] sm:$0xff]
  %v1198 = vld [vmem:[%s3 + $0x11a0] sm:$0xff]
  %v1199 = vld [vmem:[%s3 + $0x11a8] sm:$0xff]
  %v1200 = vld [vmem:[%s3 + $0x11b0] sm:$0xff]
  %v1201 = vld [vmem:[%s3 + $0x11b8] sm:$0xff]
  %v1202 = vld [vmem:[%s3 + $0x11c0] sm:$0xff]
  %v1203 = vld [vmem:[%s3 + $0x11c8] sm:$0xff]
  %v1204 = vld [vmem:[%s3 + $0x11d0] sm:$0xff]
  %v1205 = vld [vmem:[%s3 + $0x11d8] sm:$0xff]
  %v1206 = vld [vmem:[%s3 + $0x11e0] sm:$0xff]
  %v1207 = vld [vmem:[%s3 + $0x11e8] sm:$0xff]
  %v1208 = vld [vmem:[%s3 + $0x11f0] sm:$0xff]
  %v1209 = vld [vmem:[%s3 + $0x11f8] sm:$0xff]
  %v1210 = vld [vmem:[%s3 + $0x1200] sm:$0xff]
  %v1211 = vld [vmem:[%s3 + $0x1208] sm:$0xff]
  %v1212 = vld [vmem:[%s3 + $0x1210] sm:$0xff]
  %v1213 = vld [vmem:[%s3 + $0x1218] sm:$0xff]
  %v1214 = vld [vmem:[%s3 + $0x1220] sm:$0xff]
  %v1215 = vld [vmem:[%s3 + $0x1228] sm:$0xff]
  %v1216 = vld [vmem:[%s3 + $0x1230] sm:$0xff]
  %v1217 = vld [vmem:[%s3 + $0x1238] sm:$0xff]
  %v1218 = vld [vmem:[%s3 + $0x1240] sm:$0xff]
  %v1219 = vld [vmem:[%s3 + $0x1248] sm:$0xff]
  %v1220 = vld [vmem:[%s3 + $0x1250] sm:$0xff]
  %v1221 = vld [vmem:[%s3 + $0x1258] sm:$0xff]
  %v1222 = vld [vmem:[%s3 + $0x1260] sm:$0xff]
  %v1223 = vld [vmem:[%s3 + $0x1268] sm:$0xff]
  %v1224 = vld [vmem:[%s3 + $0x1270] sm:$0xff]
  %v1225 = vld [vmem:[%s3 + $0x1278] sm:$0xff]
  %v1226 = vld [vmem:[%s3 + $0x1280] sm:$0xff]
  %v1227 = vld [vmem:[%s3 + $0x1288] sm:$0xff]
  %v1228 = vld [vmem:[%s3 + $0x1290] sm:$0xff]
  %v1229 = vld [vmem:[%s3 + $0x1298] sm:$0xff]
  %v1230 = vld [vmem:[%s3 + $0x12a0] sm:$0xff]
  %v1231 = vld [vmem:[%s3 + $0x12a8] sm:$0xff]
  %v1232 = vld [vmem:[%s3 + $0x12b0] sm:$0xff]
  %v1233 = vld [vmem:[%s3 + $0x12b8] sm:$0xff]
  %v1234 = vld [vmem:[%s3 + $0x12c0] sm:$0xff]
  %v1235 = vld [vmem:[%s3 + $0x12c8] sm:$0xff]
  %v1236 = vld [vmem:[%s3 + $0x12d0] sm:$0xff]
  %v1237 = vld [vmem:[%s3 + $0x12d8] sm:$0xff]
  %v1238 = vld [vmem:[%s3 + $0x12e0] sm:$0xff]
  %v1239 = vld [vmem:[%s3 + $0x12e8] sm:$0xff]
  %v1240 = vld [vmem:[%s3 + $0x12f0] sm:$0xff]
  %v1241 = vld [vmem:[%s3 + $0x12f8] sm:$0xff]
  %v1242 = vld [vmem:[%s3 + $0x1300] sm:$0xff]
  %v1243 = vld [vmem:[%s3 + $0x1308] sm:$0xff]
  %v1244 = vld [vmem:[%s3 + $0x1310] sm:$0xff]
  %v1245 = vld [vmem:[%s3 + $0x1318] sm:$0xff]
  %v1246 = vld [vmem:[%s3 + $0x1320] sm:$0xff]
  %v1247 = vld [vmem:[%s3 + $0x1328] sm:$0xff]
  %v1248 = vld [vmem:[%s3 + $0x1330] sm:$0xff]
  %v1249 = vld [vmem:[%s3 + $0x1338] sm:$0xff]
  %v1250 = vld [vmem:[%s3 + $0x1340] sm:$0xff]
  %v1251 = vld [vmem:[%s3 + $0x1348] sm:$0xff]
  %v1252 = vld [vmem:[%s3 + $0x1350] sm:$0xff]
  %v1253 = vld [vmem:[%s3 + $0x1358] sm:$0xff]
  %v1254 = vld [vmem:[%s3 + $0x1360] sm:$0xff]
  %v1255 = vld [vmem:[%s3 + $0x1368] sm:$0xff]
  %v1256 = vld [vmem:[%s3 + $0x1370] sm:$0xff]
  %v1257 = vld [vmem:[%s3 + $0x1378] sm:$0xff]
  %v1258 = vld [vmem:[%s3 + $0x1380] sm:$0xff]
  %v1259 = vld [vmem:[%s3 + $0x1388] sm:$0xff]
  %v1260 = vld [vmem:[%s3 + $0x1390] sm:$0xff]
  %v1261 = vld [vmem:[%s3 + $0x1398] sm:$0xff]
  %v1262 = vld [vmem:[%s3 + $0x13a0] sm:$0xff]
  %v1263 = vld [vmem:[%s3 + $0x13a8] sm:$0xff]
  %v1264 = vld [vmem:[%s3 + $0x13b0] sm:$0xff]
  %v1265 = vld [vmem:[%s3 + $0x13b8] sm:$0xff]
  %v1266 = vld [vmem:[%s3 + $0x13c0] sm:$0xff]
  %v1267 = vld [vmem:[%s3 + $0x13c8] sm:$0xff]
  %v1268 = vld [vmem:[%s3 + $0x13d0] sm:$0xff]
  %v1269 = vld [vmem:[%s3 + $0x13d8] sm:$0xff]
  %v1270 = vld [vmem:[%s3 + $0x13e0] sm:$0xff]
  %v1271 = vld [vmem:[%s3 + $0x13e8] sm:$0xff]
  %v1272 = vld [vmem:[%s3 + $0x13f0] sm:$0xff]
  %v1273 = vld [vmem:[%s3 + $0x13f8] sm:$0xff]
  %v1274 = vld [vmem:[%s3 + $0x1400] sm:$0xff]
  %v1275 = vld [vmem:[%s3 + $0x1408] sm:$0xff]
  %v1276 = vld [vmem:[%s3 + $0x1410] sm:$0xff]
  %v1277 = vld [vmem:[%s3 + $0x1418] sm:$0xff]
  %v1278 = vld [vmem:[%s3 + $0x1420] sm:$0xff]
  %v1279 = vld [vmem:[%s3 + $0x1428] sm:$0xff]
  %v1280 = vld [vmem:[%s3 + $0x1430] sm:$0xff]
  %v1281 = vld [vmem:[%s3 + $0x1438] sm:$0xff]
  %v1282 = vld [vmem:[%s3 + $0x1440] sm:$0xff]
  %v1283 = vld [vmem:[%s3 + $0x1448] sm:$0xff]
  %v1284 = vld [vmem:[%s3 + $0x1450] sm:$0xff]
  %v1285 = vld [vmem:[%s3 + $0x1458] sm:$0xff]
  %v1286 = vld [vmem:[%s3 + $0x1460] sm:$0xff]
  %v1287 = vld [vmem:[%s3 + $0x1468] sm:$0xff]
  %v1288 = vld [vmem:[%s3 + $0x1470] sm:$0xff]
  %v1289 = vld [vmem:[%s3 + $0x1478] sm:$0xff]
  %v1290 = vld [vmem:[%s3 + $0x1480] sm:$0xff]
  %v1291 = vld [vmem:[%s3 + $0x1488] sm:$0xff]
  %v1292 = vld [vmem:[%s3 + $0x1490] sm:$0xff]
  %v1293 = vld [vmem:[%s3 + $0x1498] sm:$0xff]
  %v1294 = vld [vmem:[%s3 + $0x14a0] sm:$0xff]
  %v1295 = vld [vmem:[%s3 + $0x14a8] sm:$0xff]
  %v1296 = vld [vmem:[%s3 + $0x14b0] sm:$0xff]
  %v1297 = vld [vmem:[%s3 + $0x14b8] sm:$0xff]
  %v1298 = vld [vmem:[%s3 + $0x14c0] sm:$0xff]
  %v1299 = vld [vmem:[%s3 + $0x14c8] sm:$0xff]
  %v1300 = vld [vmem:[%s3 + $0x14d0] sm:$0xff]
  %v1301 = vld [vmem:[%s3 + $0x14d8] sm:$0xff]
  %v1302 = vld [vmem:[%s3 + $0x14e0] sm:$0xff]
  %v1303 = vld [vmem:[%s3 + $0x14e8] sm:$0xff]
  %v1304 = vld [vmem:[%s3 + $0x14f0] sm:$0xff]
  %v1305 = vld [vmem:[%s3 + $0x14f8] sm:$0xff]
  %v1306 = vld [vmem:[%s3 + $0x1500] sm:$0xff]
  %v1307 = vld [vmem:[%s3 + $0x1508] sm:$0xff]
  %v1308 = vld [vmem:[%s3 + $0x1510] sm:$0xff]
  %v1309 = vld [vmem:[%s3 + $0x1518] sm:$0xff]
  %v1310 = vld [vmem:[%s3 + $0x1520] sm:$0xff]
  %v1311 = vld [vmem:[%s3 + $0x1528] sm:$0xff]
  %v1312 = vld [vmem:[%s3 + $0x1530] sm:$0xff]
  %v1313 = vld [vmem:[%s3 + $0x1538] sm:$0xff]
  %v1314 = vld [vmem:[%s3 + $0x1540] sm:$0xff]
  %v1315 = vld [vmem:[%s3 + $0x1548] sm:$0xff]
  %v1316 = vld [vmem:[%s3 + $0x1550] sm:$0xff]
  %v1317 = vld [vmem:[%s3 + $0x1558] sm:$0xff]
  %v1318 = vld [vmem:[%s3 + $0x1560] sm:$0xff]
  %v1319 = vld [vmem:[%s3 + $0x1568] sm:$0xff]
  %v1320 = vld [vmem:[%s3 + $0x1570] sm:$0xff]
  %v1321 = vld [vmem:[%s3 + $0x1578] sm:$0xff]
  %v1322 = vld [vmem:[%s3 + $0x1580] sm:$0xff]
  %v1323 = vld [vmem:[%s3 + $0x1588] sm:$0xff]
  %v1324 = vld [vmem:[%s3 + $0x1590] sm:$0xff]
  %v1325 = vld [vmem:[%s3 + $0x1598] sm:$0xff]
  %v1326 = vld [vmem:[%s3 + $0x15a0] sm:$0xff]
  %v1327 = vld [vmem:[%s3 + $0x15a8] sm:$0xff]
  %v1328 = vld [vmem:[%s3 + $0x15b0] sm:$0xff]
  %v1329 = vld [vmem:[%s3 + $0x15b8] sm:$0xff]
  %v1330 = vld [vmem:[%s3 + $0x15c0] sm:$0xff]
  %v1331 = vld [vmem:[%s3 + $0x15c8] sm:$0xff]
  %v1332 = vld [vmem:[%s3 + $0x15d0] sm:$0xff]
  %v1333 = vld [vmem:[%s3 + $0x15d8] sm:$0xff]
  %v1334 = vld [vmem:[%s3 + $0x15e0] sm:$0xff]
  %v1335 = vld [vmem:[%s3 + $0x15e8] sm:$0xff]
  %v1336 = vld [vmem:[%s3 + $0x15f0] sm:$0xff]
  %v1337 = vld [vmem:[%s3 + $0x15f8] sm:$0xff]
  %v1338 = vld [vmem:[%s3 + $0x1600] sm:$0xff]
  %v1339 = vld [vmem:[%s3 + $0x1608] sm:$0xff]
  %v1340 = vld [vmem:[%s3 + $0x1610] sm:$0xff]
  %v1341 = vld [vmem:[%s3 + $0x1618] sm:$0xff]
  %v1342 = vld [vmem:[%s3 + $0x1620] sm:$0xff]
  %v1343 = vld [vmem:[%s3 + $0x1628] sm:$0xff]
  %v1344 = vld [vmem:[%s3 + $0x1630] sm:$0xff]
  %v1345 = vld [vmem:[%s3 + $0x1638] sm:$0xff]
  %v1346 = vld [vmem:[%s3 + $0x1640] sm:$0xff]
  %v1347 = vld [vmem:[%s3 + $0x1648] sm:$0xff]
  %v1348 = vld [vmem:[%s3 + $0x1650] sm:$0xff]
  %v1349 = vld [vmem:[%s3 + $0x1658] sm:$0xff]
  %v1350 = vld [vmem:[%s3 + $0x1660] sm:$0xff]
  %v1351 = vld [vmem:[%s3 + $0x1668] sm:$0xff]
  %v1352 = vld [vmem:[%s3 + $0x1670] sm:$0xff]
  %v1353 = vld [vmem:[%s3 + $0x1678] sm:$0xff]
  %v1354 = vld [vmem:[%s3 + $0x1680] sm:$0xff]
  %v1355 = vld [vmem:[%s3 + $0x1688] sm:$0xff]
  %v1356 = vld [vmem:[%s3 + $0x1690] sm:$0xff]
  %v1357 = vld [vmem:[%s3 + $0x1698] sm:$0xff]
  %v1358 = vld [vmem:[%s3 + $0x16a0] sm:$0xff]
  %v1359 = vld [vmem:[%s3 + $0x16a8] sm:$0xff]
  %v1360 = vld [vmem:[%s3 + $0x16b0] sm:$0xff]
  %v1361 = vld [vmem:[%s3 + $0x16b8] sm:$0xff]
  %v1362 = vld [vmem:[%s3 + $0x16c0] sm:$0xff]
  %v1363 = vld [vmem:[%s3 + $0x16c8] sm:$0xff]
  %v1364 = vld [vmem:[%s3 + $0x16d0] sm:$0xff]
  %v1365 = vld [vmem:[%s3 + $0x16d8] sm:$0xff]
  %v1366 = vld [vmem:[%s3 + $0x16e0] sm:$0xff]
  %v1367 = vld [vmem:[%s3 + $0x16e8] sm:$0xff]
  %v1368 = vld [vmem:[%s3 + $0x16f0] sm:$0xff]
  %v1369 = vld [vmem:[%s3 + $0x16f8] sm:$0xff]
  %v1370 = vld [vmem:[%s3 + $0x1700] sm:$0xff]
  %v1371 = vld [vmem:[%s3 + $0x1708] sm:$0xff]
  %v1372 = vld [vmem:[%s3 + $0x1710] sm:$0xff]
  %v1373 = vld [vmem:[%s3 + $0x1718] sm:$0xff]
  %v1374 = vld [vmem:[%s3 + $0x1720] sm:$0xff]
  %v1375 = vld [vmem:[%s3 + $0x1728] sm:$0xff]
  %v1376 = vld [vmem:[%s3 + $0x1730] sm:$0xff]
  %v1377 = vld [vmem:[%s3 + $0x1738] sm:$0xff]
  %v1378 = vld [vmem:[%s3 + $0x1740] sm:$0xff]
  %v1379 = vld [vmem:[%s3 + $0x1748] sm:$0xff]
  %v1380 = vld [vmem:[%s3 + $0x1750] sm:$0xff]
  %v1381 = vld [vmem:[%s3 + $0x1758] sm:$0xff]
  %v1382 = vld [vmem:[%s3 + $0x1760] sm:$0xff]
  %v1383 = vld [vmem:[%s3 + $0x1768] sm:$0xff]
  %v1384 = vld [vmem:[%s3 + $0x1770] sm:$0xff]
  %v1385 = vld [vmem:[%s3 + $0x1778] sm:$0xff]
  %v1386 = vld [vmem:[%s3 + $0x1780] sm:$0xff]
  %v1387 = vld [vmem:[%s3 + $0x1788] sm:$0xff]
  %v1388 = vld [vmem:[%s3 + $0x1790] sm:$0xff]
  %v1389 = vld [vmem:[%s3 + $0x1798] sm:$0xff]
  %v1390 = vld [vmem:[%s3 + $0x17a0] sm:$0xff]
  %v1391 = vld [vmem:[%s3 + $0x17a8] sm:$0xff]
  %v1392 = vld [vmem:[%s3 + $0x17b0] sm:$0xff]
  %v1393 = vld [vmem:[%s3 + $0x17b8] sm:$0xff]
  %v1394 = vld [vmem:[%s3 + $0x17c0] sm:$0xff]
  %v1395 = vld [vmem:[%s3 + $0x17c8] sm:$0xff]
  %v1396 = vld [vmem:[%s3 + $0x17d0] sm:$0xff]
  %v1397 = vld [vmem:[%s3 + $0x17d8] sm:$0xff]
  %v1398 = vld [vmem:[%s3 + $0x17e0] sm:$0xff]
  %v1399 = vld [vmem:[%s3 + $0x17e8] sm:$0xff]
  %v1400 = vld [vmem:[%s3 + $0x17f0] sm:$0xff]
  %v1401 = vld [vmem:[%s3 + $0x17f8] sm:$0xff]
  %v1402 = vld [vmem:[%s3 + $0x1800] sm:$0xff]
  %v1403 = vld [vmem:[%s3 + $0x1808] sm:$0xff]
  %v1404 = vld [vmem:[%s3 + $0x1810] sm:$0xff]
  %v1405 = vld [vmem:[%s3 + $0x1818] sm:$0xff]
  %v1406 = vld [vmem:[%s3 + $0x1820] sm:$0xff]
  %v1407 = vld [vmem:[%s3 + $0x1828] sm:$0xff]
  %v1408 = vld [vmem:[%s3 + $0x1830] sm:$0xff]
  %v1409 = vld [vmem:[%s3 + $0x1838] sm:$0xff]
  %v1410 = vld [vmem:[%s3 + $0x1840] sm:$0xff]
  %v1411 = vld [vmem:[%s3 + $0x1848] sm:$0xff]
  %v1412 = vld [vmem:[%s3 + $0x1850] sm:$0xff]
  %v1413 = vld [vmem:[%s3 + $0x1858] sm:$0xff]
  %v1414 = vld [vmem:[%s3 + $0x1860] sm:$0xff]
  %v1415 = vld [vmem:[%s3 + $0x1868] sm:$0xff]
  %v1416 = vld [vmem:[%s3 + $0x1870] sm:$0xff]
  %v1417 = vld [vmem:[%s3 + $0x1878] sm:$0xff]
  %v1418 = vld [vmem:[%s3 + $0x1880] sm:$0xff]
  %v1419 = vld [vmem:[%s3 + $0x1888] sm:$0xff]
  %v1420 = vld [vmem:[%s3 + $0x1890] sm:$0xff]
  %v1421 = vld [vmem:[%s3 + $0x1898] sm:$0xff]
  %v1422 = vld [vmem:[%s3 + $0x18a0] sm:$0xff]
  %v1423 = vld [vmem:[%s3 + $0x18a8] sm:$0xff]
  %v1424 = vld [vmem:[%s3 + $0x18b0] sm:$0xff]
  %v1425 = vld [vmem:[%s3 + $0x18b8] sm:$0xff]
  %v1426 = vld [vmem:[%s3 + $0x18c0] sm:$0xff]
  %v1427 = vld [vmem:[%s3 + $0x18c8] sm:$0xff]
  %v1428 = vld [vmem:[%s3 + $0x18d0] sm:$0xff]
  %v1429 = vld [vmem:[%s3 + $0x18d8] sm:$0xff]
  %v1430 = vld [vmem:[%s3 + $0x18e0] sm:$0xff]
  %v1431 = vld [vmem:[%s3 + $0x18e8] sm:$0xff]
  %v1432 = vld [vmem:[%s3 + $0x18f0] sm:$0xff]
  %v1433 = vld [vmem:[%s3 + $0x18f8] sm:$0xff]
  %v1434 = vld [vmem:[%s3 + $0x1900] sm:$0xff]
  %v1435 = vld [vmem:[%s3 + $0x1908] sm:$0xff]
  %v1436 = vld [vmem:[%s3 + $0x1910] sm:$0xff]
  %v1437 = vld [vmem:[%s3 + $0x1918] sm:$0xff]
  %v1438 = vld [vmem:[%s3 + $0x1920] sm:$0xff]
  %v1439 = vld [vmem:[%s3 + $0x1928] sm:$0xff]
  %v1440 = vld [vmem:[%s3 + $0x1930] sm:$0xff]
  %v1441 = vld [vmem:[%s3 + $0x1938] sm:$0xff]
  %v1442 = vld [vmem:[%s3 + $0x1940] sm:$0xff]
  %v1443 = vld [vmem:[%s3 + $0x1948] sm:$0xff]
  %v1444 = vld [vmem:[%s3 + $0x1950] sm:$0xff]
  %v1445 = vld [vmem:[%s3 + $0x1958] sm:$0xff]
  %v1446 = vld [vmem:[%s3 + $0x1960] sm:$0xff]
  %v1447 = vld [vmem:[%s3 + $0x1968] sm:$0xff]
  %v1448 = vld [vmem:[%s3 + $0x1970] sm:$0xff]
  %v1449 = vld [vmem:[%s3 + $0x1978] sm:$0xff]
  %v1450 = vld [vmem:[%s3 + $0x1980] sm:$0xff]
  %v1451 = vld [vmem:[%s3 + $0x1988] sm:$0xff]
  %v1452 = vld [vmem:[%s3 + $0x1990] sm:$0xff]
  %v1453 = vld [vmem:[%s3 + $0x1998] sm:$0xff]
  %v1454 = vld [vmem:[%s3 + $0x19a0] sm:$0xff]
  %v1455 = vld [vmem:[%s3 + $0x19a8] sm:$0xff]
  %v1456 = vld [vmem:[%s3 + $0x19b0] sm:$0xff]
  %v1457 = vld [vmem:[%s3 + $0x19b8] sm:$0xff]
  %v1458 = vld [vmem:[%s3 + $0x19c0] sm:$0xff]
  %v1459 = vld [vmem:[%s3 + $0x19c8] sm:$0xff]
  %v1460 = vld [vmem:[%s3 + $0x19d0] sm:$0xff]
  %v1461 = vld [vmem:[%s3 + $0x19d8] sm:$0xff]
  %v1462 = vld [vmem:[%s3 + $0x19e0] sm:$0xff]
  %v1463 = vld [vmem:[%s3 + $0x19e8] sm:$0xff]
  %v1464 = vld [vmem:[%s3 + $0x19f0] sm:$0xff]
  %v1465 = vld [vmem:[%s3 + $0x19f8] sm:$0xff]
  %v1466 = vld [vmem:[%s3 + $0x1a00] sm:$0xff]
  %v1467 = vld [vmem:[%s3 + $0x1a08] sm:$0xff]
  %v1468 = vld [vmem:[%s3 + $0x1a10] sm:$0xff]
  %v1469 = vld [vmem:[%s3 + $0x1a18] sm:$0xff]
  %v1470 = vld [vmem:[%s3 + $0x1a20] sm:$0xff]
  %v1471 = vld [vmem:[%s3 + $0x1a28] sm:$0xff]
  %v1472 = vld [vmem:[%s3 + $0x1a30] sm:$0xff]
  %v1473 = vld [vmem:[%s3 + $0x1a38] sm:$0xff]
  %v1474 = vld [vmem:[%s3 + $0x1a40] sm:$0xff]
  %v1475 = vld [vmem:[%s3 + $0x1a48] sm:$0xff]
  %v1476 = vld [vmem:[%s3 + $0x1a50] sm:$0xff]
  %v1477 = vld [vmem:[%s3 + $0x1a58] sm:$0xff]
  %v1478 = vld [vmem:[%s3 + $0x1a60] sm:$0xff]
  %v1479 = vld [vmem:[%s3 + $0x1a68] sm:$0xff]
  %v1480 = vld [vmem:[%s3 + $0x1a70] sm:$0xff]
  %v1481 = vld [vmem:[%s3 + $0x1a78] sm:$0xff]
  %v1482 = vld [vmem:[%s3 + $0x1a80] sm:$0xff]
  %v1483 = vld [vmem:[%s3 + $0x1a88] sm:$0xff]
  %v1484 = vld [vmem:[%s3 + $0x1a90] sm:$0xff]
  %v1485 = vld [vmem:[%s3 + $0x1a98] sm:$0xff]
  %v1486 = vld [vmem:[%s3 + $0x1aa0] sm:$0xff]
  %v1487 = vld [vmem:[%s3 + $0x1aa8] sm:$0xff]
  %v1488 = vld [vmem:[%s3 + $0x1ab0] sm:$0xff]
  %v1489 = vld [vmem:[%s3 + $0x1ab8] sm:$0xff]
  %v1490 = vld [vmem:[%s3 + $0x1ac0] sm:$0xff]
  %v1491 = vld [vmem:[%s3 + $0x1ac8] sm:$0xff]
  %v1492 = vld [vmem:[%s3 + $0x1ad0] sm:$0xff]
  %v1493 = vld [vmem:[%s3 + $0x1ad8] sm:$0xff]
  %v1494 = vld [vmem:[%s3 + $0x1ae0] sm:$0xff]
  %v1495 = vld [vmem:[%s3 + $0x1ae8] sm:$0xff]
  %v1496 = vld [vmem:[%s3 + $0x1af0] sm:$0xff]
  %v1497 = vld [vmem:[%s3 + $0x1af8] sm:$0xff]
  %v1498 = vld [vmem:[%s3 + $0x1b00] sm:$0xff]
  %v1499 = vld [vmem:[%s3 + $0x1b08] sm:$0xff]
  %v1500 = vld [vmem:[%s3 + $0x1b10] sm:$0xff]
  %v1501 = vld [vmem:[%s3 + $0x1b18] sm:$0xff]
  %v1502 = vld [vmem:[%s3 + $0x1b20] sm:$0xff]
  %v1503 = vld [vmem:[%s3 + $0x1b28] sm:$0xff]
  %v1504 = vld [vmem:[%s3 + $0x1b30] sm:$0xff]
  %v1505 = vld [vmem:[%s3 + $0x1b38] sm:$0xff]
  %v1506 = vld [vmem:[%s3 + $0x1b40] sm:$0xff]
  %v1507 = vld [vmem:[%s3 + $0x1b48] sm:$0xff]
  %v1508 = vld [vmem:[%s3 + $0x1b50] sm:$0xff]
  %v1509 = vld [vmem:[%s3 + $0x1b58] sm:$0xff]
  %v1510 = vld [vmem:[%s3 + $0x1b60] sm:$0xff]
  %v1511 = vld [vmem:[%s3 + $0x1b68] sm:$0xff]
  %v1512 = vld [vmem:[%s3 + $0x1b70] sm:$0xff]
  %v1513 = vld [vmem:[%s3 + $0x1b78] sm:$0xff]
  %v1514 = vld [vmem:[%s3 + $0x1b80] sm:$0xff]
  %v1515 = vld [vmem:[%s3 + $0x1b88] sm:$0xff]
  %v1516 = vld [vmem:[%s3 + $0x1b90] sm:$0xff]
  %v1517 = vld [vmem:[%s3 + $0x1b98] sm:$0xff]
  %v1518 = vld [vmem:[%s3 + $0x1ba0] sm:$0xff]
  %v1519 = vld [vmem:[%s3 + $0x1ba8] sm:$0xff]
  %v1520 = vld [vmem:[%s3 + $0x1bb0] sm:$0xff]
  %v1521 = vld [vmem:[%s3 + $0x1bb8] sm:$0xff]
  %v1522 = vld [vmem:[%s3 + $0x1bc0] sm:$0xff]
  %v1523 = vld [vmem:[%s3 + $0x1bc8] sm:$0xff]
  %v1524 = vld [vmem:[%s3 + $0x1bd0] sm:$0xff]
  %v1525 = vld [vmem:[%s3 + $0x1bd8] sm:$0xff]
  %v1526 = vld [vmem:[%s3 + $0x1be0] sm:$0xff]
  %v1527 = vld [vmem:[%s3 + $0x1be8] sm:$0xff]
  %v1528 = vld [vmem:[%s3 + $0x1bf0] sm:$0xff]
  %v1529 = vld [vmem:[%s3 + $0x1bf8] sm:$0xff]
  %v1530 = vld [vmem:[%s3 + $0x1c00] sm:$0xff]
  %v1531 = vld [vmem:[%s3 + $0x1c08] sm:$0xff]
  %v1532 = vld [vmem:[%s3 + $0x1c10] sm:$0xff]
  %v1533 = vld [vmem:[%s3 + $0x1c18] sm:$0xff]
  %v1534 = vld [vmem:[%s3 + $0x1c20] sm:$0xff]
  %v1535 = vld [vmem:[%s3 + $0x1c28] sm:$0xff]
  %v1536 = vld [vmem:[%s3 + $0x1c30] sm:$0xff]
  %v1537 = vld [vmem:[%s3 + $0x1c38] sm:$0xff]
  %v1538 = vld [vmem:[%s3 + $0x1c40] sm:$0xff]
  %v1539 = vld [vmem:[%s3 + $0x1c48] sm:$0xff]
  %v1540 = vld [vmem:[%s3 + $0x1c50] sm:$0xff]
  %v1541 = vld [vmem:[%s3 + $0x1c58] sm:$0xff]
  %v1542 = vld [vmem:[%s3 + $0x1c60] sm:$0xff]
  %v1543 = vld [vmem:[%s3 + $0x1c68] sm:$0xff]
  %v1544 = vld [vmem:[%s3 + $0x1c70] sm:$0xff]
  %v1545 = vld [vmem:[%s3 + $0x1c78] sm:$0xff]
  %v1546 = vld [vmem:[%s3 + $0x1c80] sm:$0xff]
  %v1547 = vld [vmem:[%s3 + $0x1c88] sm:$0xff]
  %v1548 = vld [vmem:[%s3 + $0x1c90] sm:$0xff]
  %v1549 = vld [vmem:[%s3 + $0x1c98] sm:$0xff]
  %v1550 = vld [vmem:[%s3 + $0x1ca0] sm:$0xff]
  %v1551 = vld [vmem:[%s3 + $0x1ca8] sm:$0xff]
  %v1552 = vld [vmem:[%s3 + $0x1cb0] sm:$0xff]
  %v1553 = vld [vmem:[%s3 + $0x1cb8] sm:$0xff]
  %v1554 = vld [vmem:[%s3 + $0x1cc0] sm:$0xff]
  %v1555 = vld [vmem:[%s3 + $0x1cc8] sm:$0xff]
  %v1556 = vld [vmem:[%s3 + $0x1cd0] sm:$0xff]
  %v1557 = vld [vmem:[%s3 + $0x1cd8] sm:$0xff]
  %v1558 = vld [vmem:[%s3 + $0x1ce0] sm:$0xff]
  %v1559 = vld [vmem:[%s3 + $0x1ce8] sm:$0xff]
  %v1560 = vld [vmem:[%s3 + $0x1cf0] sm:$0xff]
  %v1561 = vld [vmem:[%s3 + $0x1cf8] sm:$0xff]
  %v1562 = vld [vmem:[%s3 + $0x1d00] sm:$0xff]
  %v1563 = vld [vmem:[%s3 + $0x1d08] sm:$0xff]
  %v1564 = vld [vmem:[%s3 + $0x1d10] sm:$0xff]
  %v1565 = vld [vmem:[%s3 + $0x1d18] sm:$0xff]
  %v1566 = vld [vmem:[%s3 + $0x1d20] sm:$0xff]
  %v1567 = vld [vmem:[%s3 + $0x1d28] sm:$0xff]
  %v1568 = vld [vmem:[%s3 + $0x1d30] sm:$0xff]
  %v1569 = vld [vmem:[%s3 + $0x1d38] sm:$0xff]
  %v1570 = vld [vmem:[%s3 + $0x1d40] sm:$0xff]
  %v1571 = vld [vmem:[%s3 + $0x1d48] sm:$0xff]
  %v1572 = vld [vmem:[%s3 + $0x1d50] sm:$0xff]
  %v1573 = vld [vmem:[%s3 + $0x1d58] sm:$0xff]
  %v1574 = vld [vmem:[%s3 + $0x1d60] sm:$0xff]
  %v1575 = vld [vmem:[%s3 + $0x1d68] sm:$0xff]
  %v1576 = vld [vmem:[%s3 + $0x1d70] sm:$0xff]
  %v1577 = vld [vmem:[%s3 + $0x1d78] sm:$0xff]
  %v1578 = vld [vmem:[%s3 + $0x1d80] sm:$0xff]
  %v1579 = vld [vmem:[%s3 + $0x1d88] sm:$0xff]
  %v1580 = vld [vmem:[%s3 + $0x1d90] sm:$0xff]
  %v1581 = vld [vmem:[%s3 + $0x1d98] sm:$0xff]
  %v1582 = vld [vmem:[%s3 + $0x1da0] sm:$0xff]
  %v1583 = vld [vmem:[%s3 + $0x1da8] sm:$0xff]
  %v1584 = vld [vmem:[%s3 + $0x1db0] sm:$0xff]
  %v1585 = vld [vmem:[%s3 + $0x1db8] sm:$0xff]
  %v1586 = vld [vmem:[%s3 + $0x1dc0] sm:$0xff]
  %v1587 = vld [vmem:[%s3 + $0x1dc8] sm:$0xff]
  %v1588 = vld [vmem:[%s3 + $0x1dd0] sm:$0xff]
  %v1589 = vld [vmem:[%s3 + $0x1dd8] sm:$0xff]
  %v1590 = vld [vmem:[%s3 + $0x1de0] sm:$0xff]
  %v1591 = vld [vmem:[%s3 + $0x1de8] sm:$0xff]
  %v1592 = vld [vmem:[%s3 + $0x1df0] sm:$0xff]
  %v1593 = vld [vmem:[%s3 + $0x1df8] sm:$0xff]
  %v1594 = vld [vmem:[%s3 + $0x1e00] sm:$0xff]
  %v1595 = vld [vmem:[%s3 + $0x1e08] sm:$0xff]
  %v1596 = vld [vmem:[%s3 + $0x1e10] sm:$0xff]
  %v1597 = vld [vmem:[%s3 + $0x1e18] sm:$0xff]
  %v1598 = vld [vmem:[%s3 + $0x1e20] sm:$0xff]
  %v1599 = vld [vmem:[%s3 + $0x1e28] sm:$0xff]
  %v1600 = vld [vmem:[%s3 + $0x1e30] sm:$0xff]
  %v1601 = vld [vmem:[%s3 + $0x1e38] sm:$0xff]
  %v1602 = vld [vmem:[%s3 + $0x1e40] sm:$0xff]
  %v1603 = vld [vmem:[%s3 + $0x1e48] sm:$0xff]
  %v1604 = vld [vmem:[%s3 + $0x1e50] sm:$0xff]
  %v1605 = vld [vmem:[%s3 + $0x1e58] sm:$0xff]
  %v1606 = vld [vmem:[%s3 + $0x1e60] sm:$0xff]
  %v1607 = vld [vmem:[%s3 + $0x1e68] sm:$0xff]
  %v1608 = vld [vmem:[%s3 + $0x1e70] sm:$0xff]
  %v1609 = vld [vmem:[%s3 + $0x1e78] sm:$0xff]
  %v1610 = vld [vmem:[%s3 + $0x1e80] sm:$0xff]
  %v1611 = vld [vmem:[%s3 + $0x1e88] sm:$0xff]
  %v1612 = vld [vmem:[%s3 + $0x1e90] sm:$0xff]
  %v1613 = vld [vmem:[%s3 + $0x1e98] sm:$0xff]
  %v1614 = vld [vmem:[%s3 + $0x1ea0] sm:$0xff]
  %v1615 = vld [vmem:[%s3 + $0x1ea8] sm:$0xff]
  %v1616 = vld [vmem:[%s3 + $0x1eb0] sm:$0xff]
  %v1617 = vld [vmem:[%s3 + $0x1eb8] sm:$0xff]
  %v1618 = vld [vmem:[%s3 + $0x1ec0] sm:$0xff]
  %v1619 = vld [vmem:[%s3 + $0x1ec8] sm:$0xff]
  %v1620 = vld [vmem:[%s3 + $0x1ed0] sm:$0xff]
  %v1621 = vld [vmem:[%s3 + $0x1ed8] sm:$0xff]
  %v1622 = vld [vmem:[%s3 + $0x1ee0] sm:$0xff]
  %v1623 = vld [vmem:[%s3 + $0x1ee8] sm:$0xff]
  %v1624 = vld [vmem:[%s3 + $0x1ef0] sm:$0xff]
  %v1625 = vld [vmem:[%s3 + $0x1ef8] sm:$0xff]
  %v1626 = vld [vmem:[%s3 + $0x1f00] sm:$0xff]
  %v1627 = vld [vmem:[%s3 + $0x1f08] sm:$0xff]
  %v1628 = vld [vmem:[%s3 + $0x1f10] sm:$0xff]
  %v1629 = vld [vmem:[%s3 + $0x1f18] sm:$0xff]
  %v1630 = vld [vmem:[%s3 + $0x1f20] sm:$0xff]
  %v1631 = vld [vmem:[%s3 + $0x1f28] sm:$0xff]
  %v1632 = vld [vmem:[%s3 + $0x1f30] sm:$0xff]
  %v1633 = vld [vmem:[%s3 + $0x1f38] sm:$0xff]
  %v1634 = vld [vmem:[%s3 + $0x1f40] sm:$0xff]
  %v1635 = vld [vmem:[%s3 + $0x1f48] sm:$0xff]
  %v1636 = vld [vmem:[%s3 + $0x1f50] sm:$0xff]
  %v1637 = vld [vmem:[%s3 + $0x1f58] sm:$0xff]
  %v1638 = vld [vmem:[%s3 + $0x1f60] sm:$0xff]
  %v1639 = vld [vmem:[%s3 + $0x1f68] sm:$0xff]
  %v1640 = vld [vmem:[%s3 + $0x1f70] sm:$0xff]
  %v1641 = vld [vmem:[%s3 + $0x1f78] sm:$0xff]
  %v1642 = vld [vmem:[%s3 + $0x1f80] sm:$0xff]
  %v1643 = vld [vmem:[%s3 + $0x1f88] sm:$0xff]
  %v1644 = vld [vmem:[%s3 + $0x1f90] sm:$0xff]
  %v1645 = vld [vmem:[%s3 + $0x1f98] sm:$0xff]
  %v1646 = vld [vmem:[%s3 + $0x1fa0] sm:$0xff]
  %v1647 = vld [vmem:[%s3 + $0x1fa8] sm:$0xff]
  %v1648 = vld [vmem:[%s3 + $0x1fb0] sm:$0xff]
  %v1649 = vld [vmem:[%s3 + $0x1fb8] sm:$0xff]
  %v1650 = vld [vmem:[%s3 + $0x1fc0] sm:$0xff]
  %v1651 = vld [vmem:[%s3 + $0x1fc8] sm:$0xff]
  %v1652 = vld [vmem:[%s3 + $0x1fd0] sm:$0xff]
  %v1653 = vld [vmem:[%s3 + $0x1fd8] sm:$0xff]
  %v1654 = vld [vmem:[%s3 + $0x1fe0] sm:$0xff]
  %v1655 = vld [vmem:[%s3 + $0x1fe8] sm:$0xff]
  %v1656 = vld [vmem:[%s3 + $0x1ff0] sm:$0xff]
  %v1657 = vld [vmem:[%s3 + $0x1ff8] sm:$0xff]
  %v1658 = vld [vmem:[%s4] sm:$0xff]
  %v1660 = vperm.slane %v1658, 0
  %v1661 = vperm.slane %v1658, 1
  %v1662 = vperm.slane %v1658, 2
  %v1663 = vperm.slane %v1658, 3
  %v1664 = vperm.slane %v1658, 4
  %v1665 = vperm.slane %v1658, 5
  %v1666 = vperm.slane %v1658, 6
  %v1667 = vperm.slane %v1658, 7
  %1676 = vmatpush.msra.mxu0 %v754
  %1677 = vmatpush.msra.mxu0 %v746
  %1678 = vmatpush.msra.mxu0 %v738
  %1679 = vmatpush.msra.mxu0 %v730
  %1680 = vmatpush.msra.mxu0 %v722
  %1681 = vmatpush.msra.mxu0 %v714
  %1682 = vmatpush.msra.mxu0 %v706
  %1683 = vmatpush.msra.mxu0 %v698
  %1684 = vmatpush.msra.mxu0 %v690
  %1685 = vmatpush.msra.mxu0 %v682
  %1686 = vmatpush.msra.mxu0 %v674
  %1687 = vmatpush.msra.mxu0 %v666
  %1688 = vmatpush.msra.mxu0 %v658
  %1689 = vmatpush.msra.mxu0 %v650
  %1690 = vmatpush.msra.mxu0 %v642
  %1691 = vmatpush.msra.mxu0 %v634
  %1692 = vmatmul.f32.gmra.mxu0 %v626
  %v1693 = vpop.f32.mrf.mxu0
  %v1694 = vadd.f32 %v1660, %v1693
  %1695 = vdwg.mxu0
  %1696 = vmatpush.msra.mxu0 %v882
  %1697 = vmatpush.msra.mxu0 %v874
  %1698 = vmatpush.msra.mxu0 %v866
  %1699 = vmatpush.msra.mxu0 %v858
  %1700 = vmatpush.msra.mxu0 %v850
  %1701 = vmatpush.msra.mxu0 %v842
  %1702 = vmatpush.msra.mxu0 %v834
  %1703 = vmatpush.msra.mxu0 %v826
  %1704 = vmatpush.msra.mxu0 %v818
  %1705 = vmatpush.msra.mxu0 %v810
  %1706 = vmatpush.msra.mxu0 %v802
  %1707 = vmatpush.msra.mxu0 %v794
  %1708 = vmatpush.msra.mxu0 %v786
  %1709 = vmatpush.msra.mxu0 %v778
  %1710 = vmatpush.msra.mxu0 %v770
  %1711 = vmatpush.msra.mxu0 %v762
  %1712 = vmatmul.f32.gmra.mxu0 %v627
  %v1713 = vpop.f32.mrf.mxu0
  %v1714 = vadd.f32 %v1694, %v1713
  %1715 = vdwg.mxu0
  %1716 = vmatpush.msra.mxu0 %v1010
  %1717 = vmatpush.msra.mxu0 %v1002
  %1718 = vmatpush.msra.mxu0 %v994
  %1719 = vmatpush.msra.mxu0 %v986
  %1720 = vmatpush.msra.mxu0 %v978
  %1721 = vmatpush.msra.mxu0 %v970
  %1722 = vmatpush.msra.mxu0 %v962
  %1723 = vmatpush.msra.mxu0 %v954
  %1724 = vmatpush.msra.mxu0 %v946
  %1725 = vmatpush.msra.mxu0 %v938
  %1726 = vmatpush.msra.mxu0 %v930
  %1727 = vmatpush.msra.mxu0 %v922
  %1728 = vmatpush.msra.mxu0 %v914
  %1729 = vmatpush.msra.mxu0 %v906
  %1730 = vmatpush.msra.mxu0 %v898
  %1731 = vmatpush.msra.mxu0 %v890
  %1732 = vmatmul.f32.gmra.mxu0 %v628
  %v1733 = vpop.f32.mrf.mxu0
  %v1734 = vadd.f32 %v1714, %v1733
  %1735 = vdwg.mxu0
  %1736 = vmatpush.msra.mxu0 %v1138
  %1737 = vmatpush.msra.mxu0 %v1130
  %1738 = vmatpush.msra.mxu0 %v1122
  %1739 = vmatpush.msra.mxu0 %v1114
  %1740 = vmatpush.msra.mxu0 %v1106
  %1741 = vmatpush.msra.mxu0 %v1098
  %1742 = vmatpush.msra.mxu0 %v1090
  %1743 = vmatpush.msra.mxu0 %v1082
  %1744 = vmatpush.msra.mxu0 %v1074
  %1745 = vmatpush.msra.mxu0 %v1066
  %1746 = vmatpush.msra.mxu0 %v1058
  %1747 = vmatpush.msra.mxu0 %v1050
  %1748 = vmatpush.msra.mxu0 %v1042
  %1749 = vmatpush.msra.mxu0 %v1034
  %1750 = vmatpush.msra.mxu0 %v1026
  %1751 = vmatpush.msra.mxu0 %v1018
  %1752 = vmatmul.f32.gmra.mxu0 %v629
  %v1753 = vpop.f32.mrf.mxu0
  %v1754 = vadd.f32 %v1734, %v1753
  %1755 = vdwg.mxu0
  %1756 = vmatpush.msra.mxu0 %v1266
  %1757 = vmatpush.msra.mxu0 %v1258
  %1758 = vmatpush.msra.mxu0 %v1250
  %1759 = vmatpush.msra.mxu0 %v1242
  %1760 = vmatpush.msra.mxu0 %v1234
  %1761 = vmatpush.msra.mxu0 %v1226
  %1762 = vmatpush.msra.mxu0 %v1218
  %1763 = vmatpush.msra.mxu0 %v1210
  %1764 = vmatpush.msra.mxu0 %v1202
  %1765 = vmatpush.msra.mxu0 %v1194
  %1766 = vmatpush.msra.mxu0 %v1186
  %1767 = vmatpush.msra.mxu0 %v1178
  %1768 = vmatpush.msra.mxu0 %v1170
  %1769 = vmatpush.msra.mxu0 %v1162
  %1770 = vmatpush.msra.mxu0 %v1154
  %1771 = vmatpush.msra.mxu0 %v1146
  %1772 = vmatmul.f32.gmra.mxu0 %v630
  %v1773 = vpop.f32.mrf.mxu0
  %v1774 = vadd.f32 %v1754, %v1773
  %1775 = vdwg.mxu0
  %1776 = vmatpush.msra.mxu0 %v1394
  %1777 = vmatpush.msra.mxu0 %v1386
  %1778 = vmatpush.msra.mxu0 %v1378
  %1779 = vmatpush.msra.mxu0 %v1370
  %1780 = vmatpush.msra.mxu0 %v1362
  %1781 = vmatpush.msra.mxu0 %v1354
  %1782 = vmatpush.msra.mxu0 %v1346
  %1783 = vmatpush.msra.mxu0 %v1338
  %1784 = vmatpush.msra.mxu0 %v1330
  %1785 = vmatpush.msra.mxu0 %v1322
  %1786 = vmatpush.msra.mxu0 %v1314
  %1787 = vmatpush.msra.mxu0 %v1306
  %1788 = vmatpush.msra.mxu0 %v1298
  %1789 = vmatpush.msra.mxu0 %v1290
  %1790 = vmatpush.msra.mxu0 %v1282
  %1791 = vmatpush.msra.mxu0 %v1274
  %1792 = vmatmul.f32.gmra.mxu0 %v631
  %v1793 = vpop.f32.mrf.mxu0
  %v1794 = vadd.f32 %v1774, %v1793
  %1795 = vdwg.mxu0
  %1796 = vmatpush.msra.mxu0 %v1522
  %1797 = vmatpush.msra.mxu0 %v1514
  %1798 = vmatpush.msra.mxu0 %v1506
  %1799 = vmatpush.msra.mxu0 %v1498
  %1800 = vmatpush.msra.mxu0 %v1490
  %1801 = vmatpush.msra.mxu0 %v1482
  %1802 = vmatpush.msra.mxu0 %v1474
  %1803 = vmatpush.msra.mxu0 %v1466
  %1804 = vmatpush.msra.mxu0 %v1458
  %1805 = vmatpush.msra.mxu0 %v1450
  %1806 = vmatpush.msra.mxu0 %v1442
  %1807 = vmatpush.msra.mxu0 %v1434
  %1808 = vmatpush.msra.mxu0 %v1426
  %1809 = vmatpush.msra.mxu0 %v1418
  %1810 = vmatpush.msra.mxu0 %v1410
  %1811 = vmatpush.msra.mxu0 %v1402
  %1812 = vmatmul.f32.gmra.mxu0 %v632
  %v1813 = vpop.f32.mrf.mxu0
  %v1814 = vadd.f32 %v1794, %v1813
  %1815 = vdwg.mxu0
  %1816 = vmatpush.msra.mxu0 %v1650
  %1817 = vmatpush.msra.mxu0 %v1642
  %1818 = vmatpush.msra.mxu0 %v1634
  %1819 = vmatpush.msra.mxu0 %v1626
  %1820 = vmatpush.msra.mxu0 %v1618
  %1821 = vmatpush.msra.mxu0 %v1610
  %1822 = vmatpush.msra.mxu0 %v1602
  %1823 = vmatpush.msra.mxu0 %v1594
  %1824 = vmatpush.msra.mxu0 %v1586
  %1825 = vmatpush.msra.mxu0 %v1578
  %1826 = vmatpush.msra.mxu0 %v1570
  %1827 = vmatpush.msra.mxu0 %v1562
  %1828 = vmatpush.msra.mxu0 %v1554
  %1829 = vmatpush.msra.mxu0 %v1546
  %1830 = vmatpush.msra.mxu0 %v1538
  %1831 = vmatpush.msra.mxu0 %v1530
  %1832 = vmatmul.f32.gmra.mxu0 %v633
  %v1833 = vpop.f32.mrf.mxu0
  %v1834 = vadd.f32 %v1814, %v1833
  %1835 = vdwg.mxu0
  %1836 = vmatpush.msra.mxu0 %v755
  %1837 = vmatpush.msra.mxu0 %v747
  %1838 = vmatpush.msra.mxu0 %v739
  %1839 = vmatpush.msra.mxu0 %v731
  %1840 = vmatpush.msra.mxu0 %v723
  %1841 = vmatpush.msra.mxu0 %v715
  %1842 = vmatpush.msra.mxu0 %v707
  %1843 = vmatpush.msra.mxu0 %v699
  %1844 = vmatpush.msra.mxu0 %v691
  %1845 = vmatpush.msra.mxu0 %v683
  %1846 = vmatpush.msra.mxu0 %v675
  %1847 = vmatpush.msra.mxu0 %v667
  %1848 = vmatpush.msra.mxu0 %v659
  %1849 = vmatpush.msra.mxu0 %v651
  %1850 = vmatpush.msra.mxu0 %v643
  %1851 = vmatpush.msra.mxu0 %v635
  %1852 = vmatmul.f32.gmra.mxu0 %v626
  %v1853 = vpop.f32.mrf.mxu0
  %v1854 = vadd.f32 %v1661, %v1853
  %1855 = vdwg.mxu0
  %1856 = vmatpush.msra.mxu0 %v883
  %1857 = vmatpush.msra.mxu0 %v875
  %1858 = vmatpush.msra.mxu0 %v867
  %1859 = vmatpush.msra.mxu0 %v859
  %1860 = vmatpush.msra.mxu0 %v851
  %1861 = vmatpush.msra.mxu0 %v843
  %1862 = vmatpush.msra.mxu0 %v835
  %1863 = vmatpush.msra.mxu0 %v827
  %1864 = vmatpush.msra.mxu0 %v819
  %1865 = vmatpush.msra.mxu0 %v811
  %1866 = vmatpush.msra.mxu0 %v803
  %1867 = vmatpush.msra.mxu0 %v795
  %1868 = vmatpush.msra.mxu0 %v787
  %1869 = vmatpush.msra.mxu0 %v779
  %1870 = vmatpush.msra.mxu0 %v771
  %1871 = vmatpush.msra.mxu0 %v763
  %1872 = vmatmul.f32.gmra.mxu0 %v627
  %v1873 = vpop.f32.mrf.mxu0
  %v1874 = vadd.f32 %v1854, %v1873
  %1875 = vdwg.mxu0
  %1876 = vmatpush.msra.mxu0 %v1011
  %1877 = vmatpush.msra.mxu0 %v1003
  %1878 = vmatpush.msra.mxu0 %v995
  %1879 = vmatpush.msra.mxu0 %v987
  %1880 = vmatpush.msra.mxu0 %v979
  %1881 = vmatpush.msra.mxu0 %v971
  %1882 = vmatpush.msra.mxu0 %v963
  %1883 = vmatpush.msra.mxu0 %v955
  %1884 = vmatpush.msra.mxu0 %v947
  %1885 = vmatpush.msra.mxu0 %v939
  %1886 = vmatpush.msra.mxu0 %v931
  %1887 = vmatpush.msra.mxu0 %v923
  %1888 = vmatpush.msra.mxu0 %v915
  %1889 = vmatpush.msra.mxu0 %v907
  %1890 = vmatpush.msra.mxu0 %v899
  %1891 = vmatpush.msra.mxu0 %v891
  %1892 = vmatmul.f32.gmra.mxu0 %v628
  %v1893 = vpop.f32.mrf.mxu0
  %v1894 = vadd.f32 %v1874, %v1893
  %1895 = vdwg.mxu0
  %1896 = vmatpush.msra.mxu0 %v1139
  %1897 = vmatpush.msra.mxu0 %v1131
  %1898 = vmatpush.msra.mxu0 %v1123
  %1899 = vmatpush.msra.mxu0 %v1115
  %1900 = vmatpush.msra.mxu0 %v1107
  %1901 = vmatpush.msra.mxu0 %v1099
  %1902 = vmatpush.msra.mxu0 %v1091
  %1903 = vmatpush.msra.mxu0 %v1083
  %1904 = vmatpush.msra.mxu0 %v1075
  %1905 = vmatpush.msra.mxu0 %v1067
  %1906 = vmatpush.msra.mxu0 %v1059
  %1907 = vmatpush.msra.mxu0 %v1051
  %1908 = vmatpush.msra.mxu0 %v1043
  %1909 = vmatpush.msra.mxu0 %v1035
  %1910 = vmatpush.msra.mxu0 %v1027
  %1911 = vmatpush.msra.mxu0 %v1019
  %1912 = vmatmul.f32.gmra.mxu0 %v629
  %v1913 = vpop.f32.mrf.mxu0
  %v1914 = vadd.f32 %v1894, %v1913
  %1915 = vdwg.mxu0
  %1916 = vmatpush.msra.mxu0 %v1267
  %1917 = vmatpush.msra.mxu0 %v1259
  %1918 = vmatpush.msra.mxu0 %v1251
  %1919 = vmatpush.msra.mxu0 %v1243
  %1920 = vmatpush.msra.mxu0 %v1235
  %1921 = vmatpush.msra.mxu0 %v1227
  %1922 = vmatpush.msra.mxu0 %v1219
  %1923 = vmatpush.msra.mxu0 %v1211
  %1924 = vmatpush.msra.mxu0 %v1203
  %1925 = vmatpush.msra.mxu0 %v1195
  %1926 = vmatpush.msra.mxu0 %v1187
  %1927 = vmatpush.msra.mxu0 %v1179
  %1928 = vmatpush.msra.mxu0 %v1171
  %1929 = vmatpush.msra.mxu0 %v1163
  %1930 = vmatpush.msra.mxu0 %v1155
  %1931 = vmatpush.msra.mxu0 %v1147
  %1932 = vmatmul.f32.gmra.mxu0 %v630
  %v1933 = vpop.f32.mrf.mxu0
  %v1934 = vadd.f32 %v1914, %v1933
  %1935 = vdwg.mxu0
  %1936 = vmatpush.msra.mxu0 %v1395
  %1937 = vmatpush.msra.mxu0 %v1387
  %1938 = vmatpush.msra.mxu0 %v1379
  %1939 = vmatpush.msra.mxu0 %v1371
  %1940 = vmatpush.msra.mxu0 %v1363
  %1941 = vmatpush.msra.mxu0 %v1355
  %1942 = vmatpush.msra.mxu0 %v1347
  %1943 = vmatpush.msra.mxu0 %v1339
  %1944 = vmatpush.msra.mxu0 %v1331
  %1945 = vmatpush.msra.mxu0 %v1323
  %1946 = vmatpush.msra.mxu0 %v1315
  %1947 = vmatpush.msra.mxu0 %v1307
  %1948 = vmatpush.msra.mxu0 %v1299
  %1949 = vmatpush.msra.mxu0 %v1291
  %1950 = vmatpush.msra.mxu0 %v1283
  %1951 = vmatpush.msra.mxu0 %v1275
  %1952 = vmatmul.f32.gmra.mxu0 %v631
  %v1953 = vpop.f32.mrf.mxu0
  %v1954 = vadd.f32 %v1934, %v1953
  %1955 = vdwg.mxu0
  %1956 = vmatpush.msra.mxu0 %v1523
  %1957 = vmatpush.msra.mxu0 %v1515
  %1958 = vmatpush.msra.mxu0 %v1507
  %1959 = vmatpush.msra.mxu0 %v1499
  %1960 = vmatpush.msra.mxu0 %v1491
  %1961 = vmatpush.msra.mxu0 %v1483
  %1962 = vmatpush.msra.mxu0 %v1475
  %1963 = vmatpush.msra.mxu0 %v1467
  %1964 = vmatpush.msra.mxu0 %v1459
  %1965 = vmatpush.msra.mxu0 %v1451
  %1966 = vmatpush.msra.mxu0 %v1443
  %1967 = vmatpush.msra.mxu0 %v1435
  %1968 = vmatpush.msra.mxu0 %v1427
  %1969 = vmatpush.msra.mxu0 %v1419
  %1970 = vmatpush.msra.mxu0 %v1411
  %1971 = vmatpush.msra.mxu0 %v1403
  %1972 = vmatmul.f32.gmra.mxu0 %v632
  %v1973 = vpop.f32.mrf.mxu0
  %v1974 = vadd.f32 %v1954, %v1973
  %1975 = vdwg.mxu0
  %1976 = vmatpush.msra.mxu0 %v1651
  %1977 = vmatpush.msra.mxu0 %v1643
  %1978 = vmatpush.msra.mxu0 %v1635
  %1979 = vmatpush.msra.mxu0 %v1627
  %1980 = vmatpush.msra.mxu0 %v1619
  %1981 = vmatpush.msra.mxu0 %v1611
  %1982 = vmatpush.msra.mxu0 %v1603
  %1983 = vmatpush.msra.mxu0 %v1595
  %1984 = vmatpush.msra.mxu0 %v1587
  %1985 = vmatpush.msra.mxu0 %v1579
  %1986 = vmatpush.msra.mxu0 %v1571
  %1987 = vmatpush.msra.mxu0 %v1563
  %1988 = vmatpush.msra.mxu0 %v1555
  %1989 = vmatpush.msra.mxu0 %v1547
  %1990 = vmatpush.msra.mxu0 %v1539
  %1991 = vmatpush.msra.mxu0 %v1531
  %1992 = vmatmul.f32.gmra.mxu0 %v633
  %v1993 = vpop.f32.mrf.mxu0
  %v1994 = vadd.f32 %v1974, %v1993
  %1995 = vdwg.mxu0
  %1996 = vmatpush.msra.mxu0 %v756
  %1997 = vmatpush.msra.mxu0 %v748
  %1998 = vmatpush.msra.mxu0 %v740
  %1999 = vmatpush.msra.mxu0 %v732
  %2000 = vmatpush.msra.mxu0 %v724
  %2001 = vmatpush.msra.mxu0 %v716
  %2002 = vmatpush.msra.mxu0 %v708
  %2003 = vmatpush.msra.mxu0 %v700
  %2004 = vmatpush.msra.mxu0 %v692
  %2005 = vmatpush.msra.mxu0 %v684
  %2006 = vmatpush.msra.mxu0 %v676
  %2007 = vmatpush.msra.mxu0 %v668
  %2008 = vmatpush.msra.mxu0 %v660
  %2009 = vmatpush.msra.mxu0 %v652
  %2010 = vmatpush.msra.mxu0 %v644
  %2011 = vmatpush.msra.mxu0 %v636
  %2012 = vmatmul.f32.gmra.mxu0 %v626
  %v2013 = vpop.f32.mrf.mxu0
  %v2014 = vadd.f32 %v1662, %v2013
  %2015 = vdwg.mxu0
  %2016 = vmatpush.msra.mxu0 %v884
  %2017 = vmatpush.msra.mxu0 %v876
  %2018 = vmatpush.msra.mxu0 %v868
  %2019 = vmatpush.msra.mxu0 %v860
  %2020 = vmatpush.msra.mxu0 %v852
  %2021 = vmatpush.msra.mxu0 %v844
  %2022 = vmatpush.msra.mxu0 %v836
  %2023 = vmatpush.msra.mxu0 %v828
  %2024 = vmatpush.msra.mxu0 %v820
  %2025 = vmatpush.msra.mxu0 %v812
  %2026 = vmatpush.msra.mxu0 %v804
  %2027 = vmatpush.msra.mxu0 %v796
  %2028 = vmatpush.msra.mxu0 %v788
  %2029 = vmatpush.msra.mxu0 %v780
  %2030 = vmatpush.msra.mxu0 %v772
  %2031 = vmatpush.msra.mxu0 %v764
  %2032 = vmatmul.f32.gmra.mxu0 %v627
  %v2033 = vpop.f32.mrf.mxu0
  %v2034 = vadd.f32 %v2014, %v2033
  %2035 = vdwg.mxu0
  %2036 = vmatpush.msra.mxu0 %v1012
  %2037 = vmatpush.msra.mxu0 %v1004
  %2038 = vmatpush.msra.mxu0 %v996
  %2039 = vmatpush.msra.mxu0 %v988
  %2040 = vmatpush.msra.mxu0 %v980
  %2041 = vmatpush.msra.mxu0 %v972
  %2042 = vmatpush.msra.mxu0 %v964
  %2043 = vmatpush.msra.mxu0 %v956
  %2044 = vmatpush.msra.mxu0 %v948
  %2045 = vmatpush.msra.mxu0 %v940
  %2046 = vmatpush.msra.mxu0 %v932
  %2047 = vmatpush.msra.mxu0 %v924
  %2048 = vmatpush.msra.mxu0 %v916
  %2049 = vmatpush.msra.mxu0 %v908
  %2050 = vmatpush.msra.mxu0 %v900
  %2051 = vmatpush.msra.mxu0 %v892
  %2052 = vmatmul.f32.gmra.mxu0 %v628
  %v2053 = vpop.f32.mrf.mxu0
  %v2054 = vadd.f32 %v2034, %v2053
  %2055 = vdwg.mxu0
  %2056 = vmatpush.msra.mxu0 %v1140
  %2057 = vmatpush.msra.mxu0 %v1132
  %2058 = vmatpush.msra.mxu0 %v1124
  %2059 = vmatpush.msra.mxu0 %v1116
  %2060 = vmatpush.msra.mxu0 %v1108
  %2061 = vmatpush.msra.mxu0 %v1100
  %2062 = vmatpush.msra.mxu0 %v1092
  %2063 = vmatpush.msra.mxu0 %v1084
  %2064 = vmatpush.msra.mxu0 %v1076
  %2065 = vmatpush.msra.mxu0 %v1068
  %2066 = vmatpush.msra.mxu0 %v1060
  %2067 = vmatpush.msra.mxu0 %v1052
  %2068 = vmatpush.msra.mxu0 %v1044
  %2069 = vmatpush.msra.mxu0 %v1036
  %2070 = vmatpush.msra.mxu0 %v1028
  %2071 = vmatpush.msra.mxu0 %v1020
  %2072 = vmatmul.f32.gmra.mxu0 %v629
  %v2073 = vpop.f32.mrf.mxu0
  %v2074 = vadd.f32 %v2054, %v2073
  %2075 = vdwg.mxu0
  %2076 = vmatpush.msra.mxu0 %v1268
  %2077 = vmatpush.msra.mxu0 %v1260
  %2078 = vmatpush.msra.mxu0 %v1252
  %2079 = vmatpush.msra.mxu0 %v1244
  %2080 = vmatpush.msra.mxu0 %v1236
  %2081 = vmatpush.msra.mxu0 %v1228
  %2082 = vmatpush.msra.mxu0 %v1220
  %2083 = vmatpush.msra.mxu0 %v1212
  %2084 = vmatpush.msra.mxu0 %v1204
  %2085 = vmatpush.msra.mxu0 %v1196
  %2086 = vmatpush.msra.mxu0 %v1188
  %2087 = vmatpush.msra.mxu0 %v1180
  %2088 = vmatpush.msra.mxu0 %v1172
  %2089 = vmatpush.msra.mxu0 %v1164
  %2090 = vmatpush.msra.mxu0 %v1156
  %2091 = vmatpush.msra.mxu0 %v1148
  %2092 = vmatmul.f32.gmra.mxu0 %v630
  %v2093 = vpop.f32.mrf.mxu0
  %v2094 = vadd.f32 %v2074, %v2093
  %2095 = vdwg.mxu0
  %2096 = vmatpush.msra.mxu0 %v1396
  %2097 = vmatpush.msra.mxu0 %v1388
  %2098 = vmatpush.msra.mxu0 %v1380
  %2099 = vmatpush.msra.mxu0 %v1372
  %2100 = vmatpush.msra.mxu0 %v1364
  %2101 = vmatpush.msra.mxu0 %v1356
  %2102 = vmatpush.msra.mxu0 %v1348
  %2103 = vmatpush.msra.mxu0 %v1340
  %2104 = vmatpush.msra.mxu0 %v1332
  %2105 = vmatpush.msra.mxu0 %v1324
  %2106 = vmatpush.msra.mxu0 %v1316
  %2107 = vmatpush.msra.mxu0 %v1308
  %2108 = vmatpush.msra.mxu0 %v1300
  %2109 = vmatpush.msra.mxu0 %v1292
  %2110 = vmatpush.msra.mxu0 %v1284
  %2111 = vmatpush.msra.mxu0 %v1276
  %2112 = vmatmul.f32.gmra.mxu0 %v631
  %v2113 = vpop.f32.mrf.mxu0
  %v2114 = vadd.f32 %v2094, %v2113
  %2115 = vdwg.mxu0
  %2116 = vmatpush.msra.mxu0 %v1524
  %2117 = vmatpush.msra.mxu0 %v1516
  %2118 = vmatpush.msra.mxu0 %v1508
  %2119 = vmatpush.msra.mxu0 %v1500
  %2120 = vmatpush.msra.mxu0 %v1492
  %2121 = vmatpush.msra.mxu0 %v1484
  %2122 = vmatpush.msra.mxu0 %v1476
  %2123 = vmatpush.msra.mxu0 %v1468
  %2124 = vmatpush.msra.mxu0 %v1460
  %2125 = vmatpush.msra.mxu0 %v1452
  %2126 = vmatpush.msra.mxu0 %v1444
  %2127 = vmatpush.msra.mxu0 %v1436
  %2128 = vmatpush.msra.mxu0 %v1428
  %2129 = vmatpush.msra.mxu0 %v1420
  %2130 = vmatpush.msra.mxu0 %v1412
  %2131 = vmatpush.msra.mxu0 %v1404
  %2132 = vmatmul.f32.gmra.mxu0 %v632
  %v2133 = vpop.f32.mrf.mxu0
  %v2134 = vadd.f32 %v2114, %v2133
  %2135 = vdwg.mxu0
  %2136 = vmatpush.msra.mxu0 %v1652
  %2137 = vmatpush.msra.mxu0 %v1644
  %2138 = vmatpush.msra.mxu0 %v1636
  %2139 = vmatpush.msra.mxu0 %v1628
  %2140 = vmatpush.msra.mxu0 %v1620
  %2141 = vmatpush.msra.mxu0 %v1612
  %2142 = vmatpush.msra.mxu0 %v1604
  %2143 = vmatpush.msra.mxu0 %v1596
  %2144 = vmatpush.msra.mxu0 %v1588
  %2145 = vmatpush.msra.mxu0 %v1580
  %2146 = vmatpush.msra.mxu0 %v1572
  %2147 = vmatpush.msra.mxu0 %v1564
  %2148 = vmatpush.msra.mxu0 %v1556
  %2149 = vmatpush.msra.mxu0 %v1548
  %2150 = vmatpush.msra.mxu0 %v1540
  %2151 = vmatpush.msra.mxu0 %v1532
  %2152 = vmatmul.f32.gmra.mxu0 %v633
  %v2153 = vpop.f32.mrf.mxu0
  %v2154 = vadd.f32 %v2134, %v2153
  %2155 = vdwg.mxu0
  %2156 = vmatpush.msra.mxu0 %v757
  %2157 = vmatpush.msra.mxu0 %v749
  %2158 = vmatpush.msra.mxu0 %v741
  %2159 = vmatpush.msra.mxu0 %v733
  %2160 = vmatpush.msra.mxu0 %v725
  %2161 = vmatpush.msra.mxu0 %v717
  %2162 = vmatpush.msra.mxu0 %v709
  %2163 = vmatpush.msra.mxu0 %v701
  %2164 = vmatpush.msra.mxu0 %v693
  %2165 = vmatpush.msra.mxu0 %v685
  %2166 = vmatpush.msra.mxu0 %v677
  %2167 = vmatpush.msra.mxu0 %v669
  %2168 = vmatpush.msra.mxu0 %v661
  %2169 = vmatpush.msra.mxu0 %v653
  %2170 = vmatpush.msra.mxu0 %v645
  %2171 = vmatpush.msra.mxu0 %v637
  %2172 = vmatmul.f32.gmra.mxu0 %v626
  %v2173 = vpop.f32.mrf.mxu0
  %v2174 = vadd.f32 %v1663, %v2173
  %2175 = vdwg.mxu0
  %2176 = vmatpush.msra.mxu0 %v885
  %2177 = vmatpush.msra.mxu0 %v877
  %2178 = vmatpush.msra.mxu0 %v869
  %2179 = vmatpush.msra.mxu0 %v861
  %2180 = vmatpush.msra.mxu0 %v853
  %2181 = vmatpush.msra.mxu0 %v845
  %2182 = vmatpush.msra.mxu0 %v837
  %2183 = vmatpush.msra.mxu0 %v829
  %2184 = vmatpush.msra.mxu0 %v821
  %2185 = vmatpush.msra.mxu0 %v813
  %2186 = vmatpush.msra.mxu0 %v805
  %2187 = vmatpush.msra.mxu0 %v797
  %2188 = vmatpush.msra.mxu0 %v789
  %2189 = vmatpush.msra.mxu0 %v781
  %2190 = vmatpush.msra.mxu0 %v773
  %2191 = vmatpush.msra.mxu0 %v765
  %2192 = vmatmul.f32.gmra.mxu0 %v627
  %v2193 = vpop.f32.mrf.mxu0
  %v2194 = vadd.f32 %v2174, %v2193
  %2195 = vdwg.mxu0
  %2196 = vmatpush.msra.mxu0 %v1013
  %2197 = vmatpush.msra.mxu0 %v1005
  %2198 = vmatpush.msra.mxu0 %v997
  %2199 = vmatpush.msra.mxu0 %v989
  %2200 = vmatpush.msra.mxu0 %v981
  %2201 = vmatpush.msra.mxu0 %v973
  %2202 = vmatpush.msra.mxu0 %v965
  %2203 = vmatpush.msra.mxu0 %v957
  %2204 = vmatpush.msra.mxu0 %v949
  %2205 = vmatpush.msra.mxu0 %v941
  %2206 = vmatpush.msra.mxu0 %v933
  %2207 = vmatpush.msra.mxu0 %v925
  %2208 = vmatpush.msra.mxu0 %v917
  %2209 = vmatpush.msra.mxu0 %v909
  %2210 = vmatpush.msra.mxu0 %v901
  %2211 = vmatpush.msra.mxu0 %v893
  %2212 = vmatmul.f32.gmra.mxu0 %v628
  %v2213 = vpop.f32.mrf.mxu0
  %v2214 = vadd.f32 %v2194, %v2213
  %2215 = vdwg.mxu0
  %2216 = vmatpush.msra.mxu0 %v1141
  %2217 = vmatpush.msra.mxu0 %v1133
  %2218 = vmatpush.msra.mxu0 %v1125
  %2219 = vmatpush.msra.mxu0 %v1117
  %2220 = vmatpush.msra.mxu0 %v1109
  %2221 = vmatpush.msra.mxu0 %v1101
  %2222 = vmatpush.msra.mxu0 %v1093
  %2223 = vmatpush.msra.mxu0 %v1085
  %2224 = vmatpush.msra.mxu0 %v1077
  %2225 = vmatpush.msra.mxu0 %v1069
  %2226 = vmatpush.msra.mxu0 %v1061
  %2227 = vmatpush.msra.mxu0 %v1053
  %2228 = vmatpush.msra.mxu0 %v1045
  %2229 = vmatpush.msra.mxu0 %v1037
  %2230 = vmatpush.msra.mxu0 %v1029
  %2231 = vmatpush.msra.mxu0 %v1021
  %2232 = vmatmul.f32.gmra.mxu0 %v629
  %v2233 = vpop.f32.mrf.mxu0
  %v2234 = vadd.f32 %v2214, %v2233
  %2235 = vdwg.mxu0
  %2236 = vmatpush.msra.mxu0 %v1269
  %2237 = vmatpush.msra.mxu0 %v1261
  %2238 = vmatpush.msra.mxu0 %v1253
  %2239 = vmatpush.msra.mxu0 %v1245
  %2240 = vmatpush.msra.mxu0 %v1237
  %2241 = vmatpush.msra.mxu0 %v1229
  %2242 = vmatpush.msra.mxu0 %v1221
  %2243 = vmatpush.msra.mxu0 %v1213
  %2244 = vmatpush.msra.mxu0 %v1205
  %2245 = vmatpush.msra.mxu0 %v1197
  %2246 = vmatpush.msra.mxu0 %v1189
  %2247 = vmatpush.msra.mxu0 %v1181
  %2248 = vmatpush.msra.mxu0 %v1173
  %2249 = vmatpush.msra.mxu0 %v1165
  %2250 = vmatpush.msra.mxu0 %v1157
  %2251 = vmatpush.msra.mxu0 %v1149
  %2252 = vmatmul.f32.gmra.mxu0 %v630
  %v2253 = vpop.f32.mrf.mxu0
  %v2254 = vadd.f32 %v2234, %v2253
  %2255 = vdwg.mxu0
  %2256 = vmatpush.msra.mxu0 %v1397
  %2257 = vmatpush.msra.mxu0 %v1389
  %2258 = vmatpush.msra.mxu0 %v1381
  %2259 = vmatpush.msra.mxu0 %v1373
  %2260 = vmatpush.msra.mxu0 %v1365
  %2261 = vmatpush.msra.mxu0 %v1357
  %2262 = vmatpush.msra.mxu0 %v1349
  %2263 = vmatpush.msra.mxu0 %v1341
  %2264 = vmatpush.msra.mxu0 %v1333
  %2265 = vmatpush.msra.mxu0 %v1325
  %2266 = vmatpush.msra.mxu0 %v1317
  %2267 = vmatpush.msra.mxu0 %v1309
  %2268 = vmatpush.msra.mxu0 %v1301
  %2269 = vmatpush.msra.mxu0 %v1293
  %2270 = vmatpush.msra.mxu0 %v1285
  %2271 = vmatpush.msra.mxu0 %v1277
  %2272 = vmatmul.f32.gmra.mxu0 %v631
  %v2273 = vpop.f32.mrf.mxu0
  %v2274 = vadd.f32 %v2254, %v2273
  %2275 = vdwg.mxu0
  %2276 = vmatpush.msra.mxu0 %v1525
  %2277 = vmatpush.msra.mxu0 %v1517
  %2278 = vmatpush.msra.mxu0 %v1509
  %2279 = vmatpush.msra.mxu0 %v1501
  %2280 = vmatpush.msra.mxu0 %v1493
  %2281 = vmatpush.msra.mxu0 %v1485
  %2282 = vmatpush.msra.mxu0 %v1477
  %2283 = vmatpush.msra.mxu0 %v1469
  %2284 = vmatpush.msra.mxu0 %v1461
  %2285 = vmatpush.msra.mxu0 %v1453
  %2286 = vmatpush.msra.mxu0 %v1445
  %2287 = vmatpush.msra.mxu0 %v1437
  %2288 = vmatpush.msra.mxu0 %v1429
  %2289 = vmatpush.msra.mxu0 %v1421
  %2290 = vmatpush.msra.mxu0 %v1413
  %2291 = vmatpush.msra.mxu0 %v1405
  %2292 = vmatmul.f32.gmra.mxu0 %v632
  %v2293 = vpop.f32.mrf.mxu0
  %v2294 = vadd.f32 %v2274, %v2293
  %2295 = vdwg.mxu0
  %2296 = vmatpush.msra.mxu0 %v1653
  %2297 = vmatpush.msra.mxu0 %v1645
  %2298 = vmatpush.msra.mxu0 %v1637
  %2299 = vmatpush.msra.mxu0 %v1629
  %2300 = vmatpush.msra.mxu0 %v1621
  %2301 = vmatpush.msra.mxu0 %v1613
  %2302 = vmatpush.msra.mxu0 %v1605
  %2303 = vmatpush.msra.mxu0 %v1597
  %2304 = vmatpush.msra.mxu0 %v1589
  %2305 = vmatpush.msra.mxu0 %v1581
  %2306 = vmatpush.msra.mxu0 %v1573
  %2307 = vmatpush.msra.mxu0 %v1565
  %2308 = vmatpush.msra.mxu0 %v1557
  %2309 = vmatpush.msra.mxu0 %v1549
  %2310 = vmatpush.msra.mxu0 %v1541
  %2311 = vmatpush.msra.mxu0 %v1533
  %2312 = vmatmul.f32.gmra.mxu0 %v633
  %v2313 = vpop.f32.mrf.mxu0
  %v2314 = vadd.f32 %v2294, %v2313
  %2315 = vdwg.mxu0
  %2316 = vmatpush.msra.mxu0 %v758
  %2317 = vmatpush.msra.mxu0 %v750
  %2318 = vmatpush.msra.mxu0 %v742
  %2319 = vmatpush.msra.mxu0 %v734
  %2320 = vmatpush.msra.mxu0 %v726
  %2321 = vmatpush.msra.mxu0 %v718
  %2322 = vmatpush.msra.mxu0 %v710
  %2323 = vmatpush.msra.mxu0 %v702
  %2324 = vmatpush.msra.mxu0 %v694
  %2325 = vmatpush.msra.mxu0 %v686
  %2326 = vmatpush.msra.mxu0 %v678
  %2327 = vmatpush.msra.mxu0 %v670
  %2328 = vmatpush.msra.mxu0 %v662
  %2329 = vmatpush.msra.mxu0 %v654
  %2330 = vmatpush.msra.mxu0 %v646
  %2331 = vmatpush.msra.mxu0 %v638
  %2332 = vmatmul.f32.gmra.mxu0 %v626
  %v2333 = vpop.f32.mrf.mxu0
  %v2334 = vadd.f32 %v1664, %v2333
  %2335 = vdwg.mxu0
  %2336 = vmatpush.msra.mxu0 %v886
  %2337 = vmatpush.msra.mxu0 %v878
  %2338 = vmatpush.msra.mxu0 %v870
  %2339 = vmatpush.msra.mxu0 %v862
  %2340 = vmatpush.msra.mxu0 %v854
  %2341 = vmatpush.msra.mxu0 %v846
  %2342 = vmatpush.msra.mxu0 %v838
  %2343 = vmatpush.msra.mxu0 %v830
  %2344 = vmatpush.msra.mxu0 %v822
  %2345 = vmatpush.msra.mxu0 %v814
  %2346 = vmatpush.msra.mxu0 %v806
  %2347 = vmatpush.msra.mxu0 %v798
  %2348 = vmatpush.msra.mxu0 %v790
  %2349 = vmatpush.msra.mxu0 %v782
  %2350 = vmatpush.msra.mxu0 %v774
  %2351 = vmatpush.msra.mxu0 %v766
  %2352 = vmatmul.f32.gmra.mxu0 %v627
  %v2353 = vpop.f32.mrf.mxu0
  %v2354 = vadd.f32 %v2334, %v2353
  %2355 = vdwg.mxu0
  %2356 = vmatpush.msra.mxu0 %v1014
  %2357 = vmatpush.msra.mxu0 %v1006
  %2358 = vmatpush.msra.mxu0 %v998
  %2359 = vmatpush.msra.mxu0 %v990
  %2360 = vmatpush.msra.mxu0 %v982
  %2361 = vmatpush.msra.mxu0 %v974
  %2362 = vmatpush.msra.mxu0 %v966
  %2363 = vmatpush.msra.mxu0 %v958
  %2364 = vmatpush.msra.mxu0 %v950
  %2365 = vmatpush.msra.mxu0 %v942
  %2366 = vmatpush.msra.mxu0 %v934
  %2367 = vmatpush.msra.mxu0 %v926
  %2368 = vmatpush.msra.mxu0 %v918
  %2369 = vmatpush.msra.mxu0 %v910
  %2370 = vmatpush.msra.mxu0 %v902
  %2371 = vmatpush.msra.mxu0 %v894
  %2372 = vmatmul.f32.gmra.mxu0 %v628
  %v2373 = vpop.f32.mrf.mxu0
  %v2374 = vadd.f32 %v2354, %v2373
  %2375 = vdwg.mxu0
  %2376 = vmatpush.msra.mxu0 %v1142
  %2377 = vmatpush.msra.mxu0 %v1134
  %2378 = vmatpush.msra.mxu0 %v1126
  %2379 = vmatpush.msra.mxu0 %v1118
  %2380 = vmatpush.msra.mxu0 %v1110
  %2381 = vmatpush.msra.mxu0 %v1102
  %2382 = vmatpush.msra.mxu0 %v1094
  %2383 = vmatpush.msra.mxu0 %v1086
  %2384 = vmatpush.msra.mxu0 %v1078
  %2385 = vmatpush.msra.mxu0 %v1070
  %2386 = vmatpush.msra.mxu0 %v1062
  %2387 = vmatpush.msra.mxu0 %v1054
  %2388 = vmatpush.msra.mxu0 %v1046
  %2389 = vmatpush.msra.mxu0 %v1038
  %2390 = vmatpush.msra.mxu0 %v1030
  %2391 = vmatpush.msra.mxu0 %v1022
  %2392 = vmatmul.f32.gmra.mxu0 %v629
  %v2393 = vpop.f32.mrf.mxu0
  %v2394 = vadd.f32 %v2374, %v2393
  %2395 = vdwg.mxu0
  %2396 = vmatpush.msra.mxu0 %v1270
  %2397 = vmatpush.msra.mxu0 %v1262
  %2398 = vmatpush.msra.mxu0 %v1254
  %2399 = vmatpush.msra.mxu0 %v1246
  %2400 = vmatpush.msra.mxu0 %v1238
  %2401 = vmatpush.msra.mxu0 %v1230
  %2402 = vmatpush.msra.mxu0 %v1222
  %2403 = vmatpush.msra.mxu0 %v1214
  %2404 = vmatpush.msra.mxu0 %v1206
  %2405 = vmatpush.msra.mxu0 %v1198
  %2406 = vmatpush.msra.mxu0 %v1190
  %2407 = vmatpush.msra.mxu0 %v1182
  %2408 = vmatpush.msra.mxu0 %v1174
  %2409 = vmatpush.msra.mxu0 %v1166
  %2410 = vmatpush.msra.mxu0 %v1158
  %2411 = vmatpush.msra.mxu0 %v1150
  %2412 = vmatmul.f32.gmra.mxu0 %v630
  %v2413 = vpop.f32.mrf.mxu0
  %v2414 = vadd.f32 %v2394, %v2413
  %2415 = vdwg.mxu0
  %2416 = vmatpush.msra.mxu0 %v1398
  %2417 = vmatpush.msra.mxu0 %v1390
  %2418 = vmatpush.msra.mxu0 %v1382
  %2419 = vmatpush.msra.mxu0 %v1374
  %2420 = vmatpush.msra.mxu0 %v1366
  %2421 = vmatpush.msra.mxu0 %v1358
  %2422 = vmatpush.msra.mxu0 %v1350
  %2423 = vmatpush.msra.mxu0 %v1342
  %2424 = vmatpush.msra.mxu0 %v1334
  %2425 = vmatpush.msra.mxu0 %v1326
  %2426 = vmatpush.msra.mxu0 %v1318
  %2427 = vmatpush.msra.mxu0 %v1310
  %2428 = vmatpush.msra.mxu0 %v1302
  %2429 = vmatpush.msra.mxu0 %v1294
  %2430 = vmatpush.msra.mxu0 %v1286
  %2431 = vmatpush.msra.mxu0 %v1278
  %2432 = vmatmul.f32.gmra.mxu0 %v631
  %v2433 = vpop.f32.mrf.mxu0
  %v2434 = vadd.f32 %v2414, %v2433
  %2435 = vdwg.mxu0
  %2436 = vmatpush.msra.mxu0 %v1526
  %2437 = vmatpush.msra.mxu0 %v1518
  %2438 = vmatpush.msra.mxu0 %v1510
  %2439 = vmatpush.msra.mxu0 %v1502
  %2440 = vmatpush.msra.mxu0 %v1494
  %2441 = vmatpush.msra.mxu0 %v1486
  %2442 = vmatpush.msra.mxu0 %v1478
  %2443 = vmatpush.msra.mxu0 %v1470
  %2444 = vmatpush.msra.mxu0 %v1462
  %2445 = vmatpush.msra.mxu0 %v1454
  %2446 = vmatpush.msra.mxu0 %v1446
  %2447 = vmatpush.msra.mxu0 %v1438
  %2448 = vmatpush.msra.mxu0 %v1430
  %2449 = vmatpush.msra.mxu0 %v1422
  %2450 = vmatpush.msra.mxu0 %v1414
  %2451 = vmatpush.msra.mxu0 %v1406
  %2452 = vmatmul.f32.gmra.mxu0 %v632
  %v2453 = vpop.f32.mrf.mxu0
  %v2454 = vadd.f32 %v2434, %v2453
  %2455 = vdwg.mxu0
  %2456 = vmatpush.msra.mxu0 %v1654
  %2457 = vmatpush.msra.mxu0 %v1646
  %2458 = vmatpush.msra.mxu0 %v1638
  %2459 = vmatpush.msra.mxu0 %v1630
  %2460 = vmatpush.msra.mxu0 %v1622
  %2461 = vmatpush.msra.mxu0 %v1614
  %2462 = vmatpush.msra.mxu0 %v1606
  %2463 = vmatpush.msra.mxu0 %v1598
  %2464 = vmatpush.msra.mxu0 %v1590
  %2465 = vmatpush.msra.mxu0 %v1582
  %2466 = vmatpush.msra.mxu0 %v1574
  %2467 = vmatpush.msra.mxu0 %v1566
  %2468 = vmatpush.msra.mxu0 %v1558
  %2469 = vmatpush.msra.mxu0 %v1550
  %2470 = vmatpush.msra.mxu0 %v1542
  %2471 = vmatpush.msra.mxu0 %v1534
  %2472 = vmatmul.f32.gmra.mxu0 %v633
  %v2473 = vpop.f32.mrf.mxu0
  %v2474 = vadd.f32 %v2454, %v2473
  %2475 = vdwg.mxu0
  %2476 = vmatpush.msra.mxu0 %v759
  %2477 = vmatpush.msra.mxu0 %v751
  %2478 = vmatpush.msra.mxu0 %v743
  %2479 = vmatpush.msra.mxu0 %v735
  %2480 = vmatpush.msra.mxu0 %v727
  %2481 = vmatpush.msra.mxu0 %v719
  %2482 = vmatpush.msra.mxu0 %v711
  %2483 = vmatpush.msra.mxu0 %v703
  %2484 = vmatpush.msra.mxu0 %v695
  %2485 = vmatpush.msra.mxu0 %v687
  %2486 = vmatpush.msra.mxu0 %v679
  %2487 = vmatpush.msra.mxu0 %v671
  %2488 = vmatpush.msra.mxu0 %v663
  %2489 = vmatpush.msra.mxu0 %v655
  %2490 = vmatpush.msra.mxu0 %v647
  %2491 = vmatpush.msra.mxu0 %v639
  %2492 = vmatmul.f32.gmra.mxu0 %v626
  %v2493 = vpop.f32.mrf.mxu0
  %v2494 = vadd.f32 %v1665, %v2493
  %2495 = vdwg.mxu0
  %2496 = vmatpush.msra.mxu0 %v887
  %2497 = vmatpush.msra.mxu0 %v879
  %2498 = vmatpush.msra.mxu0 %v871
  %2499 = vmatpush.msra.mxu0 %v863
  %2500 = vmatpush.msra.mxu0 %v855
  %2501 = vmatpush.msra.mxu0 %v847
  %2502 = vmatpush.msra.mxu0 %v839
  %2503 = vmatpush.msra.mxu0 %v831
  %2504 = vmatpush.msra.mxu0 %v823
  %2505 = vmatpush.msra.mxu0 %v815
  %2506 = vmatpush.msra.mxu0 %v807
  %2507 = vmatpush.msra.mxu0 %v799
  %2508 = vmatpush.msra.mxu0 %v791
  %2509 = vmatpush.msra.mxu0 %v783
  %2510 = vmatpush.msra.mxu0 %v775
  %2511 = vmatpush.msra.mxu0 %v767
  %2512 = vmatmul.f32.gmra.mxu0 %v627
  %v2513 = vpop.f32.mrf.mxu0
  %v2514 = vadd.f32 %v2494, %v2513
  %2515 = vdwg.mxu0
  %2516 = vmatpush.msra.mxu0 %v1015
  %2517 = vmatpush.msra.mxu0 %v1007
  %2518 = vmatpush.msra.mxu0 %v999
  %2519 = vmatpush.msra.mxu0 %v991
  %2520 = vmatpush.msra.mxu0 %v983
  %2521 = vmatpush.msra.mxu0 %v975
  %2522 = vmatpush.msra.mxu0 %v967
  %2523 = vmatpush.msra.mxu0 %v959
  %2524 = vmatpush.msra.mxu0 %v951
  %2525 = vmatpush.msra.mxu0 %v943
  %2526 = vmatpush.msra.mxu0 %v935
  %2527 = vmatpush.msra.mxu0 %v927
  %2528 = vmatpush.msra.mxu0 %v919
  %2529 = vmatpush.msra.mxu0 %v911
  %2530 = vmatpush.msra.mxu0 %v903
  %2531 = vmatpush.msra.mxu0 %v895
  %2532 = vmatmul.f32.gmra.mxu0 %v628
  %v2533 = vpop.f32.mrf.mxu0
  %v2534 = vadd.f32 %v2514, %v2533
  %2535 = vdwg.mxu0
  %2536 = vmatpush.msra.mxu0 %v1143
  %2537 = vmatpush.msra.mxu0 %v1135
  %2538 = vmatpush.msra.mxu0 %v1127
  %2539 = vmatpush.msra.mxu0 %v1119
  %2540 = vmatpush.msra.mxu0 %v1111
  %2541 = vmatpush.msra.mxu0 %v1103
  %2542 = vmatpush.msra.mxu0 %v1095
  %2543 = vmatpush.msra.mxu0 %v1087
  %2544 = vmatpush.msra.mxu0 %v1079
  %2545 = vmatpush.msra.mxu0 %v1071
  %2546 = vmatpush.msra.mxu0 %v1063
  %2547 = vmatpush.msra.mxu0 %v1055
  %2548 = vmatpush.msra.mxu0 %v1047
  %2549 = vmatpush.msra.mxu0 %v1039
  %2550 = vmatpush.msra.mxu0 %v1031
  %2551 = vmatpush.msra.mxu0 %v1023
  %2552 = vmatmul.f32.gmra.mxu0 %v629
  %v2553 = vpop.f32.mrf.mxu0
  %v2554 = vadd.f32 %v2534, %v2553
  %2555 = vdwg.mxu0
  %2556 = vmatpush.msra.mxu0 %v1271
  %2557 = vmatpush.msra.mxu0 %v1263
  %2558 = vmatpush.msra.mxu0 %v1255
  %2559 = vmatpush.msra.mxu0 %v1247
  %2560 = vmatpush.msra.mxu0 %v1239
  %2561 = vmatpush.msra.mxu0 %v1231
  %2562 = vmatpush.msra.mxu0 %v1223
  %2563 = vmatpush.msra.mxu0 %v1215
  %2564 = vmatpush.msra.mxu0 %v1207
  %2565 = vmatpush.msra.mxu0 %v1199
  %2566 = vmatpush.msra.mxu0 %v1191
  %2567 = vmatpush.msra.mxu0 %v1183
  %2568 = vmatpush.msra.mxu0 %v1175
  %2569 = vmatpush.msra.mxu0 %v1167
  %2570 = vmatpush.msra.mxu0 %v1159
  %2571 = vmatpush.msra.mxu0 %v1151
  %2572 = vmatmul.f32.gmra.mxu0 %v630
  %v2573 = vpop.f32.mrf.mxu0
  %v2574 = vadd.f32 %v2554, %v2573
  %2575 = vdwg.mxu0
  %2576 = vmatpush.msra.mxu0 %v1399
  %2577 = vmatpush.msra.mxu0 %v1391
  %2578 = vmatpush.msra.mxu0 %v1383
  %2579 = vmatpush.msra.mxu0 %v1375
  %2580 = vmatpush.msra.mxu0 %v1367
  %2581 = vmatpush.msra.mxu0 %v1359
  %2582 = vmatpush.msra.mxu0 %v1351
  %2583 = vmatpush.msra.mxu0 %v1343
  %2584 = vmatpush.msra.mxu0 %v1335
  %2585 = vmatpush.msra.mxu0 %v1327
  %2586 = vmatpush.msra.mxu0 %v1319
  %2587 = vmatpush.msra.mxu0 %v1311
  %2588 = vmatpush.msra.mxu0 %v1303
  %2589 = vmatpush.msra.mxu0 %v1295
  %2590 = vmatpush.msra.mxu0 %v1287
  %2591 = vmatpush.msra.mxu0 %v1279
  %2592 = vmatmul.f32.gmra.mxu0 %v631
  %v2593 = vpop.f32.mrf.mxu0
  %v2594 = vadd.f32 %v2574, %v2593
  %2595 = vdwg.mxu0
  %2596 = vmatpush.msra.mxu0 %v1527
  %2597 = vmatpush.msra.mxu0 %v1519
  %2598 = vmatpush.msra.mxu0 %v1511
  %2599 = vmatpush.msra.mxu0 %v1503
  %2600 = vmatpush.msra.mxu0 %v1495
  %2601 = vmatpush.msra.mxu0 %v1487
  %2602 = vmatpush.msra.mxu0 %v1479
  %2603 = vmatpush.msra.mxu0 %v1471
  %2604 = vmatpush.msra.mxu0 %v1463
  %2605 = vmatpush.msra.mxu0 %v1455
  %2606 = vmatpush.msra.mxu0 %v1447
  %2607 = vmatpush.msra.mxu0 %v1439
  %2608 = vmatpush.msra.mxu0 %v1431
  %2609 = vmatpush.msra.mxu0 %v1423
  %2610 = vmatpush.msra.mxu0 %v1415
  %2611 = vmatpush.msra.mxu0 %v1407
  %2612 = vmatmul.f32.gmra.mxu0 %v632
  %v2613 = vpop.f32.mrf.mxu0
  %v2614 = vadd.f32 %v2594, %v2613
  %2615 = vdwg.mxu0
  %2616 = vmatpush.msra.mxu0 %v1655
  %2617 = vmatpush.msra.mxu0 %v1647
  %2618 = vmatpush.msra.mxu0 %v1639
  %2619 = vmatpush.msra.mxu0 %v1631
  %2620 = vmatpush.msra.mxu0 %v1623
  %2621 = vmatpush.msra.mxu0 %v1615
  %2622 = vmatpush.msra.mxu0 %v1607
  %2623 = vmatpush.msra.mxu0 %v1599
  %2624 = vmatpush.msra.mxu0 %v1591
  %2625 = vmatpush.msra.mxu0 %v1583
  %2626 = vmatpush.msra.mxu0 %v1575
  %2627 = vmatpush.msra.mxu0 %v1567
  %2628 = vmatpush.msra.mxu0 %v1559
  %2629 = vmatpush.msra.mxu0 %v1551
  %2630 = vmatpush.msra.mxu0 %v1543
  %2631 = vmatpush.msra.mxu0 %v1535
  %2632 = vmatmul.f32.gmra.mxu0 %v633
  %v2633 = vpop.f32.mrf.mxu0
  %v2634 = vadd.f32 %v2614, %v2633
  %2635 = vdwg.mxu0
  %2636 = vmatpush.msra.mxu0 %v760
  %2637 = vmatpush.msra.mxu0 %v752
  %2638 = vmatpush.msra.mxu0 %v744
  %2639 = vmatpush.msra.mxu0 %v736
  %2640 = vmatpush.msra.mxu0 %v728
  %2641 = vmatpush.msra.mxu0 %v720
  %2642 = vmatpush.msra.mxu0 %v712
  %2643 = vmatpush.msra.mxu0 %v704
  %2644 = vmatpush.msra.mxu0 %v696
  %2645 = vmatpush.msra.mxu0 %v688
  %2646 = vmatpush.msra.mxu0 %v680
  %2647 = vmatpush.msra.mxu0 %v672
  %2648 = vmatpush.msra.mxu0 %v664
  %2649 = vmatpush.msra.mxu0 %v656
  %2650 = vmatpush.msra.mxu0 %v648
  %2651 = vmatpush.msra.mxu0 %v640
  %2652 = vmatmul.f32.gmra.mxu0 %v626
  %v2653 = vpop.f32.mrf.mxu0
  %v2654 = vadd.f32 %v1666, %v2653
  %2655 = vdwg.mxu0
  %2656 = vmatpush.msra.mxu0 %v888
  %2657 = vmatpush.msra.mxu0 %v880
  %2658 = vmatpush.msra.mxu0 %v872
  %2659 = vmatpush.msra.mxu0 %v864
  %2660 = vmatpush.msra.mxu0 %v856
  %2661 = vmatpush.msra.mxu0 %v848
  %2662 = vmatpush.msra.mxu0 %v840
  %2663 = vmatpush.msra.mxu0 %v832
  %2664 = vmatpush.msra.mxu0 %v824
  %2665 = vmatpush.msra.mxu0 %v816
  %2666 = vmatpush.msra.mxu0 %v808
  %2667 = vmatpush.msra.mxu0 %v800
  %2668 = vmatpush.msra.mxu0 %v792
  %2669 = vmatpush.msra.mxu0 %v784
  %2670 = vmatpush.msra.mxu0 %v776
  %2671 = vmatpush.msra.mxu0 %v768
  %2672 = vmatmul.f32.gmra.mxu0 %v627
  %v2673 = vpop.f32.mrf.mxu0
  %v2674 = vadd.f32 %v2654, %v2673
  %2675 = vdwg.mxu0
  %2676 = vmatpush.msra.mxu0 %v1016
  %2677 = vmatpush.msra.mxu0 %v1008
  %2678 = vmatpush.msra.mxu0 %v1000
  %2679 = vmatpush.msra.mxu0 %v992
  %2680 = vmatpush.msra.mxu0 %v984
  %2681 = vmatpush.msra.mxu0 %v976
  %2682 = vmatpush.msra.mxu0 %v968
  %2683 = vmatpush.msra.mxu0 %v960
  %2684 = vmatpush.msra.mxu0 %v952
  %2685 = vmatpush.msra.mxu0 %v944
  %2686 = vmatpush.msra.mxu0 %v936
  %2687 = vmatpush.msra.mxu0 %v928
  %2688 = vmatpush.msra.mxu0 %v920
  %2689 = vmatpush.msra.mxu0 %v912
  %2690 = vmatpush.msra.mxu0 %v904
  %2691 = vmatpush.msra.mxu0 %v896
  %2692 = vmatmul.f32.gmra.mxu0 %v628
  %v2693 = vpop.f32.mrf.mxu0
  %v2694 = vadd.f32 %v2674, %v2693
  %2695 = vdwg.mxu0
  %2696 = vmatpush.msra.mxu0 %v1144
  %2697 = vmatpush.msra.mxu0 %v1136
  %2698 = vmatpush.msra.mxu0 %v1128
  %2699 = vmatpush.msra.mxu0 %v1120
  %2700 = vmatpush.msra.mxu0 %v1112
  %2701 = vmatpush.msra.mxu0 %v1104
  %2702 = vmatpush.msra.mxu0 %v1096
  %2703 = vmatpush.msra.mxu0 %v1088
  %2704 = vmatpush.msra.mxu0 %v1080
  %2705 = vmatpush.msra.mxu0 %v1072
  %2706 = vmatpush.msra.mxu0 %v1064
  %2707 = vmatpush.msra.mxu0 %v1056
  %2708 = vmatpush.msra.mxu0 %v1048
  %2709 = vmatpush.msra.mxu0 %v1040
  %2710 = vmatpush.msra.mxu0 %v1032
  %2711 = vmatpush.msra.mxu0 %v1024
  %2712 = vmatmul.f32.gmra.mxu0 %v629
  %v2713 = vpop.f32.mrf.mxu0
  %v2714 = vadd.f32 %v2694, %v2713
  %2715 = vdwg.mxu0
  %2716 = vmatpush.msra.mxu0 %v1272
  %2717 = vmatpush.msra.mxu0 %v1264
  %2718 = vmatpush.msra.mxu0 %v1256
  %2719 = vmatpush.msra.mxu0 %v1248
  %2720 = vmatpush.msra.mxu0 %v1240
  %2721 = vmatpush.msra.mxu0 %v1232
  %2722 = vmatpush.msra.mxu0 %v1224
  %2723 = vmatpush.msra.mxu0 %v1216
  %2724 = vmatpush.msra.mxu0 %v1208
  %2725 = vmatpush.msra.mxu0 %v1200
  %2726 = vmatpush.msra.mxu0 %v1192
  %2727 = vmatpush.msra.mxu0 %v1184
  %2728 = vmatpush.msra.mxu0 %v1176
  %2729 = vmatpush.msra.mxu0 %v1168
  %2730 = vmatpush.msra.mxu0 %v1160
  %2731 = vmatpush.msra.mxu0 %v1152
  %2732 = vmatmul.f32.gmra.mxu0 %v630
  %v2733 = vpop.f32.mrf.mxu0
  %v2734 = vadd.f32 %v2714, %v2733
  %2735 = vdwg.mxu0
  %2736 = vmatpush.msra.mxu0 %v1400
  %2737 = vmatpush.msra.mxu0 %v1392
  %2738 = vmatpush.msra.mxu0 %v1384
  %2739 = vmatpush.msra.mxu0 %v1376
  %2740 = vmatpush.msra.mxu0 %v1368
  %2741 = vmatpush.msra.mxu0 %v1360
  %2742 = vmatpush.msra.mxu0 %v1352
  %2743 = vmatpush.msra.mxu0 %v1344
  %2744 = vmatpush.msra.mxu0 %v1336
  %2745 = vmatpush.msra.mxu0 %v1328
  %2746 = vmatpush.msra.mxu0 %v1320
  %2747 = vmatpush.msra.mxu0 %v1312
  %2748 = vmatpush.msra.mxu0 %v1304
  %2749 = vmatpush.msra.mxu0 %v1296
  %2750 = vmatpush.msra.mxu0 %v1288
  %2751 = vmatpush.msra.mxu0 %v1280
  %2752 = vmatmul.f32.gmra.mxu0 %v631
  %v2753 = vpop.f32.mrf.mxu0
  %v2754 = vadd.f32 %v2734, %v2753
  %2755 = vdwg.mxu0
  %2756 = vmatpush.msra.mxu0 %v1528
  %2757 = vmatpush.msra.mxu0 %v1520
  %2758 = vmatpush.msra.mxu0 %v1512
  %2759 = vmatpush.msra.mxu0 %v1504
  %2760 = vmatpush.msra.mxu0 %v1496
  %2761 = vmatpush.msra.mxu0 %v1488
  %2762 = vmatpush.msra.mxu0 %v1480
  %2763 = vmatpush.msra.mxu0 %v1472
  %2764 = vmatpush.msra.mxu0 %v1464
  %2765 = vmatpush.msra.mxu0 %v1456
  %2766 = vmatpush.msra.mxu0 %v1448
  %2767 = vmatpush.msra.mxu0 %v1440
  %2768 = vmatpush.msra.mxu0 %v1432
  %2769 = vmatpush.msra.mxu0 %v1424
  %2770 = vmatpush.msra.mxu0 %v1416
  %2771 = vmatpush.msra.mxu0 %v1408
  %2772 = vmatmul.f32.gmra.mxu0 %v632
  %v2773 = vpop.f32.mrf.mxu0
  %v2774 = vadd.f32 %v2754, %v2773
  %2775 = vdwg.mxu0
  %2776 = vmatpush.msra.mxu0 %v1656
  %2777 = vmatpush.msra.mxu0 %v1648
  %2778 = vmatpush.msra.mxu0 %v1640
  %2779 = vmatpush.msra.mxu0 %v1632
  %2780 = vmatpush.msra.mxu0 %v1624
  %2781 = vmatpush.msra.mxu0 %v1616
  %2782 = vmatpush.msra.mxu0 %v1608
  %2783 = vmatpush.msra.mxu0 %v1600
  %2784 = vmatpush.msra.mxu0 %v1592
  %2785 = vmatpush.msra.mxu0 %v1584
  %2786 = vmatpush.msra.mxu0 %v1576
  %2787 = vmatpush.msra.mxu0 %v1568
  %2788 = vmatpush.msra.mxu0 %v1560
  %2789 = vmatpush.msra.mxu0 %v1552
  %2790 = vmatpush.msra.mxu0 %v1544
  %2791 = vmatpush.msra.mxu0 %v1536
  %2792 = vmatmul.f32.gmra.mxu0 %v633
  %v2793 = vpop.f32.mrf.mxu0
  %v2794 = vadd.f32 %v2774, %v2793
  %2795 = vdwg.mxu0
  %2796 = vmatpush.msra.mxu0 %v761
  %2797 = vmatpush.msra.mxu0 %v753
  %2798 = vmatpush.msra.mxu0 %v745
  %2799 = vmatpush.msra.mxu0 %v737
  %2800 = vmatpush.msra.mxu0 %v729
  %2801 = vmatpush.msra.mxu0 %v721
  %2802 = vmatpush.msra.mxu0 %v713
  %2803 = vmatpush.msra.mxu0 %v705
  %2804 = vmatpush.msra.mxu0 %v697
  %2805 = vmatpush.msra.mxu0 %v689
  %2806 = vmatpush.msra.mxu0 %v681
  %2807 = vmatpush.msra.mxu0 %v673
  %2808 = vmatpush.msra.mxu0 %v665
  %2809 = vmatpush.msra.mxu0 %v657
  %2810 = vmatpush.msra.mxu0 %v649
  %2811 = vmatpush.msra.mxu0 %v641
  %2812 = vmatmul.f32.gmra.mxu0 %v626
  %v2813 = vpop.f32.mrf.mxu0
  %v2814 = vadd.f32 %v1667, %v2813
  %2815 = vdwg.mxu0
  %2816 = vmatpush.msra.mxu0 %v889
  %2817 = vmatpush.msra.mxu0 %v881
  %2818 = vmatpush.msra.mxu0 %v873
  %2819 = vmatpush.msra.mxu0 %v865
  %2820 = vmatpush.msra.mxu0 %v857
  %2821 = vmatpush.msra.mxu0 %v849
  %2822 = vmatpush.msra.mxu0 %v841
  %2823 = vmatpush.msra.mxu0 %v833
  %2824 = vmatpush.msra.mxu0 %v825
  %2825 = vmatpush.msra.mxu0 %v817
  %2826 = vmatpush.msra.mxu0 %v809
  %2827 = vmatpush.msra.mxu0 %v801
  %2828 = vmatpush.msra.mxu0 %v793
  %2829 = vmatpush.msra.mxu0 %v785
  %2830 = vmatpush.msra.mxu0 %v777
  %2831 = vmatpush.msra.mxu0 %v769
  %2832 = vmatmul.f32.gmra.mxu0 %v627
  %v2833 = vpop.f32.mrf.mxu0
  %v2834 = vadd.f32 %v2814, %v2833
  %2835 = vdwg.mxu0
  %2836 = vmatpush.msra.mxu0 %v1017
  %2837 = vmatpush.msra.mxu0 %v1009
  %2838 = vmatpush.msra.mxu0 %v1001
  %2839 = vmatpush.msra.mxu0 %v993
  %2840 = vmatpush.msra.mxu0 %v985
  %2841 = vmatpush.msra.mxu0 %v977
  %2842 = vmatpush.msra.mxu0 %v969
  %2843 = vmatpush.msra.mxu0 %v961
  %2844 = vmatpush.msra.mxu0 %v953
  %2845 = vmatpush.msra.mxu0 %v945
  %2846 = vmatpush.msra.mxu0 %v937
  %2847 = vmatpush.msra.mxu0 %v929
  %2848 = vmatpush.msra.mxu0 %v921
  %2849 = vmatpush.msra.mxu0 %v913
  %2850 = vmatpush.msra.mxu0 %v905
  %2851 = vmatpush.msra.mxu0 %v897
  %2852 = vmatmul.f32.gmra.mxu0 %v628
  %v2853 = vpop.f32.mrf.mxu0
  %v2854 = vadd.f32 %v2834, %v2853
  %2855 = vdwg.mxu0
  %2856 = vmatpush.msra.mxu0 %v1145
  %2857 = vmatpush.msra.mxu0 %v1137
  %2858 = vmatpush.msra.mxu0 %v1129
  %2859 = vmatpush.msra.mxu0 %v1121
  %2860 = vmatpush.msra.mxu0 %v1113
  %2861 = vmatpush.msra.mxu0 %v1105
  %2862 = vmatpush.msra.mxu0 %v1097
  %2863 = vmatpush.msra.mxu0 %v1089
  %2864 = vmatpush.msra.mxu0 %v1081
  %2865 = vmatpush.msra.mxu0 %v1073
  %2866 = vmatpush.msra.mxu0 %v1065
  %2867 = vmatpush.msra.mxu0 %v1057
  %2868 = vmatpush.msra.mxu0 %v1049
  %2869 = vmatpush.msra.mxu0 %v1041
  %2870 = vmatpush.msra.mxu0 %v1033
  %2871 = vmatpush.msra.mxu0 %v1025
  %2872 = vmatmul.f32.gmra.mxu0 %v629
  %v2873 = vpop.f32.mrf.mxu0
  %v2874 = vadd.f32 %v2854, %v2873
  %2875 = vdwg.mxu0
  %2876 = vmatpush.msra.mxu0 %v1273
  %2877 = vmatpush.msra.mxu0 %v1265
  %2878 = vmatpush.msra.mxu0 %v1257
  %2879 = vmatpush.msra.mxu0 %v1249
  %2880 = vmatpush.msra.mxu0 %v1241
  %2881 = vmatpush.msra.mxu0 %v1233
  %2882 = vmatpush.msra.mxu0 %v1225
  %2883 = vmatpush.msra.mxu0 %v1217
  %2884 = vmatpush.msra.mxu0 %v1209
  %2885 = vmatpush.msra.mxu0 %v1201
  %2886 = vmatpush.msra.mxu0 %v1193
  %2887 = vmatpush.msra.mxu0 %v1185
  %2888 = vmatpush.msra.mxu0 %v1177
  %2889 = vmatpush.msra.mxu0 %v1169
  %2890 = vmatpush.msra.mxu0 %v1161
  %2891 = vmatpush.msra.mxu0 %v1153
  %2892 = vmatmul.f32.gmra.mxu0 %v630
  %v2893 = vpop.f32.mrf.mxu0
  %v2894 = vadd.f32 %v2874, %v2893
  %2895 = vdwg.mxu0
  %2896 = vmatpush.msra.mxu0 %v1401
  %2897 = vmatpush.msra.mxu0 %v1393
  %2898 = vmatpush.msra.mxu0 %v1385
  %2899 = vmatpush.msra.mxu0 %v1377
  %2900 = vmatpush.msra.mxu0 %v1369
  %2901 = vmatpush.msra.mxu0 %v1361
  %2902 = vmatpush.msra.mxu0 %v1353
  %2903 = vmatpush.msra.mxu0 %v1345
  %2904 = vmatpush.msra.mxu0 %v1337
  %2905 = vmatpush.msra.mxu0 %v1329
  %2906 = vmatpush.msra.mxu0 %v1321
  %2907 = vmatpush.msra.mxu0 %v1313
  %2908 = vmatpush.msra.mxu0 %v1305
  %2909 = vmatpush.msra.mxu0 %v1297
  %2910 = vmatpush.msra.mxu0 %v1289
  %2911 = vmatpush.msra.mxu0 %v1281
  %2912 = vmatmul.f32.gmra.mxu0 %v631
  %v2913 = vpop.f32.mrf.mxu0
  %v2914 = vadd.f32 %v2894, %v2913
  %2915 = vdwg.mxu0
  %2916 = vmatpush.msra.mxu0 %v1529
  %2917 = vmatpush.msra.mxu0 %v1521
  %2918 = vmatpush.msra.mxu0 %v1513
  %2919 = vmatpush.msra.mxu0 %v1505
  %2920 = vmatpush.msra.mxu0 %v1497
  %2921 = vmatpush.msra.mxu0 %v1489
  %2922 = vmatpush.msra.mxu0 %v1481
  %2923 = vmatpush.msra.mxu0 %v1473
  %2924 = vmatpush.msra.mxu0 %v1465
  %2925 = vmatpush.msra.mxu0 %v1457
  %2926 = vmatpush.msra.mxu0 %v1449
  %2927 = vmatpush.msra.mxu0 %v1441
  %2928 = vmatpush.msra.mxu0 %v1433
  %2929 = vmatpush.msra.mxu0 %v1425
  %2930 = vmatpush.msra.mxu0 %v1417
  %2931 = vmatpush.msra.mxu0 %v1409
  %2932 = vmatmul.f32.gmra.mxu0 %v632
  %v2933 = vpop.f32.mrf.mxu0
  %v2934 = vadd.f32 %v2914, %v2933
  %2935 = vdwg.mxu0
  %2936 = vmatpush.msra.mxu0 %v1657
  %2937 = vmatpush.msra.mxu0 %v1649
  %2938 = vmatpush.msra.mxu0 %v1641
  %2939 = vmatpush.msra.mxu0 %v1633
  %2940 = vmatpush.msra.mxu0 %v1625
  %2941 = vmatpush.msra.mxu0 %v1617
  %2942 = vmatpush.msra.mxu0 %v1609
  %2943 = vmatpush.msra.mxu0 %v1601
  %2944 = vmatpush.msra.mxu0 %v1593
  %2945 = vmatpush.msra.mxu0 %v1585
  %2946 = vmatpush.msra.mxu0 %v1577
  %2947 = vmatpush.msra.mxu0 %v1569
  %2948 = vmatpush.msra.mxu0 %v1561
  %2949 = vmatpush.msra.mxu0 %v1553
  %2950 = vmatpush.msra.mxu0 %v1545
  %2951 = vmatpush.msra.mxu0 %v1537
  %2952 = vmatmul.f32.gmra.mxu0 %v633
  %v2953 = vpop.f32.mrf.mxu0
  %v2954 = vadd.f32 %v2934, %v2953
  %2955 = vdwg.mxu0
  %v2956 = vmax.f32 %v1834, 0.0
  %v2957 = vmax.f32 %v1994, 0.0
  %v2958 = vmax.f32 %v2154, 0.0
  %v2959 = vmax.f32 %v2314, 0.0
  %v2960 = vmax.f32 %v2474, 0.0
  %v2961 = vmax.f32 %v2634, 0.0
  %v2962 = vmax.f32 %v2794, 0.0
  %v2963 = vmax.f32 %v2954, 0.0
  %v2964 = vld [vmem:[%s5] sm:$0xff]
  %v2965 = vld [vmem:[%s5 + $0x8] sm:$0xff]
  %v2966 = vld [vmem:[%s5 + $0x10] sm:$0xff]
  %v2967 = vld [vmem:[%s5 + $0x18] sm:$0xff]
  %v2968 = vld [vmem:[%s5 + $0x20] sm:$0xff]
  %v2969 = vld [vmem:[%s5 + $0x28] sm:$0xff]
  %v2970 = vld [vmem:[%s5 + $0x30] sm:$0xff]
  %v2971 = vld [vmem:[%s5 + $0x38] sm:$0xff]
  %v2972 = vld [vmem:[%s5 + $0x40] sm:$0xff]
  %v2973 = vld [vmem:[%s5 + $0x48] sm:$0xff]
  %v2974 = vld [vmem:[%s5 + $0x50] sm:$0xff]
  %v2975 = vld [vmem:[%s5 + $0x58] sm:$0xff]
  %v2976 = vld [vmem:[%s5 + $0x60] sm:$0xff]
  %v2977 = vld [vmem:[%s5 + $0x68] sm:$0xff]
  %v2978 = vld [vmem:[%s5 + $0x70] sm:$0xff]
  %v2979 = vld [vmem:[%s5 + $0x78] sm:$0xff]
  %v2980 = vld [vmem:[%s5 + $0x80] sm:$0xff]
  %v2981 = vld [vmem:[%s5 + $0x88] sm:$0xff]
  %v2982 = vld [vmem:[%s5 + $0x90] sm:$0xff]
  %v2983 = vld [vmem:[%s5 + $0x98] sm:$0xff]
  %v2984 = vld [vmem:[%s5 + $0xa0] sm:$0xff]
  %v2985 = vld [vmem:[%s5 + $0xa8] sm:$0xff]
  %v2986 = vld [vmem:[%s5 + $0xb0] sm:$0xff]
  %v2987 = vld [vmem:[%s5 + $0xb8] sm:$0xff]
  %v2988 = vld [vmem:[%s5 + $0xc0] sm:$0xff]
  %v2989 = vld [vmem:[%s5 + $0xc8] sm:$0xff]
  %v2990 = vld [vmem:[%s5 + $0xd0] sm:$0xff]
  %v2991 = vld [vmem:[%s5 + $0xd8] sm:$0xff]
  %v2992 = vld [vmem:[%s5 + $0xe0] sm:$0xff]
  %v2993 = vld [vmem:[%s5 + $0xe8] sm:$0xff]
  %v2994 = vld [vmem:[%s5 + $0xf0] sm:$0xff]
  %v2995 = vld [vmem:[%s5 + $0xf8] sm:$0xff]
  %v2996 = vld [vmem:[%s5 + $0x100] sm:$0xff]
  %v2997 = vld [vmem:[%s5 + $0x108] sm:$0xff]
  %v2998 = vld [vmem:[%s5 + $0x110] sm:$0xff]
  %v2999 = vld [vmem:[%s5 + $0x118] sm:$0xff]
  %v3000 = vld [vmem:[%s5 + $0x120] sm:$0xff]
  %v3001 = vld [vmem:[%s5 + $0x128] sm:$0xff]
  %v3002 = vld [vmem:[%s5 + $0x130] sm:$0xff]
  %v3003 = vld [vmem:[%s5 + $0x138] sm:$0xff]
  %v3004 = vld [vmem:[%s5 + $0x140] sm:$0xff]
  %v3005 = vld [vmem:[%s5 + $0x148] sm:$0xff]
  %v3006 = vld [vmem:[%s5 + $0x150] sm:$0xff]
  %v3007 = vld [vmem:[%s5 + $0x158] sm:$0xff]
  %v3008 = vld [vmem:[%s5 + $0x160] sm:$0xff]
  %v3009 = vld [vmem:[%s5 + $0x168] sm:$0xff]
  %v3010 = vld [vmem:[%s5 + $0x170] sm:$0xff]
  %v3011 = vld [vmem:[%s5 + $0x178] sm:$0xff]
  %v3012 = vld [vmem:[%s5 + $0x180] sm:$0xff]
  %v3013 = vld [vmem:[%s5 + $0x188] sm:$0xff]
  %v3014 = vld [vmem:[%s5 + $0x190] sm:$0xff]
  %v3015 = vld [vmem:[%s5 + $0x198] sm:$0xff]
  %v3016 = vld [vmem:[%s5 + $0x1a0] sm:$0xff]
  %v3017 = vld [vmem:[%s5 + $0x1a8] sm:$0xff]
  %v3018 = vld [vmem:[%s5 + $0x1b0] sm:$0xff]
  %v3019 = vld [vmem:[%s5 + $0x1b8] sm:$0xff]
  %v3020 = vld [vmem:[%s5 + $0x1c0] sm:$0xff]
  %v3021 = vld [vmem:[%s5 + $0x1c8] sm:$0xff]
  %v3022 = vld [vmem:[%s5 + $0x1d0] sm:$0xff]
  %v3023 = vld [vmem:[%s5 + $0x1d8] sm:$0xff]
  %v3024 = vld [vmem:[%s5 + $0x1e0] sm:$0xff]
  %v3025 = vld [vmem:[%s5 + $0x1e8] sm:$0xff]
  %v3026 = vld [vmem:[%s5 + $0x1f0] sm:$0xff]
  %v3027 = vld [vmem:[%s5 + $0x1f8] sm:$0xff]
  %v3028 = vld [vmem:[%s5 + $0x200] sm:$0xff]
  %v3029 = vld [vmem:[%s5 + $0x208] sm:$0xff]
  %v3030 = vld [vmem:[%s5 + $0x210] sm:$0xff]
  %v3031 = vld [vmem:[%s5 + $0x218] sm:$0xff]
  %v3032 = vld [vmem:[%s5 + $0x220] sm:$0xff]
  %v3033 = vld [vmem:[%s5 + $0x228] sm:$0xff]
  %v3034 = vld [vmem:[%s5 + $0x230] sm:$0xff]
  %v3035 = vld [vmem:[%s5 + $0x238] sm:$0xff]
  %v3036 = vld [vmem:[%s5 + $0x240] sm:$0xff]
  %v3037 = vld [vmem:[%s5 + $0x248] sm:$0xff]
  %v3038 = vld [vmem:[%s5 + $0x250] sm:$0xff]
  %v3039 = vld [vmem:[%s5 + $0x258] sm:$0xff]
  %v3040 = vld [vmem:[%s5 + $0x260] sm:$0xff]
  %v3041 = vld [vmem:[%s5 + $0x268] sm:$0xff]
  %v3042 = vld [vmem:[%s5 + $0x270] sm:$0xff]
  %v3043 = vld [vmem:[%s5 + $0x278] sm:$0xff]
  %v3044 = vld [vmem:[%s5 + $0x280] sm:$0xff]
  %v3045 = vld [vmem:[%s5 + $0x288] sm:$0xff]
  %v3046 = vld [vmem:[%s5 + $0x290] sm:$0xff]
  %v3047 = vld [vmem:[%s5 + $0x298] sm:$0xff]
  %v3048 = vld [vmem:[%s5 + $0x2a0] sm:$0xff]
  %v3049 = vld [vmem:[%s5 + $0x2a8] sm:$0xff]
  %v3050 = vld [vmem:[%s5 + $0x2b0] sm:$0xff]
  %v3051 = vld [vmem:[%s5 + $0x2b8] sm:$0xff]
  %v3052 = vld [vmem:[%s5 + $0x2c0] sm:$0xff]
  %v3053 = vld [vmem:[%s5 + $0x2c8] sm:$0xff]
  %v3054 = vld [vmem:[%s5 + $0x2d0] sm:$0xff]
  %v3055 = vld [vmem:[%s5 + $0x2d8] sm:$0xff]
  %v3056 = vld [vmem:[%s5 + $0x2e0] sm:$0xff]
  %v3057 = vld [vmem:[%s5 + $0x2e8] sm:$0xff]
  %v3058 = vld [vmem:[%s5 + $0x2f0] sm:$0xff]
  %v3059 = vld [vmem:[%s5 + $0x2f8] sm:$0xff]
  %v3060 = vld [vmem:[%s5 + $0x300] sm:$0xff]
  %v3061 = vld [vmem:[%s5 + $0x308] sm:$0xff]
  %v3062 = vld [vmem:[%s5 + $0x310] sm:$0xff]
  %v3063 = vld [vmem:[%s5 + $0x318] sm:$0xff]
  %v3064 = vld [vmem:[%s5 + $0x320] sm:$0xff]
  %v3065 = vld [vmem:[%s5 + $0x328] sm:$0xff]
  %v3066 = vld [vmem:[%s5 + $0x330] sm:$0xff]
  %v3067 = vld [vmem:[%s5 + $0x338] sm:$0xff]
  %v3068 = vld [vmem:[%s5 + $0x340] sm:$0xff]
  %v3069 = vld [vmem:[%s5 + $0x348] sm:$0xff]
  %v3070 = vld [vmem:[%s5 + $0x350] sm:$0xff]
  %v3071 = vld [vmem:[%s5 + $0x358] sm:$0xff]
  %v3072 = vld [vmem:[%s5 + $0x360] sm:$0xff]
  %v3073 = vld [vmem:[%s5 + $0x368] sm:$0xff]
  %v3074 = vld [vmem:[%s5 + $0x370] sm:$0xff]
  %v3075 = vld [vmem:[%s5 + $0x378] sm:$0xff]
  %v3076 = vld [vmem:[%s5 + $0x380] sm:$0xff]
  %v3077 = vld [vmem:[%s5 + $0x388] sm:$0xff]
  %v3078 = vld [vmem:[%s5 + $0x390] sm:$0xff]
  %v3079 = vld [vmem:[%s5 + $0x398] sm:$0xff]
  %v3080 = vld [vmem:[%s5 + $0x3a0] sm:$0xff]
  %v3081 = vld [vmem:[%s5 + $0x3a8] sm:$0xff]
  %v3082 = vld [vmem:[%s5 + $0x3b0] sm:$0xff]
  %v3083 = vld [vmem:[%s5 + $0x3b8] sm:$0xff]
  %v3084 = vld [vmem:[%s5 + $0x3c0] sm:$0xff]
  %v3085 = vld [vmem:[%s5 + $0x3c8] sm:$0xff]
  %v3086 = vld [vmem:[%s5 + $0x3d0] sm:$0xff]
  %v3087 = vld [vmem:[%s5 + $0x3d8] sm:$0xff]
  %v3088 = vld [vmem:[%s5 + $0x3e0] sm:$0xff]
  %v3089 = vld [vmem:[%s5 + $0x3e8] sm:$0xff]
  %v3090 = vld [vmem:[%s5 + $0x3f0] sm:$0xff]
  %v3091 = vld [vmem:[%s5 + $0x3f8] sm:$0xff]
  %v3092 = vld [vmem:[%s6] sm:$0x1]
  %3093 = vmatpush.msra.mxu0 %v2979
  %3094 = vmatpush.msra.mxu0 %v2978
  %3095 = vmatpush.msra.mxu0 %v2977
  %3096 = vmatpush.msra.mxu0 %v2976
  %3097 = vmatpush.msra.mxu0 %v2975
  %3098 = vmatpush.msra.mxu0 %v2974
  %3099 = vmatpush.msra.mxu0 %v2973
  %3100 = vmatpush.msra.mxu0 %v2972
  %3101 = vmatpush.msra.mxu0 %v2971
  %3102 = vmatpush.msra.mxu0 %v2970
  %3103 = vmatpush.msra.mxu0 %v2969
  %3104 = vmatpush.msra.mxu0 %v2968
  %3105 = vmatpush.msra.mxu0 %v2967
  %3106 = vmatpush.msra.mxu0 %v2966
  %3107 = vmatpush.msra.mxu0 %v2965
  %3108 = vmatpush.msra.mxu0 %v2964
  %3109 = vmatmul.f32.gmra.mxu0 %v2956
  %v3110 = vpop.f32.mrf.mxu0
  %v3111 = vadd.f32 %v3092, %v3110
  %3112 = vdwg.mxu0
  %3113 = vmatpush.msra.mxu0 %v2995
  %3114 = vmatpush.msra.mxu0 %v2994
  %3115 = vmatpush.msra.mxu0 %v2993
  %3116 = vmatpush.msra.mxu0 %v2992
  %3117 = vmatpush.msra.mxu0 %v2991
  %3118 = vmatpush.msra.mxu0 %v2990
  %3119 = vmatpush.msra.mxu0 %v2989
  %3120 = vmatpush.msra.mxu0 %v2988
  %3121 = vmatpush.msra.mxu0 %v2987
  %3122 = vmatpush.msra.mxu0 %v2986
  %3123 = vmatpush.msra.mxu0 %v2985
  %3124 = vmatpush.msra.mxu0 %v2984
  %3125 = vmatpush.msra.mxu0 %v2983
  %3126 = vmatpush.msra.mxu0 %v2982
  %3127 = vmatpush.msra.mxu0 %v2981
  %3128 = vmatpush.msra.mxu0 %v2980
  %3129 = vmatmul.f32.gmra.mxu0 %v2957
  %v3130 = vpop.f32.mrf.mxu0
  %v3131 = vadd.f32 %v3111, %v3130
  %3132 = vdwg.mxu0
  %3133 = vmatpush.msra.mxu0 %v3011
  %3134 = vmatpush.msra.mxu0 %v3010
  %3135 = vmatpush.msra.mxu0 %v3009
  %3136 = vmatpush.msra.mxu0 %v3008
  %3137 = vmatpush.msra.mxu0 %v3007
  %3138 = vmatpush.msra.mxu0 %v3006
  %3139 = vmatpush.msra.mxu0 %v3005
  %3140 = vmatpush.msra.mxu0 %v3004
  %3141 = vmatpush.msra.mxu0 %v3003
  %3142 = vmatpush.msra.mxu0 %v3002
  %3143 = vmatpush.msra.mxu0 %v3001
  %3144 = vmatpush.msra.mxu0 %v3000
  %3145 = vmatpush.msra.mxu0 %v2999
  %3146 = vmatpush.msra.mxu0 %v2998
  %3147 = vmatpush.msra.mxu0 %v2997
  %3148 = vmatpush.msra.mxu0 %v2996
  %3149 = vmatmul.f32.gmra.mxu0 %v2958
  %v3150 = vpop.f32.mrf.mxu0
  %v3151 = vadd.f32 %v3131, %v3150
  %3152 = vdwg.mxu0
  %3153 = vmatpush.msra.mxu0 %v3027
  %3154 = vmatpush.msra.mxu0 %v3026
  %3155 = vmatpush.msra.mxu0 %v3025
  %3156 = vmatpush.msra.mxu0 %v3024
  %3157 = vmatpush.msra.mxu0 %v3023
  %3158 = vmatpush.msra.mxu0 %v3022
  %3159 = vmatpush.msra.mxu0 %v3021
  %3160 = vmatpush.msra.mxu0 %v3020
  %3161 = vmatpush.msra.mxu0 %v3019
  %3162 = vmatpush.msra.mxu0 %v3018
  %3163 = vmatpush.msra.mxu0 %v3017
  %3164 = vmatpush.msra.mxu0 %v3016
  %3165 = vmatpush.msra.mxu0 %v3015
  %3166 = vmatpush.msra.mxu0 %v3014
  %3167 = vmatpush.msra.mxu0 %v3013
  %3168 = vmatpush.msra.mxu0 %v3012
  %3169 = vmatmul.f32.gmra.mxu0 %v2959
  %v3170 = vpop.f32.mrf.mxu0
  %v3171 = vadd.f32 %v3151, %v3170
  %3172 = vdwg.mxu0
  %3173 = vmatpush.msra.mxu0 %v3043
  %3174 = vmatpush.msra.mxu0 %v3042
  %3175 = vmatpush.msra.mxu0 %v3041
  %3176 = vmatpush.msra.mxu0 %v3040
  %3177 = vmatpush.msra.mxu0 %v3039
  %3178 = vmatpush.msra.mxu0 %v3038
  %3179 = vmatpush.msra.mxu0 %v3037
  %3180 = vmatpush.msra.mxu0 %v3036
  %3181 = vmatpush.msra.mxu0 %v3035
  %3182 = vmatpush.msra.mxu0 %v3034
  %3183 = vmatpush.msra.mxu0 %v3033
  %3184 = vmatpush.msra.mxu0 %v3032
  %3185 = vmatpush.msra.mxu0 %v3031
  %3186 = vmatpush.msra.mxu0 %v3030
  %3187 = vmatpush.msra.mxu0 %v3029
  %3188 = vmatpush.msra.mxu0 %v3028
  %3189 = vmatmul.f32.gmra.mxu0 %v2960
  %v3190 = vpop.f32.mrf.mxu0
  %v3191 = vadd.f32 %v3171, %v3190
  %3192 = vdwg.mxu0
  %3193 = vmatpush.msra.mxu0 %v3059
  %3194 = vmatpush.msra.mxu0 %v3058
  %3195 = vmatpush.msra.mxu0 %v3057
  %3196 = vmatpush.msra.mxu0 %v3056
  %3197 = vmatpush.msra.mxu0 %v3055
  %3198 = vmatpush.msra.mxu0 %v3054
  %3199 = vmatpush.msra.mxu0 %v3053
  %3200 = vmatpush.msra.mxu0 %v3052
  %3201 = vmatpush.msra.mxu0 %v3051
  %3202 = vmatpush.msra.mxu0 %v3050
  %3203 = vmatpush.msra.mxu0 %v3049
  %3204 = vmatpush.msra.mxu0 %v3048
  %3205 = vmatpush.msra.mxu0 %v3047
  %3206 = vmatpush.msra.mxu0 %v3046
  %3207 = vmatpush.msra.mxu0 %v3045
  %3208 = vmatpush.msra.mxu0 %v3044
  %3209 = vmatmul.f32.gmra.mxu0 %v2961
  %v3210 = vpop.f32.mrf.mxu0
  %v3211 = vadd.f32 %v3191, %v3210
  %3212 = vdwg.mxu0
  %3213 = vmatpush.msra.mxu0 %v3075
  %3214 = vmatpush.msra.mxu0 %v3074
  %3215 = vmatpush.msra.mxu0 %v3073
  %3216 = vmatpush.msra.mxu0 %v3072
  %3217 = vmatpush.msra.mxu0 %v3071
  %3218 = vmatpush.msra.mxu0 %v3070
  %3219 = vmatpush.msra.mxu0 %v3069
  %3220 = vmatpush.msra.mxu0 %v3068
  %3221 = vmatpush.msra.mxu0 %v3067
  %3222 = vmatpush.msra.mxu0 %v3066
  %3223 = vmatpush.msra.mxu0 %v3065
  %3224 = vmatpush.msra.mxu0 %v3064
  %3225 = vmatpush.msra.mxu0 %v3063
  %3226 = vmatpush.msra.mxu0 %v3062
  %3227 = vmatpush.msra.mxu0 %v3061
  %3228 = vmatpush.msra.mxu0 %v3060
  %3229 = vmatmul.f32.gmra.mxu0 %v2962
  %v3230 = vpop.f32.mrf.mxu0
  %v3231 = vadd.f32 %v3211, %v3230
  %3232 = vdwg.mxu0
  %3233 = vmatpush.msra.mxu0 %v3091
  %3234 = vmatpush.msra.mxu0 %v3090
  %3235 = vmatpush.msra.mxu0 %v3089
  %3236 = vmatpush.msra.mxu0 %v3088
  %3237 = vmatpush.msra.mxu0 %v3087
  %3238 = vmatpush.msra.mxu0 %v3086
  %3239 = vmatpush.msra.mxu0 %v3085
  %3240 = vmatpush.msra.mxu0 %v3084
  %3241 = vmatpush.msra.mxu0 %v3083
  %3242 = vmatpush.msra.mxu0 %v3082
  %3243 = vmatpush.msra.mxu0 %v3081
  %3244 = vmatpush.msra.mxu0 %v3080
  %3245 = vmatpush.msra.mxu0 %v3079
  %3246 = vmatpush.msra.mxu0 %v3078
  %3247 = vmatpush.msra.mxu0 %v3077
  %3248 = vmatpush.msra.mxu0 %v3076
  %3249 = vmatmul.f32.gmra.mxu0 %v2963
  %v3250 = vpop.f32.mrf.mxu0
  %v3251 = vadd.f32 %v3231, %v3250
  %3252 = vdwg.mxu0
  %3253 = vst [vmem:[%s7] sm:$0x1] %v3251
  // Predicated region
  $region30: #{dqn_forward.1} parent=0 // pred_check
    _
  $region31: #{dqn_forward.1} parent=0 // pred_check_branch
    %3255 = sbr.rel (0) target = $region33
  $region32: #{dqn_forward.1} parent=0 // pred_region
    _
  $region33: #{dqn_forward.1} parent=0 // pred_fallthru
    _
  // Predicated region
  $region34: #{dqn_forward.1} parent=0 // pred_check
    _
  $region35: #{dqn_forward.1} parent=0 // pred_check_branch
    %3257 = sbr.rel (0) target = $region37
  $region36: #{dqn_forward.1} parent=0 // pred_region
    _
  $region37: #{dqn_forward.1} parent=0 // pred_fallthru
    _

</llo_original>
